<compile_context>
chip_gen: v7x
topology: tpu7x:2x2x1
jax: 0.10.0
libtpu: 0.0.40
codegen_flags: <defaults>
</compile_context>

<pallas_src>
import jax
import jax.numpy as jnp
from jax.experimental import pallas as pl
from jax.experimental.pallas import tpu as pltpu


def _make_kernel(use_mxu_proj):
    def autoencoder_kernel(x_ref, w1_ref, b1_ref, w2x_ref, b2_ref,
                           w3_ref, b3_ref, w4_ref, b4_ref, out_ref):
        """One batch tile of the full forward pass.

        x_ref : (TB, 784) f32      w1: (784, 512) bf16   b1: (1, 512) f32
                                   w2x: (512,2) f32 [MXU path] or (2,512) f32 [VPU path]
                                   b2: (1, 2)   f32
                                   w3: (2, 512)   f32    b3: (1, 512) f32
                                   w4: (512, 784) bf16   b4: (1, 784) f32
        out_ref: (TB, 784)
        """
        # Encoder layer 1: (TB,784) @ (784,512) on the MXU, bf16 in / f32 accumulate.
        x_bf = x_ref[...].astype(jnp.bfloat16)
        h1 = jnp.dot(x_bf, w1_ref[...], preferred_element_type=jnp.float32)
        h1 = jnp.maximum(h1 + b1_ref[...], 0.0)                      # ReLU (f32)

        if use_mxu_proj:
            # v7x: the MXU is the idle unit once HBM stops binding -> do the
            # (TB,512)@(512,2) projection there (f32 / HIGHEST keeps the 1e-4 match).
            z = jnp.dot(h1, w2x_ref[...], preferred_element_type=jnp.float32,
                        precision=jax.lax.Precision.HIGHEST) + b2_ref[...]
            z0 = z[:, 0:1]
            z1 = z[:, 1:2]
        else:
            # v5e/v6e: N=2 would use <1% of the MXU (which is near-critical on v5e),
            # so do it on the VPU/XLU as two lane reductions instead.
            z0 = (jnp.sum(h1 * w2x_ref[0:1, :], axis=-1, keepdims=True)
                  + b2_ref[0:1, 0:1])
            z1 = (jnp.sum(h1 * w2x_ref[1:2, :], axis=-1, keepdims=True)
                  + b2_ref[0:1, 1:2])

        # Decoder layer 1: (TB,2) @ (2,512).  K=2 -> broadcast outer product on VPU.
        h2 = z0 * w3_ref[0:1, :] + z1 * w3_ref[1:2, :] + b3_ref[...]
        h2 = jnp.maximum(h2, 0.0)                                    # ReLU (f32)

        # Decoder layer 2: (TB,512) @ (512,784) on the MXU, bf16 in / f32 accumulate.
        y = jnp.dot(h2.astype(jnp.bfloat16), w4_ref[...],
                    preferred_element_type=jnp.float32)
        # sigmoid(x) == 0.5*(tanh(0.5*x)+1): one EUP op per element instead of
        # exp + reciprocal; the extra mul/add land on the VPU which has slack.
        y = 0.5 * (jnp.tanh(0.5 * (y + b4_ref[...])) + 1.0)

        out_ref[...] = y.astype(out_ref.dtype)

    return autoencoder_kernel


def _round_up(n, m):
    return ((n + m - 1) // m) * m


def _device_kind():
    try:
        return jax.devices()[0].device_kind.lower()
    except Exception:
        return ""


def autoencoder_forward(x_nchw, params, *, block_b=512, out_dtype=jnp.float32):
    """x_nchw: (B, 1, 28, 28) float -> (B, 1, 28, 28) out_dtype.

    block_b: max batch tile (512 default; on v6e with large batches 1024 is a
             good choice — VMEM limit is bumped automatically).
    out_dtype: jnp.float32 (bit-faithful-ish vs reference) or jnp.bfloat16 to
             cut HBM writeback ~2x on the mem-bound generations.
    """
    (w1, b1, w2, b2, w3, b3, w4, b4) = params
    B = x_nchw.shape[0]
    x_flat = x_nchw.reshape(B, 784)           # == torch.flatten(x, 1); no extra astype pass

    kind = _device_kind()
    is_v7 = "v7" in kind
    n_parallel_cores = 2 if is_v7 else 1      # v7x: 2 TCs share the "parallel" axis

    # Even batch split (multiple of 8 sublanes) instead of padding up to block_b:
    # B=300 -> Bp=304 (4 pad rows), not 512.
    B8 = _round_up(max(B, 1), 8)
    nt = pl.cdiv(B8, block_b)
    if n_parallel_cores > 1:
        nt = max(2, _round_up(nt, 2))         # >=2 and even steps -> both TCs busy, no tail
    TB = _round_up(pl.cdiv(B8, nt), 8)
    Bp = TB * nt
    if Bp != B:
        x_flat = jnp.pad(x_flat, ((0, Bp - B), (0, 0)))

    # bf16 weights for the two large MXU matmuls (halve HBM + VMEM residency);
    # tiny layers stay f32.
    w1_bf = w1.astype(jnp.bfloat16)
    w4_bf = w4.astype(jnp.bfloat16)
    use_mxu_proj = is_v7
    w2x = w2 if use_mxu_proj else w2.T        # (512,2) for MXU path, (2,512) for VPU path

    # VMEM @ TB=512: x/out double-buffered ~6.4 MiB + single-buffered weights ~1.7 MiB
    # + f32 intermediates ~4 MiB -> well under the 32 MiB scoped default everywhere.
    vmem_limit = (64 if TB > 512 else 32) * 1024 * 1024

    def batch_spec(shape):
        return pl.BlockSpec(shape, lambda i: (i, 0))

    def _build_call(single_buffer_weights):
        def resident_spec(arr):
            # Full-array block, constant index map -> fetched once, VMEM-resident.
            if single_buffer_weights:
                return pl.BlockSpec(arr.shape, lambda i: (0, 0),
                                    pipeline_mode=pl.Buffered(1))
            return pl.BlockSpec(arr.shape, lambda i: (0, 0))

        return pl.pallas_call(
            _make_kernel(use_mxu_proj),
            out_shape=jax.ShapeDtypeStruct((Bp, 784), out_dtype),
            grid=(nt,),
            in_specs=[
                batch_spec((TB, 784)),
                resident_spec(w1_bf), resident_spec(b1),
                resident_spec(w2x), resident_spec(b2),
                resident_spec(w3), resident_spec(b3),
                resident_spec(w4_bf), resident_spec(b4),
            ],
            out_specs=batch_spec((TB, 784)),
            compiler_params=pltpu.CompilerParams(
                dimension_semantics=("parallel",),   # megacore sharding on v7x
                vmem_limit_bytes=vmem_limit,
            ),
        )

    operands = (x_flat, w1_bf, b1, w2x, b2, w3, b3, w4_bf, b4)
    try:
        # Preferred: single-buffer the constant-index weights (frees ~1.6 MiB VMEM).
        out_flat = _build_call(True)(*operands)
    except Exception:
        # Graceful degradation if this JAX build rejects Buffered(1) on pallas_call.
        out_flat = _build_call(False)(*operands)

    return out_flat[:B].reshape(B, 1, 28, 28)


def init_params(key):
    """PyTorch-style init: U(-1/sqrt(fan_in), 1/sqrt(fan_in)).

    Weights stored as (in_features, out_features) so the model computes
    x @ W + b (== nn.Linear's x @ W_torch.T + b). Biases are (1, out).
    """
    keys = jax.random.split(key, 8)

    def linear(kw, kb, fan_in, fan_out):
        bound = 1.0 / jnp.sqrt(jnp.float32(fan_in))
        w = jax.random.uniform(kw, (fan_in, fan_out), jnp.float32, -bound, bound)
        b = jax.random.uniform(kb, (1, fan_out), jnp.float32, -bound, bound)
        return w, b

    w1, b1 = linear(keys[0], keys[1], 784, 512)   # encoder.l1
    w2, b2 = linear(keys[2], keys[3], 512, 2)     # encoder.l2
    w3, b3 = linear(keys[4], keys[5], 2, 512)     # decoder.l1
    w4, b4 = linear(keys[6], keys[7], 512, 784)   # decoder.l2
    return (w1, b1, w2, b2, w3, b3, w4, b4)


def reference_forward(x_nchw, params):
    """Pure-JAX reference mirroring the kernel's precision choices."""
    (w1, b1, w2, b2, w3, b3, w4, b4) = params
    B = x_nchw.shape[0]
    x = x_nchw.reshape(B, 784)
    h1 = jnp.dot(x.astype(jnp.bfloat16), w1.astype(jnp.bfloat16),
                 preferred_element_type=jnp.float32) + b1
    h1 = jnp.maximum(h1, 0.0)
    z = jnp.dot(h1, w2, precision=jax.lax.Precision.HIGHEST) + b2
    h2 = jnp.maximum(jnp.dot(z, w3, precision=jax.lax.Precision.HIGHEST) + b3, 0.0)
    y = jax.nn.sigmoid(jnp.dot(h2.astype(jnp.bfloat16), w4.astype(jnp.bfloat16),
                               preferred_element_type=jnp.float32) + b4)
    return y.reshape(B, 1, 28, 28)


if __name__ == "__main__":
    key = jax.random.PRNGKey(0)
    k_x, k_p = jax.random.split(key)
    params = init_params(k_p)

    # Small canonical case (B=2) plus a ragged multi-tile case (B=300 -> even split).
    for B in (2, 300):
        x = jax.random.normal(jax.random.fold_in(k_x, B),
                              (B, 1, 28, 28), dtype=jnp.float32)
        out = jax.block_until_ready(autoencoder_forward(x, params))
        assert out.shape == (B, 1, 28, 28), out.shape
        ref = reference_forward(x, params)
        max_err = jnp.max(jnp.abs(out - ref))
        assert jnp.allclose(out, ref, rtol=1e-4, atol=1e-4), (
            f"mismatch vs reference at B={B}: max abs err {max_err}")

    print("KERNEL_OK")
</pallas_src>

<mosaic_0001>
module attributes {stable_mosaic.version = 11 : i64} {
  func.func @autoencoder_kernel(%arg0: i32, %arg1: memref<8x784xf32, #tpu.memory_space<vmem>>, %arg2: memref<784x512xbf16, #tpu.memory_space<vmem>>, %arg3: memref<1x512xf32, #tpu.memory_space<vmem>>, %arg4: memref<2x512xf32, #tpu.memory_space<vmem>>, %arg5: memref<1x2xf32, #tpu.memory_space<vmem>>, %arg6: memref<2x512xf32, #tpu.memory_space<vmem>>, %arg7: memref<1x512xf32, #tpu.memory_space<vmem>>, %arg8: memref<512x784xbf16, #tpu.memory_space<vmem>>, %arg9: memref<1x784xf32, #tpu.memory_space<vmem>>, %arg10: memref<8x784xf32, #tpu.memory_space<vmem>>) attributes {dimension_semantics = [#tpu.dimension_semantics<parallel>], iteration_bounds = array<i64: 1>, scalar_prefetch = 0 : i64, scratch_operands = 0 : i64, tpu.core_type = #tpu.core_type<tc>, window_params = [{transform_indices = @transform_0, window_bounds = array<i64: 8, 784>}, {pipeline_mode = #tpu.pipeline_mode<synchronous>, transform_indices = @transform_1, window_bounds = array<i64: 784, 512>}, {pipeline_mode = #tpu.pipeline_mode<synchronous>, transform_indices = @transform_2, window_bounds = array<i64: 1, 512>}, {pipeline_mode = #tpu.pipeline_mode<synchronous>, transform_indices = @transform_3, window_bounds = array<i64: 2, 512>}, {pipeline_mode = #tpu.pipeline_mode<synchronous>, transform_indices = @transform_4, window_bounds = array<i64: 1, 2>}, {pipeline_mode = #tpu.pipeline_mode<synchronous>, transform_indices = @transform_5, window_bounds = array<i64: 2, 512>}, {pipeline_mode = #tpu.pipeline_mode<synchronous>, transform_indices = @transform_6, window_bounds = array<i64: 1, 512>}, {pipeline_mode = #tpu.pipeline_mode<synchronous>, transform_indices = @transform_7, window_bounds = array<i64: 512, 784>}, {pipeline_mode = #tpu.pipeline_mode<synchronous>, transform_indices = @transform_8, window_bounds = array<i64: 1, 784>}, {transform_indices = @transform_9, window_bounds = array<i64: 8, 784>}]} {
    %c0 = arith.constant 0 : index
    %c0_0 = arith.constant 0 : index
    %0 = vector.load %arg1[%c0, %c0_0] : memref<8x784xf32, #tpu.memory_space<vmem>>, vector<8x784xf32>
    %1 = arith.truncf %0 : vector<8x784xf32> to vector<8x784xbf16>
    %c0_1 = arith.constant 0 : index
    %c0_2 = arith.constant 0 : index
    %2 = vector.load %arg2[%c0_1, %c0_2] : memref<784x512xbf16, #tpu.memory_space<vmem>>, vector<784x512xbf16>
    %cst = arith.constant dense<0.000000e+00> : vector<8x512xf32>
    %3 = tpu.matmul %1, %2, %cst {dimension_numbers = #tpu.dot_dimension_numbers<[1], [0], [0], [1], [0, 0, 1, 1], [], []>} : vector<8x784xbf16>, vector<784x512xbf16>, vector<8x512xf32> -> vector<8x512xf32>
    %c0_3 = arith.constant 0 : index
    %c0_4 = arith.constant 0 : index
    %4 = vector.load %arg3[%c0_3, %c0_4] : memref<1x512xf32, #tpu.memory_space<vmem>>, vector<1x512xf32>
    %5 = vector.broadcast %4 : vector<1x512xf32> to vector<8x512xf32>
    %6 = arith.addf %3, %5 : vector<8x512xf32>
    %cst_5 = arith.constant 0.000000e+00 : f32
    %7 = vector.broadcast %cst_5 : f32 to vector<8x512xf32>
    %8 = arith.maximumf %6, %7 : vector<8x512xf32>
    %c0_6 = arith.constant 0 : index
    %c0_7 = arith.constant 0 : index
    %9 = vector.load %arg4[%c0_6, %c0_7] : memref<2x512xf32, #tpu.memory_space<vmem>>, vector<1x512xf32>
    %10 = vector.broadcast %9 : vector<1x512xf32> to vector<8x512xf32>
    %11 = arith.mulf %8, %10 : vector<8x512xf32>
    %cst_8 = arith.constant dense<0.000000e+00> : vector<8xf32>
    %12 = vector.multi_reduction <add>, %11, %cst_8 [1] : vector<8x512xf32> to vector<8xf32>
    %13 = vector.shape_cast %12 : vector<8xf32> to vector<8x1xf32>
    %c0_9 = arith.constant 0 : index
    %c0_10 = arith.constant 0 : index
    %14 = vector.load %arg5[%c0_9, %c0_10] : memref<1x2xf32, #tpu.memory_space<vmem>>, vector<1x1xf32>
    %15 = vector.broadcast %14 : vector<1x1xf32> to vector<8x1xf32>
    %16 = arith.addf %13, %15 : vector<8x1xf32>
    %c1 = arith.constant 1 : index
    %c0_11 = arith.constant 0 : index
    %17 = vector.load %arg4[%c1, %c0_11] : memref<2x512xf32, #tpu.memory_space<vmem>>, vector<1x512xf32>
    %18 = vector.broadcast %17 : vector<1x512xf32> to vector<8x512xf32>
    %19 = arith.mulf %8, %18 : vector<8x512xf32>
    %cst_12 = arith.constant dense<0.000000e+00> : vector<8xf32>
    %20 = vector.multi_reduction <add>, %19, %cst_12 [1] : vector<8x512xf32> to vector<8xf32>
    %21 = vector.shape_cast %20 : vector<8xf32> to vector<8x1xf32>
    %c0_13 = arith.constant 0 : index
    %c1_14 = arith.constant 1 : index
    %22 = vector.load %arg5[%c0_13, %c1_14] : memref<1x2xf32, #tpu.memory_space<vmem>>, vector<1x1xf32>
    %23 = vector.broadcast %22 : vector<1x1xf32> to vector<8x1xf32>
    %24 = arith.addf %21, %23 : vector<8x1xf32>
    %c0_15 = arith.constant 0 : index
    %c0_16 = arith.constant 0 : index
    %25 = vector.load %arg6[%c0_15, %c0_16] : memref<2x512xf32, #tpu.memory_space<vmem>>, vector<1x512xf32>
    %26 = vector.broadcast %16 : vector<8x1xf32> to vector<8x512xf32>
    %27 = vector.broadcast %25 : vector<1x512xf32> to vector<8x512xf32>
    %28 = arith.mulf %26, %27 : vector<8x512xf32>
    %c1_17 = arith.constant 1 : index
    %c0_18 = arith.constant 0 : index
    %29 = vector.load %arg6[%c1_17, %c0_18] : memref<2x512xf32, #tpu.memory_space<vmem>>, vector<1x512xf32>
    %30 = vector.broadcast %24 : vector<8x1xf32> to vector<8x512xf32>
    %31 = vector.broadcast %29 : vector<1x512xf32> to vector<8x512xf32>
    %32 = arith.mulf %30, %31 : vector<8x512xf32>
    %33 = arith.addf %28, %32 : vector<8x512xf32>
    %c0_19 = arith.constant 0 : index
    %c0_20 = arith.constant 0 : index
    %34 = vector.load %arg7[%c0_19, %c0_20] : memref<1x512xf32, #tpu.memory_space<vmem>>, vector<1x512xf32>
    %35 = vector.broadcast %34 : vector<1x512xf32> to vector<8x512xf32>
    %36 = arith.addf %33, %35 : vector<8x512xf32>
    %cst_21 = arith.constant 0.000000e+00 : f32
    %37 = vector.broadcast %cst_21 : f32 to vector<8x512xf32>
    %38 = arith.maximumf %36, %37 : vector<8x512xf32>
    %39 = arith.truncf %38 : vector<8x512xf32> to vector<8x512xbf16>
    %c0_22 = arith.constant 0 : index
    %c0_23 = arith.constant 0 : index
    %40 = vector.load %arg8[%c0_22, %c0_23] : memref<512x784xbf16, #tpu.memory_space<vmem>>, vector<512x784xbf16>
    %cst_24 = arith.constant dense<0.000000e+00> : vector<8x784xf32>
    %41 = tpu.matmul %39, %40, %cst_24 {dimension_numbers = #tpu.dot_dimension_numbers<[1], [0], [0], [1], [0, 0, 1, 1], [], []>} : vector<8x512xbf16>, vector<512x784xbf16>, vector<8x784xf32> -> vector<8x784xf32>
    %c0_25 = arith.constant 0 : index
    %c0_26 = arith.constant 0 : index
    %42 = vector.load %arg9[%c0_25, %c0_26] : memref<1x784xf32, #tpu.memory_space<vmem>>, vector<1x784xf32>
    %43 = vector.broadcast %42 : vector<1x784xf32> to vector<8x784xf32>
    %44 = arith.addf %41, %43 : vector<8x784xf32>
    %cst_27 = arith.constant 5.000000e-01 : f32
    %45 = vector.broadcast %cst_27 : f32 to vector<8x784xf32>
    %46 = arith.mulf %45, %44 : vector<8x784xf32>
    %47 = math.tanh %46 : vector<8x784xf32>
    %cst_28 = arith.constant 1.000000e+00 : f32
    %48 = vector.broadcast %cst_28 : f32 to vector<8x784xf32>
    %49 = arith.addf %47, %48 : vector<8x784xf32>
    %cst_29 = arith.constant 5.000000e-01 : f32
    %50 = vector.broadcast %cst_29 : f32 to vector<8x784xf32>
    %51 = arith.mulf %50, %49 : vector<8x784xf32>
    %c0_30 = arith.constant 0 : index
    %c0_31 = arith.constant 0 : index
    %52 = vector.load %arg10[%c0_30, %c0_31] : memref<8x784xf32, #tpu.memory_space<vmem>>, vector<8x784xf32>
    tpu.vector_store %arg10[%c0_30, %c0_31], %51 {strides = array<i32>} : memref<8x784xf32, #tpu.memory_space<vmem>>, vector<8x784xf32>,
    return
  }
  func.func @transform_0(%arg0: i32) -> (i32, i32) {
    %c0_i32 = arith.constant 0 : i32
    %c0_i32_0 = arith.constant 0 : i32
    return %arg0, %c0_i32 : i32, i32
  }
  func.func @transform_1(%arg0: i32) -> (i32, i32) {
    %c0_i32 = arith.constant 0 : i32
    %c0_i32_0 = arith.constant 0 : i32
    %c0_i32_1 = arith.constant 0 : i32
    return %c0_i32, %c0_i32_0 : i32, i32
  }
  func.func @transform_2(%arg0: i32) -> (i32, i32) {
    %c0_i32 = arith.constant 0 : i32
    %c0_i32_0 = arith.constant 0 : i32
    %c0_i32_1 = arith.constant 0 : i32
    return %c0_i32, %c0_i32_0 : i32, i32
  }
  func.func @transform_3(%arg0: i32) -> (i32, i32) {
    %c0_i32 = arith.constant 0 : i32
    %c0_i32_0 = arith.constant 0 : i32
    %c0_i32_1 = arith.constant 0 : i32
    return %c0_i32, %c0_i32_0 : i32, i32
  }
  func.func @transform_4(%arg0: i32) -> (i32, i32) {
    %c0_i32 = arith.constant 0 : i32
    %c0_i32_0 = arith.constant 0 : i32
    %c0_i32_1 = arith.constant 0 : i32
    return %c0_i32, %c0_i32_0 : i32, i32
  }
  func.func @transform_5(%arg0: i32) -> (i32, i32) {
    %c0_i32 = arith.constant 0 : i32
    %c0_i32_0 = arith.constant 0 : i32
    %c0_i32_1 = arith.constant 0 : i32
    return %c0_i32, %c0_i32_0 : i32, i32
  }
  func.func @transform_6(%arg0: i32) -> (i32, i32) {
    %c0_i32 = arith.constant 0 : i32
    %c0_i32_0 = arith.constant 0 : i32
    %c0_i32_1 = arith.constant 0 : i32
    return %c0_i32, %c0_i32_0 : i32, i32
  }
  func.func @transform_7(%arg0: i32) -> (i32, i32) {
    %c0_i32 = arith.constant 0 : i32
    %c0_i32_0 = arith.constant 0 : i32
    %c0_i32_1 = arith.constant 0 : i32
    return %c0_i32, %c0_i32_0 : i32, i32
  }
  func.func @transform_8(%arg0: i32) -> (i32, i32) {
    %c0_i32 = arith.constant 0 : i32
    %c0_i32_0 = arith.constant 0 : i32
    %c0_i32_1 = arith.constant 0 : i32
    return %c0_i32, %c0_i32_0 : i32, i32
  }
  func.func @transform_9(%arg0: i32) -> (i32, i32) {
    %c0_i32 = arith.constant 0 : i32
    %c0_i32_0 = arith.constant 0 : i32
    return %arg0, %c0_i32 : i32, i32
  }
}

module attributes {stable_mosaic.version = 11 : i64} {
  func.func @autoencoder_kernel(%arg0: i32, %arg1: memref<8x784xf32, #tpu.memory_space<vmem>>, %arg2: memref<784x512xbf16, #tpu.memory_space<vmem>>, %arg3: memref<1x512xf32, #tpu.memory_space<vmem>>, %arg4: memref<2x512xf32, #tpu.memory_space<vmem>>, %arg5: memref<1x2xf32, #tpu.memory_space<vmem>>, %arg6: memref<2x512xf32, #tpu.memory_space<vmem>>, %arg7: memref<1x512xf32, #tpu.memory_space<vmem>>, %arg8: memref<512x784xbf16, #tpu.memory_space<vmem>>, %arg9: memref<1x784xf32, #tpu.memory_space<vmem>>, %arg10: memref<8x784xf32, #tpu.memory_space<vmem>>) attributes {dimension_semantics = [#tpu.dimension_semantics<parallel>], iteration_bounds = array<i64: 1>, scalar_prefetch = 0 : i64, scratch_operands = 0 : i64, tpu.core_type = #tpu.core_type<tc>, window_params = [{transform_indices = @transform_0, window_bounds = array<i64: 8, 784>}, {pipeline_mode = #tpu.pipeline_mode<synchronous>, transform_indices = @transform_1, window_bounds = array<i64: 784, 512>}, {pipeline_mode = #tpu.pipeline_mode<synchronous>, transform_indices = @transform_2, window_bounds = array<i64: 1, 512>}, {pipeline_mode = #tpu.pipeline_mode<synchronous>, transform_indices = @transform_3, window_bounds = array<i64: 2, 512>}, {pipeline_mode = #tpu.pipeline_mode<synchronous>, transform_indices = @transform_4, window_bounds = array<i64: 1, 2>}, {pipeline_mode = #tpu.pipeline_mode<synchronous>, transform_indices = @transform_5, window_bounds = array<i64: 2, 512>}, {pipeline_mode = #tpu.pipeline_mode<synchronous>, transform_indices = @transform_6, window_bounds = array<i64: 1, 512>}, {pipeline_mode = #tpu.pipeline_mode<synchronous>, transform_indices = @transform_7, window_bounds = array<i64: 512, 784>}, {pipeline_mode = #tpu.pipeline_mode<synchronous>, transform_indices = @transform_8, window_bounds = array<i64: 1, 784>}, {transform_indices = @transform_9, window_bounds = array<i64: 8, 784>}]} {
    %c0 = arith.constant 0 : index
    %c0_0 = arith.constant 0 : index
    %0 = vector.load %arg1[%c0, %c0_0] : memref<8x784xf32, #tpu.memory_space<vmem>>, vector<8x784xf32>
    %1 = arith.truncf %0 : vector<8x784xf32> to vector<8x784xbf16>
    %c0_1 = arith.constant 0 : index
    %c0_2 = arith.constant 0 : index
    %2 = vector.load %arg2[%c0_1, %c0_2] : memref<784x512xbf16, #tpu.memory_space<vmem>>, vector<784x512xbf16>
    %cst = arith.constant dense<0.000000e+00> : vector<8x512xf32>
    %3 = tpu.matmul %1, %2, %cst {dimension_numbers = #tpu.dot_dimension_numbers<[1], [0], [0], [1], [0, 0, 1, 1], [], []>} : vector<8x784xbf16>, vector<784x512xbf16>, vector<8x512xf32> -> vector<8x512xf32>
    %c0_3 = arith.constant 0 : index
    %c0_4 = arith.constant 0 : index
    %4 = vector.load %arg3[%c0_3, %c0_4] : memref<1x512xf32, #tpu.memory_space<vmem>>, vector<1x512xf32>
    %5 = vector.broadcast %4 : vector<1x512xf32> to vector<8x512xf32>
    %6 = arith.addf %3, %5 : vector<8x512xf32>
    %cst_5 = arith.constant 0.000000e+00 : f32
    %7 = vector.broadcast %cst_5 : f32 to vector<8x512xf32>
    %8 = arith.maximumf %6, %7 : vector<8x512xf32>
    %c0_6 = arith.constant 0 : index
    %c0_7 = arith.constant 0 : index
    %9 = vector.load %arg4[%c0_6, %c0_7] : memref<2x512xf32, #tpu.memory_space<vmem>>, vector<1x512xf32>
    %10 = vector.broadcast %9 : vector<1x512xf32> to vector<8x512xf32>
    %11 = arith.mulf %8, %10 : vector<8x512xf32>
    %cst_8 = arith.constant dense<0.000000e+00> : vector<8xf32>
    %12 = vector.multi_reduction <add>, %11, %cst_8 [1] : vector<8x512xf32> to vector<8xf32>
    %13 = vector.shape_cast %12 : vector<8xf32> to vector<8x1xf32>
    %c0_9 = arith.constant 0 : index
    %c0_10 = arith.constant 0 : index
    %14 = vector.load %arg5[%c0_9, %c0_10] : memref<1x2xf32, #tpu.memory_space<vmem>>, vector<1x1xf32>
    %15 = vector.broadcast %14 : vector<1x1xf32> to vector<8x1xf32>
    %16 = arith.addf %13, %15 : vector<8x1xf32>
    %c1 = arith.constant 1 : index
    %c0_11 = arith.constant 0 : index
    %17 = vector.load %arg4[%c1, %c0_11] : memref<2x512xf32, #tpu.memory_space<vmem>>, vector<1x512xf32>
    %18 = vector.broadcast %17 : vector<1x512xf32> to vector<8x512xf32>
    %19 = arith.mulf %8, %18 : vector<8x512xf32>
    %cst_12 = arith.constant dense<0.000000e+00> : vector<8xf32>
    %20 = vector.multi_reduction <add>, %19, %cst_12 [1] : vector<8x512xf32> to vector<8xf32>
    %21 = vector.shape_cast %20 : vector<8xf32> to vector<8x1xf32>
    %c0_13 = arith.constant 0 : index
    %c1_14 = arith.constant 1 : index
    %22 = vector.load %arg5[%c0_13, %c1_14] : memref<1x2xf32, #tpu.memory_space<vmem>>, vector<1x1xf32>
    %23 = vector.broadcast %22 : vector<1x1xf32> to vector<8x1xf32>
    %24 = arith.addf %21, %23 : vector<8x1xf32>
    %c0_15 = arith.constant 0 : index
    %c0_16 = arith.constant 0 : index
    %25 = vector.load %arg6[%c0_15, %c0_16] : memref<2x512xf32, #tpu.memory_space<vmem>>, vector<1x512xf32>
    %26 = vector.broadcast %16 : vector<8x1xf32> to vector<8x512xf32>
    %27 = vector.broadcast %25 : vector<1x512xf32> to vector<8x512xf32>
    %28 = arith.mulf %26, %27 : vector<8x512xf32>
    %c1_17 = arith.constant 1 : index
    %c0_18 = arith.constant 0 : index
    %29 = vector.load %arg6[%c1_17, %c0_18] : memref<2x512xf32, #tpu.memory_space<vmem>>, vector<1x512xf32>
    %30 = vector.broadcast %24 : vector<8x1xf32> to vector<8x512xf32>
    %31 = vector.broadcast %29 : vector<1x512xf32> to vector<8x512xf32>
    %32 = arith.mulf %30, %31 : vector<8x512xf32>
    %33 = arith.addf %28, %32 : vector<8x512xf32>
    %c0_19 = arith.constant 0 : index
    %c0_20 = arith.constant 0 : index
    %34 = vector.load %arg7[%c0_19, %c0_20] : memref<1x512xf32, #tpu.memory_space<vmem>>, vector<1x512xf32>
    %35 = vector.broadcast %34 : vector<1x512xf32> to vector<8x512xf32>
    %36 = arith.addf %33, %35 : vector<8x512xf32>
    %cst_21 = arith.constant 0.000000e+00 : f32
    %37 = vector.broadcast %cst_21 : f32 to vector<8x512xf32>
    %38 = arith.maximumf %36, %37 : vector<8x512xf32>
    %39 = arith.truncf %38 : vector<8x512xf32> to vector<8x512xbf16>
    %c0_22 = arith.constant 0 : index
    %c0_23 = arith.constant 0 : index
    %40 = vector.load %arg8[%c0_22, %c0_23] : memref<512x784xbf16, #tpu.memory_space<vmem>>, vector<512x784xbf16>
    %cst_24 = arith.constant dense<0.000000e+00> : vector<8x784xf32>
    %41 = tpu.matmul %39, %40, %cst_24 {dimension_numbers = #tpu.dot_dimension_numbers<[1], [0], [0], [1], [0, 0, 1, 1], [], []>} : vector<8x512xbf16>, vector<512x784xbf16>, vector<8x784xf32> -> vector<8x784xf32>
    %c0_25 = arith.constant 0 : index
    %c0_26 = arith.constant 0 : index
    %42 = vector.load %arg9[%c0_25, %c0_26] : memref<1x784xf32, #tpu.memory_space<vmem>>, vector<1x784xf32>
    %43 = vector.broadcast %42 : vector<1x784xf32> to vector<8x784xf32>
    %44 = arith.addf %41, %43 : vector<8x784xf32>
    %cst_27 = arith.constant 5.000000e-01 : f32
    %45 = vector.broadcast %cst_27 : f32 to vector<8x784xf32>
    %46 = arith.mulf %45, %44 : vector<8x784xf32>
    %47 = math.tanh %46 : vector<8x784xf32>
    %cst_28 = arith.constant 1.000000e+00 : f32
    %48 = vector.broadcast %cst_28 : f32 to vector<8x784xf32>
    %49 = arith.addf %47, %48 : vector<8x784xf32>
    %cst_29 = arith.constant 5.000000e-01 : f32
    %50 = vector.broadcast %cst_29 : f32 to vector<8x784xf32>
    %51 = arith.mulf %50, %49 : vector<8x784xf32>
    %c0_30 = arith.constant 0 : index
    %c0_31 = arith.constant 0 : index
    %52 = vector.load %arg10[%c0_30, %c0_31] : memref<8x784xf32, #tpu.memory_space<vmem>>, vector<8x784xf32>
    tpu.vector_store %arg10[%c0_30, %c0_31], %51 {strides = array<i32>} : memref<8x784xf32, #tpu.memory_space<vmem>>, vector<8x784xf32>,
    return
  }
  func.func @transform_0(%arg0: i32) -> (i32, i32) {
    %c0_i32 = arith.constant 0 : i32
    %c0_i32_0 = arith.constant 0 : i32
    return %arg0, %c0_i32 : i32, i32
  }
  func.func @transform_1(%arg0: i32) -> (i32, i32) {
    %c0_i32 = arith.constant 0 : i32
    %c0_i32_0 = arith.constant 0 : i32
    %c0_i32_1 = arith.constant 0 : i32
    return %c0_i32, %c0_i32_0 : i32, i32
  }
  func.func @transform_2(%arg0: i32) -> (i32, i32) {
    %c0_i32 = arith.constant 0 : i32
    %c0_i32_0 = arith.constant 0 : i32
    %c0_i32_1 = arith.constant 0 : i32
    return %c0_i32, %c0_i32_0 : i32, i32
  }
  func.func @transform_3(%arg0: i32) -> (i32, i32) {
    %c0_i32 = arith.constant 0 : i32
    %c0_i32_0 = arith.constant 0 : i32
    %c0_i32_1 = arith.constant 0 : i32
    return %c0_i32, %c0_i32_0 : i32, i32
  }
  func.func @transform_4(%arg0: i32) -> (i32, i32) {
    %c0_i32 = arith.constant 0 : i32
    %c0_i32_0 = arith.constant 0 : i32
    %c0_i32_1 = arith.constant 0 : i32
    return %c0_i32, %c0_i32_0 : i32, i32
  }
  func.func @transform_5(%arg0: i32) -> (i32, i32) {
    %c0_i32 = arith.constant 0 : i32
    %c0_i32_0 = arith.constant 0 : i32
    %c0_i32_1 = arith.constant 0 : i32
    return %c0_i32, %c0_i32_0 : i32, i32
  }
  func.func @transform_6(%arg0: i32) -> (i32, i32) {
    %c0_i32 = arith.constant 0 : i32
    %c0_i32_0 = arith.constant 0 : i32
    %c0_i32_1 = arith.constant 0 : i32
    return %c0_i32, %c0_i32_0 : i32, i32
  }
  func.func @transform_7(%arg0: i32) -> (i32, i32) {
    %c0_i32 = arith.constant 0 : i32
    %c0_i32_0 = arith.constant 0 : i32
    %c0_i32_1 = arith.constant 0 : i32
    return %c0_i32, %c0_i32_0 : i32, i32
  }
  func.func @transform_8(%arg0: i32) -> (i32, i32) {
    %c0_i32 = arith.constant 0 : i32
    %c0_i32_0 = arith.constant 0 : i32
    %c0_i32_1 = arith.constant 0 : i32
    return %c0_i32, %c0_i32_0 : i32, i32
  }
  func.func @transform_9(%arg0: i32) -> (i32, i32) {
    %c0_i32 = arith.constant 0 : i32
    %c0_i32_0 = arith.constant 0 : i32
    return %arg0, %c0_i32 : i32, i32
  }
}

</mosaic_0001>

<llo_original>
// kernel: tpu_custom_call.1
$region0: #{tpu_custom_call.1}
  #allocation0 [shape = 'u32[]', space=smem, size = 0x4, offset = 0x4, fixed_abs, tag = 'smem constant byte address 0x4 - core index']
  #allocation1 [shape = 'u32[144,128]{1,0:T(1,128)}', space=vmem, size = 0x12000, scoped, tag = 'internal scratch']
  %s0 = inlined_call_operand.vmem [shape: f32[8,784], index: 0, kind: input, shape index: {}]
  %s1 = inlined_call_operand.vmem [shape: bf16[784,512], index: 1, kind: input, shape index: {}]
  %s2 = inlined_call_operand.vmem [shape: f32[1,512], index: 2, kind: input, shape index: {}]
  %s3 = inlined_call_operand.vmem [shape: f32[2,512], index: 3, kind: input, shape index: {}]
  %s4 = inlined_call_operand.vmem [shape: f32[1,2], index: 4, kind: input, shape index: {}]
  %s5 = inlined_call_operand.vmem [shape: f32[2,512], index: 5, kind: input, shape index: {}]
  %s6 = inlined_call_operand.vmem [shape: f32[1,512], index: 6, kind: input, shape index: {}]
  %s7 = inlined_call_operand.vmem [shape: bf16[512,784], index: 7, kind: input, shape index: {}]
  %s8 = inlined_call_operand.vmem [shape: f32[1,784], index: 8, kind: input, shape index: {}]
  %s9 = inlined_call_operand.hbm [shape: f32[8,784], index: 9, kind: output, shape index: {}]
  %s10 = sld [smem:[#allocation0]]
  $region46: #{tpu_custom_call.1} parent=0
    _
  %s12 = ssub.s32 1, %s10
  %s13 = scalar_select 0, %s12, %s10
  $region1: #{tpu_custom_call.1} parent=0
    #allocation2 [shape = 'u8[28672]{0}', space=vmem, size = 0x7000, scoped, tag = 'output window, operand 0, single buffered']
    #allocation3 [shape = 's32[1]{0}', space=sflag, size = 0x4, scoped, tag = 'scoped memory for tpu_custom_call.1']
    %14 = vsyncpa [#allocation3], 0
    // Predicated region
    $region2: #{tpu_custom_call.1} parent=1 // pred_check
      _
    $region3: #{tpu_custom_call.1} parent=1 // pred_check_branch
      %16 = sbr.rel (0) target = $region5
    $region4: #{tpu_custom_call.1} parent=1 // pred_region
      _
    $region5: #{tpu_custom_call.1} parent=1 // pred_fallthru
      _
    // Predicated region
    $region6: #{tpu_custom_call.1} parent=1 // pred_check
      _
    $region7: #{tpu_custom_call.1} parent=1 // pred_check_branch
      %18 = sbr.rel (0) target = $region9
    $region8: #{tpu_custom_call.1} parent=1 // pred_region
      _
    $region9: #{tpu_custom_call.1} parent=1 // pred_fallthru
      _
    // Predicated region
    $region10: #{tpu_custom_call.1} parent=1 // pred_check
      _
    $region11: #{tpu_custom_call.1} parent=1 // pred_check_branch
      %20 = sbr.rel (0) target = $region13
    $region12: #{tpu_custom_call.1} parent=1 // pred_region
      _
    $region13: #{tpu_custom_call.1} parent=1 // pred_fallthru
      _
    // Predicated region
    $region14: #{tpu_custom_call.1} parent=1 // pred_check
      _
    $region15: #{tpu_custom_call.1} parent=1 // pred_check_branch
      %22 = sbr.rel (0) target = $region17
    $region16: #{tpu_custom_call.1} parent=1 // pred_region
      _
    $region17: #{tpu_custom_call.1} parent=1 // pred_fallthru
      _
    // Predicated region
    $region18: #{tpu_custom_call.1} parent=1 // pred_check
      _
    $region19: #{tpu_custom_call.1} parent=1 // pred_check_branch
      %24 = sbr.rel (0) target = $region21
    $region20: #{tpu_custom_call.1} parent=1 // pred_region
      _
    $region21: #{tpu_custom_call.1} parent=1 // pred_fallthru
      _
    // Predicated region
    $region22: #{tpu_custom_call.1} parent=1 // pred_check
      _
    $region23: #{tpu_custom_call.1} parent=1 // pred_check_branch
      %26 = sbr.rel (0) target = $region25
    $region24: #{tpu_custom_call.1} parent=1 // pred_region
      _
    $region25: #{tpu_custom_call.1} parent=1 // pred_fallthru
      _
    // Predicated region
    $region26: #{tpu_custom_call.1} parent=1 // pred_check
      _
    $region27: #{tpu_custom_call.1} parent=1 // pred_check_branch
      %28 = sbr.rel (0) target = $region29
    $region28: #{tpu_custom_call.1} parent=1 // pred_region
      _
    $region29: #{tpu_custom_call.1} parent=1 // pred_fallthru
      _
    // Predicated region
    $region30: #{tpu_custom_call.1} parent=1 // pred_check
      _
    $region31: #{tpu_custom_call.1} parent=1 // pred_check_branch
      %30 = sbr.rel (0) target = $region33
    $region32: #{tpu_custom_call.1} parent=1 // pred_region
      _
    $region33: #{tpu_custom_call.1} parent=1 // pred_fallthru
      _
    // Predicated region
    $region34: #{tpu_custom_call.1} parent=1 // pred_check
      _
    $region35: #{tpu_custom_call.1} parent=1 // pred_check_branch
      %32 = sbr.rel (0) target = $region37
    $region36: #{tpu_custom_call.1} parent=1 // pred_region
      _
    $region37: #{tpu_custom_call.1} parent=1 // pred_fallthru
      _
    %v34 = vld [vmem:[%s0] sm:$0xff]
    %v35 = vld [vmem:[%s0 + $0x8] sm:$0xff]
    %v36 = vld [vmem:[%s0 + $0x10] sm:$0xff]
    %v37 = vld [vmem:[%s0 + $0x18] sm:$0xff]
    %v38 = vld [vmem:[%s0 + $0x20] sm:$0xff]
    %v39 = vld [vmem:[%s0 + $0x28] sm:$0xff]
    %v40 = vld [vmem:[%s0 + $0x30] sm:$0xff]
    %v41 = vpack.c.bf16 %v34, %v34
    %v42 = vpack.c.bf16 %v35, %v35
    %v43 = vpack.c.bf16 %v36, %v36
    %v44 = vpack.c.bf16 %v37, %v37
    %v45 = vpack.c.bf16 %v38, %v38
    %v46 = vpack.c.bf16 %v39, %v39
    %v47 = vpack.c.bf16 %v40, %v40
    %v48 = vld [vmem:[%s1] sm:$0xff]
    %v49 = vld [vmem:[%s1 + $0x8] sm:$0xff]
    %v50 = vld [vmem:[%s1 + $0x10] sm:$0xff]
    %v51 = vld [vmem:[%s1 + $0x18] sm:$0xff]
    %v52 = vld [vmem:[%s1 + $0x20] sm:$0xff]
    %v53 = vld [vmem:[%s1 + $0x28] sm:$0xff]
    %v54 = vld [vmem:[%s1 + $0x30] sm:$0xff]
    %v55 = vld [vmem:[%s1 + $0x38] sm:$0xff]
    %v56 = vld [vmem:[%s1 + $0x40] sm:$0xff]
    %v57 = vld [vmem:[%s1 + $0x48] sm:$0xff]
    %v58 = vld [vmem:[%s1 + $0x50] sm:$0xff]
    %v59 = vld [vmem:[%s1 + $0x58] sm:$0xff]
    %v60 = vld [vmem:[%s1 + $0x60] sm:$0xff]
    %v61 = vld [vmem:[%s1 + $0x68] sm:$0xff]
    %v62 = vld [vmem:[%s1 + $0x70] sm:$0xff]
    %v63 = vld [vmem:[%s1 + $0x78] sm:$0xff]
    %v64 = vld [vmem:[%s1 + $0x80] sm:$0xff]
    %v65 = vld [vmem:[%s1 + $0x88] sm:$0xff]
    %v66 = vld [vmem:[%s1 + $0x90] sm:$0xff]
    %v67 = vld [vmem:[%s1 + $0x98] sm:$0xff]
    %v68 = vld [vmem:[%s1 + $0xa0] sm:$0xff]
    %v69 = vld [vmem:[%s1 + $0xa8] sm:$0xff]
    %v70 = vld [vmem:[%s1 + $0xb0] sm:$0xff]
    %v71 = vld [vmem:[%s1 + $0xb8] sm:$0xff]
    %v72 = vld [vmem:[%s1 + $0xc0] sm:$0xff]
    %v73 = vld [vmem:[%s1 + $0xc8] sm:$0xff]
    %v74 = vld [vmem:[%s1 + $0xd0] sm:$0xff]
    %v75 = vld [vmem:[%s1 + $0xd8] sm:$0xff]
    %v76 = vld [vmem:[%s1 + $0xe0] sm:$0xff]
    %v77 = vld [vmem:[%s1 + $0xe8] sm:$0xff]
    %v78 = vld [vmem:[%s1 + $0xf0] sm:$0xff]
    %v79 = vld [vmem:[%s1 + $0xf8] sm:$0xff]
    %v80 = vld [vmem:[%s1 + $0x100] sm:$0xff]
    %v81 = vld [vmem:[%s1 + $0x108] sm:$0xff]
    %v82 = vld [vmem:[%s1 + $0x110] sm:$0xff]
    %v83 = vld [vmem:[%s1 + $0x118] sm:$0xff]
    %v84 = vld [vmem:[%s1 + $0x120] sm:$0xff]
    %v85 = vld [vmem:[%s1 + $0x128] sm:$0xff]
    %v86 = vld [vmem:[%s1 + $0x130] sm:$0xff]
    %v87 = vld [vmem:[%s1 + $0x138] sm:$0xff]
    %v88 = vld [vmem:[%s1 + $0x140] sm:$0xff]
    %v89 = vld [vmem:[%s1 + $0x148] sm:$0xff]
    %v90 = vld [vmem:[%s1 + $0x150] sm:$0xff]
    %v91 = vld [vmem:[%s1 + $0x158] sm:$0xff]
    %v92 = vld [vmem:[%s1 + $0x160] sm:$0xff]
    %v93 = vld [vmem:[%s1 + $0x168] sm:$0xff]
    %v94 = vld [vmem:[%s1 + $0x170] sm:$0xff]
    %v95 = vld [vmem:[%s1 + $0x178] sm:$0xff]
    %v96 = vld [vmem:[%s1 + $0x180] sm:$0xff]
    %v97 = vld [vmem:[%s1 + $0x188] sm:$0xff]
    %v98 = vld [vmem:[%s1 + $0x190] sm:$0xff]
    %v99 = vld [vmem:[%s1 + $0x198] sm:$0xff]
    %v100 = vld [vmem:[%s1 + $0x1a0] sm:$0xff]
    %v101 = vld [vmem:[%s1 + $0x1a8] sm:$0xff]
    %v102 = vld [vmem:[%s1 + $0x1b0] sm:$0xff]
    %v103 = vld [vmem:[%s1 + $0x1b8] sm:$0xff]
    %v104 = vld [vmem:[%s1 + $0x1c0] sm:$0xff]
    %v105 = vld [vmem:[%s1 + $0x1c8] sm:$0xff]
    %v106 = vld [vmem:[%s1 + $0x1d0] sm:$0xff]
    %v107 = vld [vmem:[%s1 + $0x1d8] sm:$0xff]
    %v108 = vld [vmem:[%s1 + $0x1e0] sm:$0xff]
    %v109 = vld [vmem:[%s1 + $0x1e8] sm:$0xff]
    %v110 = vld [vmem:[%s1 + $0x1f0] sm:$0xff]
    %v111 = vld [vmem:[%s1 + $0x1f8] sm:$0xff]
    %v112 = vld [vmem:[%s1 + $0x200] sm:$0xff]
    %v113 = vld [vmem:[%s1 + $0x208] sm:$0xff]
    %v114 = vld [vmem:[%s1 + $0x210] sm:$0xff]
    %v115 = vld [vmem:[%s1 + $0x218] sm:$0xff]
    %v116 = vld [vmem:[%s1 + $0x220] sm:$0xff]
    %v117 = vld [vmem:[%s1 + $0x228] sm:$0xff]
    %v118 = vld [vmem:[%s1 + $0x230] sm:$0xff]
    %v119 = vld [vmem:[%s1 + $0x238] sm:$0xff]
    %v120 = vld [vmem:[%s1 + $0x240] sm:$0xff]
    %v121 = vld [vmem:[%s1 + $0x248] sm:$0xff]
    %v122 = vld [vmem:[%s1 + $0x250] sm:$0xff]
    %v123 = vld [vmem:[%s1 + $0x258] sm:$0xff]
    %v124 = vld [vmem:[%s1 + $0x260] sm:$0xff]
    %v125 = vld [vmem:[%s1 + $0x268] sm:$0xff]
    %v126 = vld [vmem:[%s1 + $0x270] sm:$0xff]
    %v127 = vld [vmem:[%s1 + $0x278] sm:$0xff]
    %v128 = vld [vmem:[%s1 + $0x280] sm:$0xff]
    %v129 = vld [vmem:[%s1 + $0x288] sm:$0xff]
    %v130 = vld [vmem:[%s1 + $0x290] sm:$0xff]
    %v131 = vld [vmem:[%s1 + $0x298] sm:$0xff]
    %v132 = vld [vmem:[%s1 + $0x2a0] sm:$0xff]
    %v133 = vld [vmem:[%s1 + $0x2a8] sm:$0xff]
    %v134 = vld [vmem:[%s1 + $0x2b0] sm:$0xff]
    %v135 = vld [vmem:[%s1 + $0x2b8] sm:$0xff]
    %v136 = vld [vmem:[%s1 + $0x2c0] sm:$0xff]
    %v137 = vld [vmem:[%s1 + $0x2c8] sm:$0xff]
    %v138 = vld [vmem:[%s1 + $0x2d0] sm:$0xff]
    %v139 = vld [vmem:[%s1 + $0x2d8] sm:$0xff]
    %v140 = vld [vmem:[%s1 + $0x2e0] sm:$0xff]
    %v141 = vld [vmem:[%s1 + $0x2e8] sm:$0xff]
    %v142 = vld [vmem:[%s1 + $0x2f0] sm:$0xff]
    %v143 = vld [vmem:[%s1 + $0x2f8] sm:$0xff]
    %v144 = vld [vmem:[%s1 + $0x300] sm:$0xff]
    %v145 = vld [vmem:[%s1 + $0x308] sm:$0xff]
    %v146 = vld [vmem:[%s1 + $0x310] sm:$0xff]
    %v147 = vld [vmem:[%s1 + $0x318] sm:$0xff]
    %v148 = vld [vmem:[%s1 + $0x320] sm:$0xff]
    %v149 = vld [vmem:[%s1 + $0x328] sm:$0xff]
    %v150 = vld [vmem:[%s1 + $0x330] sm:$0xff]
    %v151 = vld [vmem:[%s1 + $0x338] sm:$0xff]
    %v152 = vld [vmem:[%s1 + $0x340] sm:$0xff]
    %v153 = vld [vmem:[%s1 + $0x348] sm:$0xff]
    %v154 = vld [vmem:[%s1 + $0x350] sm:$0xff]
    %v155 = vld [vmem:[%s1 + $0x358] sm:$0xff]
    %v156 = vld [vmem:[%s1 + $0x360] sm:$0xff]
    %v157 = vld [vmem:[%s1 + $0x368] sm:$0xff]
    %v158 = vld [vmem:[%s1 + $0x370] sm:$0xff]
    %v159 = vld [vmem:[%s1 + $0x378] sm:$0xff]
    %v160 = vld [vmem:[%s1 + $0x380] sm:$0xff]
    %v161 = vld [vmem:[%s1 + $0x388] sm:$0xff]
    %v162 = vld [vmem:[%s1 + $0x390] sm:$0xff]
    %v163 = vld [vmem:[%s1 + $0x398] sm:$0xff]
    %v164 = vld [vmem:[%s1 + $0x3a0] sm:$0xff]
    %v165 = vld [vmem:[%s1 + $0x3a8] sm:$0xff]
    %v166 = vld [vmem:[%s1 + $0x3b0] sm:$0xff]
    %v167 = vld [vmem:[%s1 + $0x3b8] sm:$0xff]
    %v168 = vld [vmem:[%s1 + $0x3c0] sm:$0xff]
    %v169 = vld [vmem:[%s1 + $0x3c8] sm:$0xff]
    %v170 = vld [vmem:[%s1 + $0x3d0] sm:$0xff]
    %v171 = vld [vmem:[%s1 + $0x3d8] sm:$0xff]
    %v172 = vld [vmem:[%s1 + $0x3e0] sm:$0xff]
    %v173 = vld [vmem:[%s1 + $0x3e8] sm:$0xff]
    %v174 = vld [vmem:[%s1 + $0x3f0] sm:$0xff]
    %v175 = vld [vmem:[%s1 + $0x3f8] sm:$0xff]
    %v176 = vld [vmem:[%s1 + $0x400] sm:$0xff]
    %v177 = vld [vmem:[%s1 + $0x408] sm:$0xff]
    %v178 = vld [vmem:[%s1 + $0x410] sm:$0xff]
    %v179 = vld [vmem:[%s1 + $0x418] sm:$0xff]
    %v180 = vld [vmem:[%s1 + $0x420] sm:$0xff]
    %v181 = vld [vmem:[%s1 + $0x428] sm:$0xff]
    %v182 = vld [vmem:[%s1 + $0x430] sm:$0xff]
    %v183 = vld [vmem:[%s1 + $0x438] sm:$0xff]
    %v184 = vld [vmem:[%s1 + $0x440] sm:$0xff]
    %v185 = vld [vmem:[%s1 + $0x448] sm:$0xff]
    %v186 = vld [vmem:[%s1 + $0x450] sm:$0xff]
    %v187 = vld [vmem:[%s1 + $0x458] sm:$0xff]
    %v188 = vld [vmem:[%s1 + $0x460] sm:$0xff]
    %v189 = vld [vmem:[%s1 + $0x468] sm:$0xff]
    %v190 = vld [vmem:[%s1 + $0x470] sm:$0xff]
    %v191 = vld [vmem:[%s1 + $0x478] sm:$0xff]
    %v192 = vld [vmem:[%s1 + $0x480] sm:$0xff]
    %v193 = vld [vmem:[%s1 + $0x488] sm:$0xff]
    %v194 = vld [vmem:[%s1 + $0x490] sm:$0xff]
    %v195 = vld [vmem:[%s1 + $0x498] sm:$0xff]
    %v196 = vld [vmem:[%s1 + $0x4a0] sm:$0xff]
    %v197 = vld [vmem:[%s1 + $0x4a8] sm:$0xff]
    %v198 = vld [vmem:[%s1 + $0x4b0] sm:$0xff]
    %v199 = vld [vmem:[%s1 + $0x4b8] sm:$0xff]
    %v200 = vld [vmem:[%s1 + $0x4c0] sm:$0xff]
    %v201 = vld [vmem:[%s1 + $0x4c8] sm:$0xff]
    %v202 = vld [vmem:[%s1 + $0x4d0] sm:$0xff]
    %v203 = vld [vmem:[%s1 + $0x4d8] sm:$0xff]
    %v204 = vld [vmem:[%s1 + $0x4e0] sm:$0xff]
    %v205 = vld [vmem:[%s1 + $0x4e8] sm:$0xff]
    %v206 = vld [vmem:[%s1 + $0x4f0] sm:$0xff]
    %v207 = vld [vmem:[%s1 + $0x4f8] sm:$0xff]
    %v208 = vld [vmem:[%s1 + $0x500] sm:$0xff]
    %v209 = vld [vmem:[%s1 + $0x508] sm:$0xff]
    %v210 = vld [vmem:[%s1 + $0x510] sm:$0xff]
    %v211 = vld [vmem:[%s1 + $0x518] sm:$0xff]
    %v212 = vld [vmem:[%s1 + $0x520] sm:$0xff]
    %v213 = vld [vmem:[%s1 + $0x528] sm:$0xff]
    %v214 = vld [vmem:[%s1 + $0x530] sm:$0xff]
    %v215 = vld [vmem:[%s1 + $0x538] sm:$0xff]
    %v216 = vld [vmem:[%s1 + $0x540] sm:$0xff]
    %v217 = vld [vmem:[%s1 + $0x548] sm:$0xff]
    %v218 = vld [vmem:[%s1 + $0x550] sm:$0xff]
    %v219 = vld [vmem:[%s1 + $0x558] sm:$0xff]
    %v220 = vld [vmem:[%s1 + $0x560] sm:$0xff]
    %v221 = vld [vmem:[%s1 + $0x568] sm:$0xff]
    %v222 = vld [vmem:[%s1 + $0x570] sm:$0xff]
    %v223 = vld [vmem:[%s1 + $0x578] sm:$0xff]
    %v224 = vld [vmem:[%s1 + $0x580] sm:$0xff]
    %v225 = vld [vmem:[%s1 + $0x588] sm:$0xff]
    %v226 = vld [vmem:[%s1 + $0x590] sm:$0xff]
    %v227 = vld [vmem:[%s1 + $0x598] sm:$0xff]
    %v228 = vld [vmem:[%s1 + $0x5a0] sm:$0xff]
    %v229 = vld [vmem:[%s1 + $0x5a8] sm:$0xff]
    %v230 = vld [vmem:[%s1 + $0x5b0] sm:$0xff]
    %v231 = vld [vmem:[%s1 + $0x5b8] sm:$0xff]
    %v232 = vld [vmem:[%s1 + $0x5c0] sm:$0xff]
    %v233 = vld [vmem:[%s1 + $0x5c8] sm:$0xff]
    %v234 = vld [vmem:[%s1 + $0x5d0] sm:$0xff]
    %v235 = vld [vmem:[%s1 + $0x5d8] sm:$0xff]
    %v236 = vld [vmem:[%s1 + $0x5e0] sm:$0xff]
    %v237 = vld [vmem:[%s1 + $0x5e8] sm:$0xff]
    %v238 = vld [vmem:[%s1 + $0x5f0] sm:$0xff]
    %v239 = vld [vmem:[%s1 + $0x5f8] sm:$0xff]
    %v240 = vld [vmem:[%s1 + $0x600] sm:$0xff]
    %v241 = vld [vmem:[%s1 + $0x608] sm:$0xff]
    %v242 = vld [vmem:[%s1 + $0x610] sm:$0xff]
    %v243 = vld [vmem:[%s1 + $0x618] sm:$0xff]
    %v244 = vld [vmem:[%s2] sm:$0xf]
    %v246 = vlaneseq
    %v247 = vshrl.u32 %v246, 7
    %v248 = vsub.s32 0, %v247
    %v249 = vrot.slane %v244, %v248
    %v250 = vlaneseq
    %v251 = vshrl.u32 %v250, 7
    %v252 = vsub.s32 1, %v251
    %v253 = vrot.slane %v244, %v252
    %v254 = vlaneseq
    %v255 = vshrl.u32 %v254, 7
    %v256 = vsub.s32 2, %v255
    %v257 = vrot.slane %v244, %v256
    %v258 = vlaneseq
    %v259 = vshrl.u32 %v258, 7
    %v260 = vsub.s32 3, %v259
    %v261 = vrot.slane %v244, %v260
    %v462 = vunpack.c.l.b16 %v48
    %v463 = vunpack.c.h.b16 %v48
    %v464 = vunpack.c.l.b16 %v49
    %v465 = vunpack.c.h.b16 %v49
    %v466 = vunpack.c.l.b16 %v50
    %v467 = vunpack.c.h.b16 %v50
    %v468 = vunpack.c.l.b16 %v51
    %v469 = vunpack.c.h.b16 %v51
    %v470 = vunpack.c.l.b16 %v52
    %v471 = vunpack.c.h.b16 %v52
    %v472 = vunpack.c.l.b16 %v53
    %v473 = vunpack.c.h.b16 %v53
    %v474 = vunpack.c.l.b16 %v54
    %v475 = vunpack.c.h.b16 %v54
    %v476 = vunpack.c.l.b16 %v55
    %v477 = vunpack.c.h.b16 %v55
    %v478 = vunpack.c.l.b16 %v56
    %v479 = vunpack.c.h.b16 %v56
    %v480 = vunpack.c.l.b16 %v57
    %v481 = vunpack.c.h.b16 %v57
    %v482 = vunpack.c.l.b16 %v58
    %v483 = vunpack.c.h.b16 %v58
    %v484 = vunpack.c.l.b16 %v59
    %v485 = vunpack.c.h.b16 %v59
    %v486 = vunpack.c.l.b16 %v60
    %v487 = vunpack.c.h.b16 %v60
    %v488 = vunpack.c.l.b16 %v61
    %v489 = vunpack.c.h.b16 %v61
    %v490 = vunpack.c.l.b16 %v62
    %v491 = vunpack.c.h.b16 %v62
    %v492 = vunpack.c.l.b16 %v63
    %v493 = vunpack.c.h.b16 %v63
    %v494 = vunpack.c.l.b16 %v64
    %v495 = vunpack.c.h.b16 %v64
    %v496 = vunpack.c.l.b16 %v65
    %v497 = vunpack.c.h.b16 %v65
    %v498 = vunpack.c.l.b16 %v66
    %v499 = vunpack.c.h.b16 %v66
    %v500 = vunpack.c.l.b16 %v67
    %v501 = vunpack.c.h.b16 %v67
    %v502 = vunpack.c.l.b16 %v68
    %v503 = vunpack.c.h.b16 %v68
    %v504 = vunpack.c.l.b16 %v69
    %v505 = vunpack.c.h.b16 %v69
    %v506 = vunpack.c.l.b16 %v70
    %v507 = vunpack.c.h.b16 %v70
    %v508 = vunpack.c.l.b16 %v71
    %v509 = vunpack.c.h.b16 %v71
    %v510 = vunpack.c.l.b16 %v72
    %v511 = vunpack.c.h.b16 %v72
    %v512 = vunpack.c.l.b16 %v73
    %v513 = vunpack.c.h.b16 %v73
    %v514 = vunpack.c.l.b16 %v74
    %v515 = vunpack.c.h.b16 %v74
    %v516 = vunpack.c.l.b16 %v75
    %v517 = vunpack.c.h.b16 %v75
    %v518 = vunpack.c.l.b16 %v76
    %v519 = vunpack.c.h.b16 %v76
    %v520 = vunpack.c.l.b16 %v77
    %v521 = vunpack.c.h.b16 %v77
    %v522 = vunpack.c.l.b16 %v78
    %v523 = vunpack.c.h.b16 %v78
    %v524 = vunpack.c.l.b16 %v79
    %v525 = vunpack.c.h.b16 %v79
    %v526 = vunpack.c.l.b16 %v80
    %v527 = vunpack.c.h.b16 %v80
    %v528 = vunpack.c.l.b16 %v81
    %v529 = vunpack.c.h.b16 %v81
    %v530 = vunpack.c.l.b16 %v82
    %v531 = vunpack.c.h.b16 %v82
    %v532 = vunpack.c.l.b16 %v83
    %v533 = vunpack.c.h.b16 %v83
    %v534 = vunpack.c.l.b16 %v84
    %v535 = vunpack.c.h.b16 %v84
    %v536 = vunpack.c.l.b16 %v85
    %v537 = vunpack.c.h.b16 %v85
    %v538 = vunpack.c.l.b16 %v86
    %v539 = vunpack.c.h.b16 %v86
    %v540 = vunpack.c.l.b16 %v87
    %v541 = vunpack.c.h.b16 %v87
    %v542 = vunpack.c.l.b16 %v88
    %v543 = vunpack.c.h.b16 %v88
    %v544 = vunpack.c.l.b16 %v89
    %v545 = vunpack.c.h.b16 %v89
    %v546 = vunpack.c.l.b16 %v90
    %v547 = vunpack.c.h.b16 %v90
    %v548 = vunpack.c.l.b16 %v91
    %v549 = vunpack.c.h.b16 %v91
    %v550 = vunpack.c.l.b16 %v92
    %v551 = vunpack.c.h.b16 %v92
    %v552 = vunpack.c.l.b16 %v93
    %v553 = vunpack.c.h.b16 %v93
    %v554 = vunpack.c.l.b16 %v94
    %v555 = vunpack.c.h.b16 %v94
    %v556 = vunpack.c.l.b16 %v95
    %v557 = vunpack.c.h.b16 %v95
    %v558 = vunpack.c.l.b16 %v96
    %v559 = vunpack.c.h.b16 %v96
    %v560 = vunpack.c.l.b16 %v97
    %v561 = vunpack.c.h.b16 %v97
    %v562 = vunpack.c.l.b16 %v98
    %v563 = vunpack.c.h.b16 %v98
    %v564 = vunpack.c.l.b16 %v99
    %v565 = vunpack.c.h.b16 %v99
    %v566 = vunpack.c.l.b16 %v100
    %v567 = vunpack.c.h.b16 %v100
    %v568 = vunpack.c.l.b16 %v101
    %v569 = vunpack.c.h.b16 %v101
    %v570 = vunpack.c.l.b16 %v102
    %v571 = vunpack.c.h.b16 %v102
    %v572 = vunpack.c.l.b16 %v103
    %v573 = vunpack.c.h.b16 %v103
    %v574 = vunpack.c.l.b16 %v104
    %v575 = vunpack.c.h.b16 %v104
    %v576 = vunpack.c.l.b16 %v105
    %v577 = vunpack.c.h.b16 %v105
    %v578 = vunpack.c.l.b16 %v106
    %v579 = vunpack.c.h.b16 %v106
    %v580 = vunpack.c.l.b16 %v107
    %v581 = vunpack.c.h.b16 %v107
    %v582 = vunpack.c.l.b16 %v108
    %v583 = vunpack.c.h.b16 %v108
    %v584 = vunpack.c.l.b16 %v109
    %v585 = vunpack.c.h.b16 %v109
    %v586 = vunpack.c.l.b16 %v110
    %v587 = vunpack.c.h.b16 %v110
    %v588 = vunpack.c.l.b16 %v111
    %v589 = vunpack.c.h.b16 %v111
    %v590 = vunpack.c.l.b16 %v112
    %v591 = vunpack.c.h.b16 %v112
    %v592 = vunpack.c.l.b16 %v113
    %v593 = vunpack.c.h.b16 %v113
    %v594 = vunpack.c.l.b16 %v114
    %v595 = vunpack.c.h.b16 %v114
    %v596 = vunpack.c.l.b16 %v115
    %v597 = vunpack.c.h.b16 %v115
    %v598 = vunpack.c.l.b16 %v116
    %v599 = vunpack.c.h.b16 %v116
    %v600 = vunpack.c.l.b16 %v117
    %v601 = vunpack.c.h.b16 %v117
    %v602 = vunpack.c.l.b16 %v118
    %v603 = vunpack.c.h.b16 %v118
    %v604 = vunpack.c.l.b16 %v119
    %v605 = vunpack.c.h.b16 %v119
    %v606 = vunpack.c.l.b16 %v120
    %v607 = vunpack.c.h.b16 %v120
    %v608 = vunpack.c.l.b16 %v121
    %v609 = vunpack.c.h.b16 %v121
    %v610 = vunpack.c.l.b16 %v122
    %v611 = vunpack.c.h.b16 %v122
    %v612 = vunpack.c.l.b16 %v123
    %v613 = vunpack.c.h.b16 %v123
    %v614 = vunpack.c.l.b16 %v124
    %v615 = vunpack.c.h.b16 %v124
    %v616 = vunpack.c.l.b16 %v125
    %v617 = vunpack.c.h.b16 %v125
    %v618 = vunpack.c.l.b16 %v126
    %v619 = vunpack.c.h.b16 %v126
    %v620 = vunpack.c.l.b16 %v127
    %v621 = vunpack.c.h.b16 %v127
    %v622 = vunpack.c.l.b16 %v128
    %v623 = vunpack.c.h.b16 %v128
    %v624 = vunpack.c.l.b16 %v129
    %v625 = vunpack.c.h.b16 %v129
    %v626 = vunpack.c.l.b16 %v130
    %v627 = vunpack.c.h.b16 %v130
    %v628 = vunpack.c.l.b16 %v131
    %v629 = vunpack.c.h.b16 %v131
    %v630 = vunpack.c.l.b16 %v132
    %v631 = vunpack.c.h.b16 %v132
    %v632 = vunpack.c.l.b16 %v133
    %v633 = vunpack.c.h.b16 %v133
    %v634 = vunpack.c.l.b16 %v134
    %v635 = vunpack.c.h.b16 %v134
    %v636 = vunpack.c.l.b16 %v135
    %v637 = vunpack.c.h.b16 %v135
    %v638 = vunpack.c.l.b16 %v136
    %v639 = vunpack.c.h.b16 %v136
    %v640 = vunpack.c.l.b16 %v137
    %v641 = vunpack.c.h.b16 %v137
    %v642 = vunpack.c.l.b16 %v138
    %v643 = vunpack.c.h.b16 %v138
    %v644 = vunpack.c.l.b16 %v139
    %v645 = vunpack.c.h.b16 %v139
    %v646 = vunpack.c.l.b16 %v140
    %v647 = vunpack.c.h.b16 %v140
    %v648 = vunpack.c.l.b16 %v141
    %v649 = vunpack.c.h.b16 %v141
    %v650 = vunpack.c.l.b16 %v142
    %v651 = vunpack.c.h.b16 %v142
    %v652 = vunpack.c.l.b16 %v143
    %v653 = vunpack.c.h.b16 %v143
    %v654 = vunpack.c.l.b16 %v144
    %v655 = vunpack.c.h.b16 %v144
    %v656 = vunpack.c.l.b16 %v145
    %v657 = vunpack.c.h.b16 %v145
    %v658 = vunpack.c.l.b16 %v146
    %v659 = vunpack.c.h.b16 %v146
    %v660 = vunpack.c.l.b16 %v147
    %v661 = vunpack.c.h.b16 %v147
    %v662 = vunpack.c.l.b16 %v148
    %v663 = vunpack.c.h.b16 %v148
    %v664 = vunpack.c.l.b16 %v149
    %v665 = vunpack.c.h.b16 %v149
    %v666 = vunpack.c.l.b16 %v150
    %v667 = vunpack.c.h.b16 %v150
    %v668 = vunpack.c.l.b16 %v151
    %v669 = vunpack.c.h.b16 %v151
    %v670 = vunpack.c.l.b16 %v152
    %v671 = vunpack.c.h.b16 %v152
    %v672 = vunpack.c.l.b16 %v153
    %v673 = vunpack.c.h.b16 %v153
    %v674 = vunpack.c.l.b16 %v154
    %v675 = vunpack.c.h.b16 %v154
    %v676 = vunpack.c.l.b16 %v155
    %v677 = vunpack.c.h.b16 %v155
    %v678 = vunpack.c.l.b16 %v156
    %v679 = vunpack.c.h.b16 %v156
    %v680 = vunpack.c.l.b16 %v157
    %v681 = vunpack.c.h.b16 %v157
    %v682 = vunpack.c.l.b16 %v158
    %v683 = vunpack.c.h.b16 %v158
    %v684 = vunpack.c.l.b16 %v159
    %v685 = vunpack.c.h.b16 %v159
    %v686 = vunpack.c.l.b16 %v160
    %v687 = vunpack.c.h.b16 %v160
    %v688 = vunpack.c.l.b16 %v161
    %v689 = vunpack.c.h.b16 %v161
    %v690 = vunpack.c.l.b16 %v162
    %v691 = vunpack.c.h.b16 %v162
    %v692 = vunpack.c.l.b16 %v163
    %v693 = vunpack.c.h.b16 %v163
    %v694 = vunpack.c.l.b16 %v164
    %v695 = vunpack.c.h.b16 %v164
    %v696 = vunpack.c.l.b16 %v165
    %v697 = vunpack.c.h.b16 %v165
    %v698 = vunpack.c.l.b16 %v166
    %v699 = vunpack.c.h.b16 %v166
    %v700 = vunpack.c.l.b16 %v167
    %v701 = vunpack.c.h.b16 %v167
    %v702 = vunpack.c.l.b16 %v168
    %v703 = vunpack.c.h.b16 %v168
    %v704 = vunpack.c.l.b16 %v169
    %v705 = vunpack.c.h.b16 %v169
    %v706 = vunpack.c.l.b16 %v170
    %v707 = vunpack.c.h.b16 %v170
    %v708 = vunpack.c.l.b16 %v171
    %v709 = vunpack.c.h.b16 %v171
    %v710 = vunpack.c.l.b16 %v172
    %v711 = vunpack.c.h.b16 %v172
    %v712 = vunpack.c.l.b16 %v173
    %v713 = vunpack.c.h.b16 %v173
    %v714 = vunpack.c.l.b16 %v174
    %v715 = vunpack.c.h.b16 %v174
    %v716 = vunpack.c.l.b16 %v175
    %v717 = vunpack.c.h.b16 %v175
    %v718 = vunpack.c.l.b16 %v176
    %v719 = vunpack.c.h.b16 %v176
    %v720 = vunpack.c.l.b16 %v177
    %v721 = vunpack.c.h.b16 %v177
    %v722 = vunpack.c.l.b16 %v178
    %v723 = vunpack.c.h.b16 %v178
    %v724 = vunpack.c.l.b16 %v179
    %v725 = vunpack.c.h.b16 %v179
    %v726 = vunpack.c.l.b16 %v180
    %v727 = vunpack.c.h.b16 %v180
    %v728 = vunpack.c.l.b16 %v181
    %v729 = vunpack.c.h.b16 %v181
    %v730 = vunpack.c.l.b16 %v182
    %v731 = vunpack.c.h.b16 %v182
    %v732 = vunpack.c.l.b16 %v183
    %v733 = vunpack.c.h.b16 %v183
    %v734 = vunpack.c.l.b16 %v184
    %v735 = vunpack.c.h.b16 %v184
    %v736 = vunpack.c.l.b16 %v185
    %v737 = vunpack.c.h.b16 %v185
    %v738 = vunpack.c.l.b16 %v186
    %v739 = vunpack.c.h.b16 %v186
    %v740 = vunpack.c.l.b16 %v187
    %v741 = vunpack.c.h.b16 %v187
    %v742 = vunpack.c.l.b16 %v188
    %v743 = vunpack.c.h.b16 %v188
    %v744 = vunpack.c.l.b16 %v189
    %v745 = vunpack.c.h.b16 %v189
    %v746 = vunpack.c.l.b16 %v190
    %v747 = vunpack.c.h.b16 %v190
    %v748 = vunpack.c.l.b16 %v191
    %v749 = vunpack.c.h.b16 %v191
    %v750 = vunpack.c.l.b16 %v192
    %v751 = vunpack.c.h.b16 %v192
    %v752 = vunpack.c.l.b16 %v193
    %v753 = vunpack.c.h.b16 %v193
    %v754 = vunpack.c.l.b16 %v194
    %v755 = vunpack.c.h.b16 %v194
    %v756 = vunpack.c.l.b16 %v195
    %v757 = vunpack.c.h.b16 %v195
    %v758 = vunpack.c.l.b16 %v196
    %v759 = vunpack.c.h.b16 %v196
    %v760 = vunpack.c.l.b16 %v197
    %v761 = vunpack.c.h.b16 %v197
    %v762 = vunpack.c.l.b16 %v198
    %v763 = vunpack.c.h.b16 %v198
    %v764 = vunpack.c.l.b16 %v199
    %v765 = vunpack.c.h.b16 %v199
    %v766 = vunpack.c.l.b16 %v200
    %v767 = vunpack.c.h.b16 %v200
    %v768 = vunpack.c.l.b16 %v201
    %v769 = vunpack.c.h.b16 %v201
    %v770 = vunpack.c.l.b16 %v202
    %v771 = vunpack.c.h.b16 %v202
    %v772 = vunpack.c.l.b16 %v203
    %v773 = vunpack.c.h.b16 %v203
    %v774 = vunpack.c.l.b16 %v204
    %v775 = vunpack.c.h.b16 %v204
    %v776 = vunpack.c.l.b16 %v205
    %v777 = vunpack.c.h.b16 %v205
    %v778 = vunpack.c.l.b16 %v206
    %v779 = vunpack.c.h.b16 %v206
    %v780 = vunpack.c.l.b16 %v207
    %v781 = vunpack.c.h.b16 %v207
    %v782 = vunpack.c.l.b16 %v208
    %v783 = vunpack.c.h.b16 %v208
    %v784 = vunpack.c.l.b16 %v209
    %v785 = vunpack.c.h.b16 %v209
    %v786 = vunpack.c.l.b16 %v210
    %v787 = vunpack.c.h.b16 %v210
    %v788 = vunpack.c.l.b16 %v211
    %v789 = vunpack.c.h.b16 %v211
    %v790 = vunpack.c.l.b16 %v212
    %v791 = vunpack.c.h.b16 %v212
    %v792 = vunpack.c.l.b16 %v213
    %v793 = vunpack.c.h.b16 %v213
    %v794 = vunpack.c.l.b16 %v214
    %v795 = vunpack.c.h.b16 %v214
    %v796 = vunpack.c.l.b16 %v215
    %v797 = vunpack.c.h.b16 %v215
    %v798 = vunpack.c.l.b16 %v216
    %v799 = vunpack.c.h.b16 %v216
    %v800 = vunpack.c.l.b16 %v217
    %v801 = vunpack.c.h.b16 %v217
    %v802 = vunpack.c.l.b16 %v218
    %v803 = vunpack.c.h.b16 %v218
    %v804 = vunpack.c.l.b16 %v219
    %v805 = vunpack.c.h.b16 %v219
    %v806 = vunpack.c.l.b16 %v220
    %v807 = vunpack.c.h.b16 %v220
    %v808 = vunpack.c.l.b16 %v221
    %v809 = vunpack.c.h.b16 %v221
    %v810 = vunpack.c.l.b16 %v222
    %v811 = vunpack.c.h.b16 %v222
    %v812 = vunpack.c.l.b16 %v223
    %v813 = vunpack.c.h.b16 %v223
    %v814 = vunpack.c.l.b16 %v224
    %v815 = vunpack.c.h.b16 %v224
    %v816 = vunpack.c.l.b16 %v225
    %v817 = vunpack.c.h.b16 %v225
    %v818 = vunpack.c.l.b16 %v226
    %v819 = vunpack.c.h.b16 %v226
    %v820 = vunpack.c.l.b16 %v227
    %v821 = vunpack.c.h.b16 %v227
    %v822 = vunpack.c.l.b16 %v228
    %v823 = vunpack.c.h.b16 %v228
    %v824 = vunpack.c.l.b16 %v229
    %v825 = vunpack.c.h.b16 %v229
    %v826 = vunpack.c.l.b16 %v230
    %v827 = vunpack.c.h.b16 %v230
    %v828 = vunpack.c.l.b16 %v231
    %v829 = vunpack.c.h.b16 %v231
    %v830 = vunpack.c.l.b16 %v232
    %v831 = vunpack.c.h.b16 %v232
    %v832 = vunpack.c.l.b16 %v233
    %v833 = vunpack.c.h.b16 %v233
    %v834 = vunpack.c.l.b16 %v234
    %v835 = vunpack.c.h.b16 %v234
    %v836 = vunpack.c.l.b16 %v235
    %v837 = vunpack.c.h.b16 %v235
    %v838 = vunpack.c.l.b16 %v236
    %v839 = vunpack.c.h.b16 %v236
    %v840 = vunpack.c.l.b16 %v237
    %v841 = vunpack.c.h.b16 %v237
    %v842 = vunpack.c.l.b16 %v238
    %v843 = vunpack.c.h.b16 %v238
    %v844 = vunpack.c.l.b16 %v239
    %v845 = vunpack.c.h.b16 %v239
    %v846 = vunpack.c.l.b16 %v240
    %v847 = vunpack.c.h.b16 %v240
    %v848 = vunpack.c.l.b16 %v241
    %v849 = vunpack.c.h.b16 %v241
    %v850 = vunpack.c.l.b16 %v242
    %v851 = vunpack.c.h.b16 %v242
    %v852 = vunpack.c.l.b16 %v243
    %v853 = vunpack.c.h.b16 %v243
    %v854 = vpack.c.b16 %v466, %v462
    %v855 = vpack.c.b16 %v467, %v463
    %v856 = vpack.c.b16 %v468, %v464
    %v857 = vpack.c.b16 %v469, %v465
    %v858 = vpack.c.b16 %v474, %v470
    %v859 = vpack.c.b16 %v475, %v471
    %v860 = vpack.c.b16 %v476, %v472
    %v861 = vpack.c.b16 %v477, %v473
    %v862 = vpack.c.b16 %v482, %v478
    %v863 = vpack.c.b16 %v483, %v479
    %v864 = vpack.c.b16 %v484, %v480
    %v865 = vpack.c.b16 %v485, %v481
    %v866 = vpack.c.b16 %v490, %v486
    %v867 = vpack.c.b16 %v491, %v487
    %v868 = vpack.c.b16 %v492, %v488
    %v869 = vpack.c.b16 %v493, %v489
    %v870 = vpack.c.b16 %v498, %v494
    %v871 = vpack.c.b16 %v499, %v495
    %v872 = vpack.c.b16 %v500, %v496
    %v873 = vpack.c.b16 %v501, %v497
    %v874 = vpack.c.b16 %v506, %v502
    %v875 = vpack.c.b16 %v507, %v503
    %v876 = vpack.c.b16 %v508, %v504
    %v877 = vpack.c.b16 %v509, %v505
    %v878 = vpack.c.b16 %v514, %v510
    %v879 = vpack.c.b16 %v515, %v511
    %v880 = vpack.c.b16 %v516, %v512
    %v881 = vpack.c.b16 %v517, %v513
    %v882 = vpack.c.b16 %v522, %v518
    %v883 = vpack.c.b16 %v523, %v519
    %v884 = vpack.c.b16 %v524, %v520
    %v885 = vpack.c.b16 %v525, %v521
    %v886 = vpack.c.b16 %v530, %v526
    %v887 = vpack.c.b16 %v531, %v527
    %v888 = vpack.c.b16 %v532, %v528
    %v889 = vpack.c.b16 %v533, %v529
    %v890 = vpack.c.b16 %v538, %v534
    %v891 = vpack.c.b16 %v539, %v535
    %v892 = vpack.c.b16 %v540, %v536
    %v893 = vpack.c.b16 %v541, %v537
    %v894 = vpack.c.b16 %v546, %v542
    %v895 = vpack.c.b16 %v547, %v543
    %v896 = vpack.c.b16 %v548, %v544
    %v897 = vpack.c.b16 %v549, %v545
    %v898 = vpack.c.b16 %v554, %v550
    %v899 = vpack.c.b16 %v555, %v551
    %v900 = vpack.c.b16 %v556, %v552
    %v901 = vpack.c.b16 %v557, %v553
    %v902 = vpack.c.b16 %v562, %v558
    %v903 = vpack.c.b16 %v563, %v559
    %v904 = vpack.c.b16 %v564, %v560
    %v905 = vpack.c.b16 %v565, %v561
    %v906 = vpack.c.b16 %v570, %v566
    %v907 = vpack.c.b16 %v571, %v567
    %v908 = vpack.c.b16 %v572, %v568
    %v909 = vpack.c.b16 %v573, %v569
    %v910 = vpack.c.b16 %v578, %v574
    %v911 = vpack.c.b16 %v579, %v575
    %v912 = vpack.c.b16 %v580, %v576
    %v913 = vpack.c.b16 %v581, %v577
    %v914 = vpack.c.b16 %v586, %v582
    %v915 = vpack.c.b16 %v587, %v583
    %v916 = vpack.c.b16 %v588, %v584
    %v917 = vpack.c.b16 %v589, %v585
    %v918 = vpack.c.b16 %v594, %v590
    %v919 = vpack.c.b16 %v595, %v591
    %v920 = vpack.c.b16 %v596, %v592
    %v921 = vpack.c.b16 %v597, %v593
    %v922 = vpack.c.b16 %v602, %v598
    %v923 = vpack.c.b16 %v603, %v599
    %v924 = vpack.c.b16 %v604, %v600
    %v925 = vpack.c.b16 %v605, %v601
    %v926 = vpack.c.b16 %v610, %v606
    %v927 = vpack.c.b16 %v611, %v607
    %v928 = vpack.c.b16 %v612, %v608
    %v929 = vpack.c.b16 %v613, %v609
    %v930 = vpack.c.b16 %v618, %v614
    %v931 = vpack.c.b16 %v619, %v615
    %v932 = vpack.c.b16 %v620, %v616
    %v933 = vpack.c.b16 %v621, %v617
    %v934 = vpack.c.b16 %v626, %v622
    %v935 = vpack.c.b16 %v627, %v623
    %v936 = vpack.c.b16 %v628, %v624
    %v937 = vpack.c.b16 %v629, %v625
    %v938 = vpack.c.b16 %v634, %v630
    %v939 = vpack.c.b16 %v635, %v631
    %v940 = vpack.c.b16 %v636, %v632
    %v941 = vpack.c.b16 %v637, %v633
    %v942 = vpack.c.b16 %v642, %v638
    %v943 = vpack.c.b16 %v643, %v639
    %v944 = vpack.c.b16 %v644, %v640
    %v945 = vpack.c.b16 %v645, %v641
    %v946 = vpack.c.b16 %v650, %v646
    %v947 = vpack.c.b16 %v651, %v647
    %v948 = vpack.c.b16 %v652, %v648
    %v949 = vpack.c.b16 %v653, %v649
    %v950 = vpack.c.b16 %v658, %v654
    %v951 = vpack.c.b16 %v659, %v655
    %v952 = vpack.c.b16 %v660, %v656
    %v953 = vpack.c.b16 %v661, %v657
    %v954 = vpack.c.b16 %v666, %v662
    %v955 = vpack.c.b16 %v667, %v663
    %v956 = vpack.c.b16 %v668, %v664
    %v957 = vpack.c.b16 %v669, %v665
    %v958 = vpack.c.b16 %v674, %v670
    %v959 = vpack.c.b16 %v675, %v671
    %v960 = vpack.c.b16 %v676, %v672
    %v961 = vpack.c.b16 %v677, %v673
    %v962 = vpack.c.b16 %v682, %v678
    %v963 = vpack.c.b16 %v683, %v679
    %v964 = vpack.c.b16 %v684, %v680
    %v965 = vpack.c.b16 %v685, %v681
    %v966 = vpack.c.b16 %v690, %v686
    %v967 = vpack.c.b16 %v691, %v687
    %v968 = vpack.c.b16 %v692, %v688
    %v969 = vpack.c.b16 %v693, %v689
    %v970 = vpack.c.b16 %v698, %v694
    %v971 = vpack.c.b16 %v699, %v695
    %v972 = vpack.c.b16 %v700, %v696
    %v973 = vpack.c.b16 %v701, %v697
    %v974 = vpack.c.b16 %v706, %v702
    %v975 = vpack.c.b16 %v707, %v703
    %v976 = vpack.c.b16 %v708, %v704
    %v977 = vpack.c.b16 %v709, %v705
    %v978 = vpack.c.b16 %v714, %v710
    %v979 = vpack.c.b16 %v715, %v711
    %v980 = vpack.c.b16 %v716, %v712
    %v981 = vpack.c.b16 %v717, %v713
    %v982 = vpack.c.b16 %v722, %v718
    %v983 = vpack.c.b16 %v723, %v719
    %v984 = vpack.c.b16 %v724, %v720
    %v985 = vpack.c.b16 %v725, %v721
    %v986 = vpack.c.b16 %v730, %v726
    %v987 = vpack.c.b16 %v731, %v727
    %v988 = vpack.c.b16 %v732, %v728
    %v989 = vpack.c.b16 %v733, %v729
    %v990 = vpack.c.b16 %v738, %v734
    %v991 = vpack.c.b16 %v739, %v735
    %v992 = vpack.c.b16 %v740, %v736
    %v993 = vpack.c.b16 %v741, %v737
    %v994 = vpack.c.b16 %v746, %v742
    %v995 = vpack.c.b16 %v747, %v743
    %v996 = vpack.c.b16 %v748, %v744
    %v997 = vpack.c.b16 %v749, %v745
    %v998 = vpack.c.b16 %v754, %v750
    %v999 = vpack.c.b16 %v755, %v751
    %v1000 = vpack.c.b16 %v756, %v752
    %v1001 = vpack.c.b16 %v757, %v753
    %v1002 = vpack.c.b16 %v762, %v758
    %v1003 = vpack.c.b16 %v763, %v759
    %v1004 = vpack.c.b16 %v764, %v760
    %v1005 = vpack.c.b16 %v765, %v761
    %v1006 = vpack.c.b16 %v770, %v766
    %v1007 = vpack.c.b16 %v771, %v767
    %v1008 = vpack.c.b16 %v772, %v768
    %v1009 = vpack.c.b16 %v773, %v769
    %v1010 = vpack.c.b16 %v778, %v774
    %v1011 = vpack.c.b16 %v779, %v775
    %v1012 = vpack.c.b16 %v780, %v776
    %v1013 = vpack.c.b16 %v781, %v777
    %v1014 = vpack.c.b16 %v786, %v782
    %v1015 = vpack.c.b16 %v787, %v783
    %v1016 = vpack.c.b16 %v788, %v784
    %v1017 = vpack.c.b16 %v789, %v785
    %v1018 = vpack.c.b16 %v794, %v790
    %v1019 = vpack.c.b16 %v795, %v791
    %v1020 = vpack.c.b16 %v796, %v792
    %v1021 = vpack.c.b16 %v797, %v793
    %v1022 = vpack.c.b16 %v802, %v798
    %v1023 = vpack.c.b16 %v803, %v799
    %v1024 = vpack.c.b16 %v804, %v800
    %v1025 = vpack.c.b16 %v805, %v801
    %v1026 = vpack.c.b16 %v810, %v806
    %v1027 = vpack.c.b16 %v811, %v807
    %v1028 = vpack.c.b16 %v812, %v808
    %v1029 = vpack.c.b16 %v813, %v809
    %v1030 = vpack.c.b16 %v818, %v814
    %v1031 = vpack.c.b16 %v819, %v815
    %v1032 = vpack.c.b16 %v820, %v816
    %v1033 = vpack.c.b16 %v821, %v817
    %v1034 = vpack.c.b16 %v826, %v822
    %v1035 = vpack.c.b16 %v827, %v823
    %v1036 = vpack.c.b16 %v828, %v824
    %v1037 = vpack.c.b16 %v829, %v825
    %v1038 = vpack.c.b16 %v834, %v830
    %v1039 = vpack.c.b16 %v835, %v831
    %v1040 = vpack.c.b16 %v836, %v832
    %v1041 = vpack.c.b16 %v837, %v833
    %v1042 = vpack.c.b16 %v842, %v838
    %v1043 = vpack.c.b16 %v843, %v839
    %v1044 = vpack.c.b16 %v844, %v840
    %v1045 = vpack.c.b16 %v845, %v841
    %v1046 = vpack.c.b16 %v850, %v846
    %v1047 = vpack.c.b16 %v851, %v847
    %v1048 = vpack.c.b16 %v852, %v848
    %v1049 = vpack.c.b16 %v853, %v849
    %vm1246 = vcmask 130048
    %v1248 = vsel %vm1246, %v47, 0
    %1250 = vmatprep.subr.bf16.mxu0 %v855
    %1251 = vmatpush1.bf16.msra.mxu0 %v854
    %1252 = vmatprep.subr.bf16.mxu0 %v859
    %1253 = vmatpush1.bf16.msra.mxu0 %v858
    %1254 = vmatprep.subr.bf16.mxu0 %v863
    %1255 = vmatpush1.bf16.msra.mxu0 %v862
    %1256 = vmatprep.subr.bf16.mxu0 %v867
    %1257 = vmatpush1.bf16.msra.mxu0 %v866
    %1258 = vmatprep.subr.bf16.mxu0 %v871
    %1259 = vmatpush1.bf16.msra.mxu0 %v870
    %1260 = vmatprep.subr.bf16.mxu0 %v875
    %1261 = vmatpush1.bf16.msra.mxu0 %v874
    %1262 = vmatprep.subr.bf16.mxu0 %v879
    %1263 = vmatpush1.bf16.msra.mxu0 %v878
    %1264 = vmatprep.subr.bf16.mxu0 %v883
    %1265 = vmatpush1.bf16.msra.mxu0 %v882
    %1266 = vmatprep.subr.bf16.mxu0 %v887
    %1267 = vmatpush1.bf16.msra.mxu0 %v886
    %1268 = vmatprep.subr.bf16.mxu0 %v891
    %1269 = vmatpush1.bf16.msra.mxu0 %v890
    %1270 = vmatprep.subr.bf16.mxu0 %v895
    %1271 = vmatpush1.bf16.msra.mxu0 %v894
    %1272 = vmatprep.subr.bf16.mxu0 %v899
    %1273 = vmatpush1.bf16.msra.mxu0 %v898
    %1274 = vmatprep.subr.bf16.mxu0 %v903
    %1275 = vmatpush1.bf16.msra.mxu0 %v902
    %1276 = vmatprep.subr.bf16.mxu0 %v907
    %1277 = vmatpush1.bf16.msra.mxu0 %v906
    %1278 = vmatprep.subr.bf16.mxu0 %v911
    %1279 = vmatpush1.bf16.msra.mxu0 %v910
    %1280 = vmatprep.subr.bf16.mxu0 %v915
    %1281 = vmatpush1.bf16.msra.mxu0 %v914
    %1282 = vmatprep.mubr.bf16.mxu0 %v42
    %1283 = vmatmul.mubr.bf16.gmra.mrb[0].mxu0 %v41
    %v1284 = vpop.f32.mrb[0].mxu0
    %v1285 = vadd.f32 %v249, %v1284
    %v1286 = vpop.f32.mrb[0].mxu0
    %v1287 = vadd.f32 %v253, %v1286
    %v1288 = vpop.f32.mrb[0].mxu0
    %v1289 = vpop.f32.mrb[0].mxu0
    %1290 = vdwg.mxu0
    %1291 = vmatprep.subr.bf16.mxu0 %v919
    %1292 = vmatpush1.bf16.msra.mxu0 %v918
    %1293 = vmatprep.subr.bf16.mxu0 %v923
    %1294 = vmatpush1.bf16.msra.mxu0 %v922
    %1295 = vmatprep.subr.bf16.mxu0 %v927
    %1296 = vmatpush1.bf16.msra.mxu0 %v926
    %1297 = vmatprep.subr.bf16.mxu0 %v931
    %1298 = vmatpush1.bf16.msra.mxu0 %v930
    %1299 = vmatprep.subr.bf16.mxu0 %v935
    %1300 = vmatpush1.bf16.msra.mxu0 %v934
    %1301 = vmatprep.subr.bf16.mxu0 %v939
    %1302 = vmatpush1.bf16.msra.mxu0 %v938
    %1303 = vmatprep.subr.bf16.mxu0 %v943
    %1304 = vmatpush1.bf16.msra.mxu0 %v942
    %1305 = vmatprep.subr.bf16.mxu0 %v947
    %1306 = vmatpush1.bf16.msra.mxu0 %v946
    %1307 = vmatprep.subr.bf16.mxu0 %v951
    %1308 = vmatpush1.bf16.msra.mxu0 %v950
    %1309 = vmatprep.subr.bf16.mxu0 %v955
    %1310 = vmatpush1.bf16.msra.mxu0 %v954
    %1311 = vmatprep.subr.bf16.mxu0 %v959
    %1312 = vmatpush1.bf16.msra.mxu0 %v958
    %1313 = vmatprep.subr.bf16.mxu0 %v963
    %1314 = vmatpush1.bf16.msra.mxu0 %v962
    %1315 = vmatprep.subr.bf16.mxu0 %v967
    %1316 = vmatpush1.bf16.msra.mxu0 %v966
    %1317 = vmatprep.subr.bf16.mxu0 %v971
    %1318 = vmatpush1.bf16.msra.mxu0 %v970
    %1319 = vmatprep.subr.bf16.mxu0 %v975
    %1320 = vmatpush1.bf16.msra.mxu0 %v974
    %1321 = vmatprep.subr.bf16.mxu0 %v979
    %1322 = vmatpush1.bf16.msra.mxu0 %v978
    %1323 = vmatprep.mubr.bf16.mxu0 %v44
    %1324 = vmatmul.mubr.bf16.gmra.mrb[0].mxu0 %v43
    %v1325 = vpop.f32.mrb[0].mxu0
    %v1326 = vadd.f32 %v1285, %v1325
    %v1327 = vpop.f32.mrb[0].mxu0
    %v1328 = vadd.f32 %v1287, %v1327
    %v1329 = vpop.f32.mrb[0].mxu0
    %v1330 = vpop.f32.mrb[0].mxu0
    %1331 = vdwg.mxu0
    %1332 = vmatprep.subr.bf16.mxu0 %v983
    %1333 = vmatpush1.bf16.msra.mxu0 %v982
    %1334 = vmatprep.subr.bf16.mxu0 %v987
    %1335 = vmatpush1.bf16.msra.mxu0 %v986
    %1336 = vmatprep.subr.bf16.mxu0 %v991
    %1337 = vmatpush1.bf16.msra.mxu0 %v990
    %1338 = vmatprep.subr.bf16.mxu0 %v995
    %1339 = vmatpush1.bf16.msra.mxu0 %v994
    %1340 = vmatprep.subr.bf16.mxu0 %v999
    %1341 = vmatpush1.bf16.msra.mxu0 %v998
    %1342 = vmatprep.subr.bf16.mxu0 %v1003
    %1343 = vmatpush1.bf16.msra.mxu0 %v1002
    %1344 = vmatprep.subr.bf16.mxu0 %v1007
    %1345 = vmatpush1.bf16.msra.mxu0 %v1006
    %1346 = vmatprep.subr.bf16.mxu0 %v1011
    %1347 = vmatpush1.bf16.msra.mxu0 %v1010
    %1348 = vmatprep.subr.bf16.mxu0 %v1015
    %1349 = vmatpush1.bf16.msra.mxu0 %v1014
    %1350 = vmatprep.subr.bf16.mxu0 %v1019
    %1351 = vmatpush1.bf16.msra.mxu0 %v1018
    %1352 = vmatprep.subr.bf16.mxu0 %v1023
    %1353 = vmatpush1.bf16.msra.mxu0 %v1022
    %1354 = vmatprep.subr.bf16.mxu0 %v1027
    %1355 = vmatpush1.bf16.msra.mxu0 %v1026
    %1356 = vmatprep.subr.bf16.mxu0 %v1031
    %1357 = vmatpush1.bf16.msra.mxu0 %v1030
    %1358 = vmatprep.subr.bf16.mxu0 %v1035
    %1359 = vmatpush1.bf16.msra.mxu0 %v1034
    %1360 = vmatprep.subr.bf16.mxu0 %v1039
    %1361 = vmatpush1.bf16.msra.mxu0 %v1038
    %1362 = vmatprep.subr.bf16.mxu0 %v1043
    %1363 = vmatpush1.bf16.msra.mxu0 %v1042
    %1364 = vmatprep.mubr.bf16.mxu0 %v46
    %1365 = vmatmul.mubr.bf16.gmra.mrb[0].mxu0 %v45
    %v1366 = vpop.f32.mrb[0].mxu0
    %v1367 = vadd.f32 %v1326, %v1366
    %v1368 = vpop.f32.mrb[0].mxu0
    %v1369 = vadd.f32 %v1328, %v1368
    %v1370 = vpop.f32.mrb[0].mxu0
    %v1371 = vpop.f32.mrb[0].mxu0
    %1372 = vdwg.mxu0
    %1373 = vmatprep.subr.bf16.mxu0 %v1047
    %1374 = vmatpush1.bf16.msra.mxu0 %v1046
    %1375 = vmatprep.subr.bf16.mxu0 0
    %1376 = vmatpush1.bf16.msra.mxu0 0
    %1377 = vmatprep.subr.bf16.mxu0 0
    %1378 = vmatpush1.bf16.msra.mxu0 0
    %1379 = vmatprep.subr.bf16.mxu0 0
    %1380 = vmatpush1.bf16.msra.mxu0 0
    %1381 = vmatprep.subr.bf16.mxu0 0
    %1382 = vmatpush1.bf16.msra.mxu0 0
    %1383 = vmatprep.subr.bf16.mxu0 0
    %1384 = vmatpush1.bf16.msra.mxu0 0
    %1385 = vmatprep.subr.bf16.mxu0 0
    %1386 = vmatpush1.bf16.msra.mxu0 0
    %1387 = vmatprep.subr.bf16.mxu0 0
    %1388 = vmatpush1.bf16.msra.mxu0 0
    %1389 = vmatprep.subr.bf16.mxu0 0
    %1390 = vmatpush1.bf16.msra.mxu0 0
    %1391 = vmatprep.subr.bf16.mxu0 0
    %1392 = vmatpush1.bf16.msra.mxu0 0
    %1393 = vmatprep.subr.bf16.mxu0 0
    %1394 = vmatpush1.bf16.msra.mxu0 0
    %1395 = vmatprep.subr.bf16.mxu0 0
    %1396 = vmatpush1.bf16.msra.mxu0 0
    %1397 = vmatprep.subr.bf16.mxu0 0
    %1398 = vmatpush1.bf16.msra.mxu0 0
    %1399 = vmatprep.subr.bf16.mxu0 0
    %1400 = vmatpush1.bf16.msra.mxu0 0
    %1401 = vmatprep.subr.bf16.mxu0 0
    %1402 = vmatpush1.bf16.msra.mxu0 0
    %1403 = vmatprep.subr.bf16.mxu0 0
    %1404 = vmatpush1.bf16.msra.mxu0 0
    %1405 = vmatprep.mubr.bf16.mxu0 0
    %1406 = vmatmul.mubr.bf16.gmra.mrb[0].mxu0 %v1248
    %v1407 = vpop.f32.mrb[0].mxu0
    %v1408 = vadd.f32 %v1367, %v1407
    %v1409 = vpop.f32.mrb[0].mxu0
    %v1410 = vadd.f32 %v1369, %v1409
    %v1411 = vpop.f32.mrb[0].mxu0
    %v1412 = vpop.f32.mrb[0].mxu0
    %1413 = vdwg.mxu0
    %1414 = vmatprep.subr.bf16.mxu0 %v857
    %1415 = vmatpush1.bf16.msra.mxu0 %v856
    %1416 = vmatprep.subr.bf16.mxu0 %v861
    %1417 = vmatpush1.bf16.msra.mxu0 %v860
    %1418 = vmatprep.subr.bf16.mxu0 %v865
    %1419 = vmatpush1.bf16.msra.mxu0 %v864
    %1420 = vmatprep.subr.bf16.mxu0 %v869
    %1421 = vmatpush1.bf16.msra.mxu0 %v868
    %1422 = vmatprep.subr.bf16.mxu0 %v873
    %1423 = vmatpush1.bf16.msra.mxu0 %v872
    %1424 = vmatprep.subr.bf16.mxu0 %v877
    %1425 = vmatpush1.bf16.msra.mxu0 %v876
    %1426 = vmatprep.subr.bf16.mxu0 %v881
    %1427 = vmatpush1.bf16.msra.mxu0 %v880
    %1428 = vmatprep.subr.bf16.mxu0 %v885
    %1429 = vmatpush1.bf16.msra.mxu0 %v884
    %1430 = vmatprep.subr.bf16.mxu0 %v889
    %1431 = vmatpush1.bf16.msra.mxu0 %v888
    %1432 = vmatprep.subr.bf16.mxu0 %v893
    %1433 = vmatpush1.bf16.msra.mxu0 %v892
    %1434 = vmatprep.subr.bf16.mxu0 %v897
    %1435 = vmatpush1.bf16.msra.mxu0 %v896
    %1436 = vmatprep.subr.bf16.mxu0 %v901
    %1437 = vmatpush1.bf16.msra.mxu0 %v900
    %1438 = vmatprep.subr.bf16.mxu0 %v905
    %1439 = vmatpush1.bf16.msra.mxu0 %v904
    %1440 = vmatprep.subr.bf16.mxu0 %v909
    %1441 = vmatpush1.bf16.msra.mxu0 %v908
    %1442 = vmatprep.subr.bf16.mxu0 %v913
    %1443 = vmatpush1.bf16.msra.mxu0 %v912
    %1444 = vmatprep.subr.bf16.mxu0 %v917
    %1445 = vmatpush1.bf16.msra.mxu0 %v916
    %1446 = vmatprep.mubr.bf16.mxu0 %v42
    %1447 = vmatmul.mubr.bf16.gmra.mrb[0].mxu0 %v41
    %v1448 = vpop.f32.mrb[0].mxu0
    %v1449 = vadd.f32 %v257, %v1448
    %v1450 = vpop.f32.mrb[0].mxu0
    %v1451 = vadd.f32 %v261, %v1450
    %v1452 = vpop.f32.mrb[0].mxu0
    %v1453 = vpop.f32.mrb[0].mxu0
    %1454 = vdwg.mxu0
    %1455 = vmatprep.subr.bf16.mxu0 %v921
    %1456 = vmatpush1.bf16.msra.mxu0 %v920
    %1457 = vmatprep.subr.bf16.mxu0 %v925
    %1458 = vmatpush1.bf16.msra.mxu0 %v924
    %1459 = vmatprep.subr.bf16.mxu0 %v929
    %1460 = vmatpush1.bf16.msra.mxu0 %v928
    %1461 = vmatprep.subr.bf16.mxu0 %v933
    %1462 = vmatpush1.bf16.msra.mxu0 %v932
    %1463 = vmatprep.subr.bf16.mxu0 %v937
    %1464 = vmatpush1.bf16.msra.mxu0 %v936
    %1465 = vmatprep.subr.bf16.mxu0 %v941
    %1466 = vmatpush1.bf16.msra.mxu0 %v940
    %1467 = vmatprep.subr.bf16.mxu0 %v945
    %1468 = vmatpush1.bf16.msra.mxu0 %v944
    %1469 = vmatprep.subr.bf16.mxu0 %v949
    %1470 = vmatpush1.bf16.msra.mxu0 %v948
    %1471 = vmatprep.subr.bf16.mxu0 %v953
    %1472 = vmatpush1.bf16.msra.mxu0 %v952
    %1473 = vmatprep.subr.bf16.mxu0 %v957
    %1474 = vmatpush1.bf16.msra.mxu0 %v956
    %1475 = vmatprep.subr.bf16.mxu0 %v961
    %1476 = vmatpush1.bf16.msra.mxu0 %v960
    %1477 = vmatprep.subr.bf16.mxu0 %v965
    %1478 = vmatpush1.bf16.msra.mxu0 %v964
    %1479 = vmatprep.subr.bf16.mxu0 %v969
    %1480 = vmatpush1.bf16.msra.mxu0 %v968
    %1481 = vmatprep.subr.bf16.mxu0 %v973
    %1482 = vmatpush1.bf16.msra.mxu0 %v972
    %1483 = vmatprep.subr.bf16.mxu0 %v977
    %1484 = vmatpush1.bf16.msra.mxu0 %v976
    %1485 = vmatprep.subr.bf16.mxu0 %v981
    %1486 = vmatpush1.bf16.msra.mxu0 %v980
    %1487 = vmatprep.mubr.bf16.mxu0 %v44
    %1488 = vmatmul.mubr.bf16.gmra.mrb[0].mxu0 %v43
    %v1489 = vpop.f32.mrb[0].mxu0
    %v1490 = vadd.f32 %v1449, %v1489
    %v1491 = vpop.f32.mrb[0].mxu0
    %v1492 = vadd.f32 %v1451, %v1491
    %v1493 = vpop.f32.mrb[0].mxu0
    %v1494 = vpop.f32.mrb[0].mxu0
    %1495 = vdwg.mxu0
    %1496 = vmatprep.subr.bf16.mxu0 %v985
    %1497 = vmatpush1.bf16.msra.mxu0 %v984
    %1498 = vmatprep.subr.bf16.mxu0 %v989
    %1499 = vmatpush1.bf16.msra.mxu0 %v988
    %1500 = vmatprep.subr.bf16.mxu0 %v993
    %1501 = vmatpush1.bf16.msra.mxu0 %v992
    %1502 = vmatprep.subr.bf16.mxu0 %v997
    %1503 = vmatpush1.bf16.msra.mxu0 %v996
    %1504 = vmatprep.subr.bf16.mxu0 %v1001
    %1505 = vmatpush1.bf16.msra.mxu0 %v1000
    %1506 = vmatprep.subr.bf16.mxu0 %v1005
    %1507 = vmatpush1.bf16.msra.mxu0 %v1004
    %1508 = vmatprep.subr.bf16.mxu0 %v1009
    %1509 = vmatpush1.bf16.msra.mxu0 %v1008
    %1510 = vmatprep.subr.bf16.mxu0 %v1013
    %1511 = vmatpush1.bf16.msra.mxu0 %v1012
    %1512 = vmatprep.subr.bf16.mxu0 %v1017
    %1513 = vmatpush1.bf16.msra.mxu0 %v1016
    %1514 = vmatprep.subr.bf16.mxu0 %v1021
    %1515 = vmatpush1.bf16.msra.mxu0 %v1020
    %1516 = vmatprep.subr.bf16.mxu0 %v1025
    %1517 = vmatpush1.bf16.msra.mxu0 %v1024
    %1518 = vmatprep.subr.bf16.mxu0 %v1029
    %1519 = vmatpush1.bf16.msra.mxu0 %v1028
    %1520 = vmatprep.subr.bf16.mxu0 %v1033
    %1521 = vmatpush1.bf16.msra.mxu0 %v1032
    %1522 = vmatprep.subr.bf16.mxu0 %v1037
    %1523 = vmatpush1.bf16.msra.mxu0 %v1036
    %1524 = vmatprep.subr.bf16.mxu0 %v1041
    %1525 = vmatpush1.bf16.msra.mxu0 %v1040
    %1526 = vmatprep.subr.bf16.mxu0 %v1045
    %1527 = vmatpush1.bf16.msra.mxu0 %v1044
    %1528 = vmatprep.mubr.bf16.mxu0 %v46
    %1529 = vmatmul.mubr.bf16.gmra.mrb[0].mxu0 %v45
    %v1530 = vpop.f32.mrb[0].mxu0
    %v1531 = vadd.f32 %v1490, %v1530
    %v1532 = vpop.f32.mrb[0].mxu0
    %v1533 = vadd.f32 %v1492, %v1532
    %v1534 = vpop.f32.mrb[0].mxu0
    %v1535 = vpop.f32.mrb[0].mxu0
    %1536 = vdwg.mxu0
    %1537 = vmatprep.subr.bf16.mxu0 %v1049
    %1538 = vmatpush1.bf16.msra.mxu0 %v1048
    %1539 = vmatprep.subr.bf16.mxu0 0
    %1540 = vmatpush1.bf16.msra.mxu0 0
    %1541 = vmatprep.subr.bf16.mxu0 0
    %1542 = vmatpush1.bf16.msra.mxu0 0
    %1543 = vmatprep.subr.bf16.mxu0 0
    %1544 = vmatpush1.bf16.msra.mxu0 0
    %1545 = vmatprep.subr.bf16.mxu0 0
    %1546 = vmatpush1.bf16.msra.mxu0 0
    %1547 = vmatprep.subr.bf16.mxu0 0
    %1548 = vmatpush1.bf16.msra.mxu0 0
    %1549 = vmatprep.subr.bf16.mxu0 0
    %1550 = vmatpush1.bf16.msra.mxu0 0
    %1551 = vmatprep.subr.bf16.mxu0 0
    %1552 = vmatpush1.bf16.msra.mxu0 0
    %1553 = vmatprep.subr.bf16.mxu0 0
    %1554 = vmatpush1.bf16.msra.mxu0 0
    %1555 = vmatprep.subr.bf16.mxu0 0
    %1556 = vmatpush1.bf16.msra.mxu0 0
    %1557 = vmatprep.subr.bf16.mxu0 0
    %1558 = vmatpush1.bf16.msra.mxu0 0
    %1559 = vmatprep.subr.bf16.mxu0 0
    %1560 = vmatpush1.bf16.msra.mxu0 0
    %1561 = vmatprep.subr.bf16.mxu0 0
    %1562 = vmatpush1.bf16.msra.mxu0 0
    %1563 = vmatprep.subr.bf16.mxu0 0
    %1564 = vmatpush1.bf16.msra.mxu0 0
    %1565 = vmatprep.subr.bf16.mxu0 0
    %1566 = vmatpush1.bf16.msra.mxu0 0
    %1567 = vmatprep.subr.bf16.mxu0 0
    %1568 = vmatpush1.bf16.msra.mxu0 0
    %1569 = vmatprep.mubr.bf16.mxu0 0
    %1570 = vmatmul.mubr.bf16.gmra.mrb[0].mxu0 %v1248
    %v1571 = vpop.f32.mrb[0].mxu0
    %v1572 = vadd.f32 %v1531, %v1571
    %v1573 = vpop.f32.mrb[0].mxu0
    %v1574 = vadd.f32 %v1533, %v1573
    %v1575 = vpop.f32.mrb[0].mxu0
    %v1576 = vpop.f32.mrb[0].mxu0
    %1577 = vdwg.mxu0
    %v1578 = vmax.f32 %v1408, 0.0
    %v1579 = vmax.f32 %v1410, 0.0
    %v1580 = vmax.f32 %v1572, 0.0
    %v1581 = vmax.f32 %v1574, 0.0
    %v1582 = vld [vmem:[%s3] ss:$2 sm:$0xf]
    %v1584 = vlaneseq
    %v1585 = vshrl.u32 %v1584, 7
    %v1586 = vsub.s32 0, %v1585
    %v1587 = vrot.slane %v1582, %v1586
    %v1588 = vlaneseq
    %v1589 = vshrl.u32 %v1588, 7
    %v1590 = vsub.s32 1, %v1589
    %v1591 = vrot.slane %v1582, %v1590
    %v1592 = vlaneseq
    %v1593 = vshrl.u32 %v1592, 7
    %v1594 = vsub.s32 2, %v1593
    %v1595 = vrot.slane %v1582, %v1594
    %v1596 = vlaneseq
    %v1597 = vshrl.u32 %v1596, 7
    %v1598 = vsub.s32 3, %v1597
    %v1599 = vrot.slane %v1582, %v1598
    %v1604 = vmul.f32 %v1578, %v1587
    %v1605 = vmul.f32 %v1579, %v1591
    %v1606 = vmul.f32 %v1580, %v1595
    %v1607 = vmul.f32 %v1581, %v1599
    %v1608 = vadd.f32 %v1604, %v1605
    %v1609 = vadd.f32 %v1608, %v1606
    %v1610 = vadd.f32 %v1609, %v1607
    %1611 = vadd.xlane.f32.xlu0 %v1610
    %v1612 = vpop.xlane.xlu0 %1611
    %v1613 = vld [vmem:[%s4] sm:$0x1]
    %v1615 = vlaneseq
    %v1616 = vshrl.u32 %v1615, 7
    %v1617 = vsub.s32 0, %v1616
    %v1618 = vrot.slane %v1613, %v1617
    %v1620 = vadd.f32 %v1612, %v1618
    %s1621 = scalar_lea.vmem %s3, 1
    %v1622 = vld [vmem:[%s1621] ss:$2 sm:$0xf]
    %v1624 = vlaneseq
    %v1625 = vshrl.u32 %v1624, 7
    %v1626 = vsub.s32 0, %v1625
    %v1627 = vrot.slane %v1622, %v1626
    %v1628 = vlaneseq
    %v1629 = vshrl.u32 %v1628, 7
    %v1630 = vsub.s32 1, %v1629
    %v1631 = vrot.slane %v1622, %v1630
    %v1632 = vlaneseq
    %v1633 = vshrl.u32 %v1632, 7
    %v1634 = vsub.s32 2, %v1633
    %v1635 = vrot.slane %v1622, %v1634
    %v1636 = vlaneseq
    %v1637 = vshrl.u32 %v1636, 7
    %v1638 = vsub.s32 3, %v1637
    %v1639 = vrot.slane %v1622, %v1638
    %v1644 = vmul.f32 %v1578, %v1627
    %v1645 = vmul.f32 %v1579, %v1631
    %v1646 = vmul.f32 %v1580, %v1635
    %v1647 = vmul.f32 %v1581, %v1639
    %v1648 = vadd.f32 %v1644, %v1645
    %v1649 = vadd.f32 %v1648, %v1646
    %v1650 = vadd.f32 %v1649, %v1647
    %1651 = vadd.xlane.f32.xlu0 %v1650
    %v1652 = vpop.xlane.xlu0 %1651
    %v1653 = vadd.f32 %v1652, %v1618
    %v1654 = vld [vmem:[%s5] ss:$2 sm:$0xf]
    %1656 = vset.pattern.permute.xlu0 0
    %1657 = vperm.xlu0 %1656, %v1620
    %v1658 = vpop.permute.xlu0 %1657
    %v1661 = vlaneseq
    %v1662 = vshrl.u32 %v1661, 7
    %v1663 = vsub.s32 0, %v1662
    %v1664 = vrot.slane %v1654, %v1663
    %v1665 = vlaneseq
    %v1666 = vshrl.u32 %v1665, 7
    %v1667 = vsub.s32 1, %v1666
    %v1668 = vrot.slane %v1654, %v1667
    %v1669 = vlaneseq
    %v1670 = vshrl.u32 %v1669, 7
    %v1671 = vsub.s32 2, %v1670
    %v1672 = vrot.slane %v1654, %v1671
    %v1673 = vlaneseq
    %v1674 = vshrl.u32 %v1673, 7
    %v1675 = vsub.s32 3, %v1674
    %v1676 = vrot.slane %v1654, %v1675
    %v1681 = vmul.f32 %v1658, %v1664
    %v1682 = vmul.f32 %v1658, %v1668
    %v1683 = vmul.f32 %v1658, %v1672
    %v1684 = vmul.f32 %v1658, %v1676
    %s1685 = scalar_lea.vmem %s5, 1
    %v1686 = vld [vmem:[%s1685] ss:$2 sm:$0xf]
    %1688 = vset.pattern.permute.xlu0 1
    %1689 = vperm.xlu0 %1688, %v1653
    %v1690 = vpop.permute.xlu0 %1689
    %v1693 = vlaneseq
    %v1694 = vshrl.u32 %v1693, 7
    %v1695 = vsub.s32 0, %v1694
    %v1696 = vrot.slane %v1686, %v1695
    %v1697 = vlaneseq
    %v1698 = vshrl.u32 %v1697, 7
    %v1699 = vsub.s32 1, %v1698
    %v1700 = vrot.slane %v1686, %v1699
    %v1701 = vlaneseq
    %v1702 = vshrl.u32 %v1701, 7
    %v1703 = vsub.s32 2, %v1702
    %v1704 = vrot.slane %v1686, %v1703
    %v1705 = vlaneseq
    %v1706 = vshrl.u32 %v1705, 7
    %v1707 = vsub.s32 3, %v1706
    %v1708 = vrot.slane %v1686, %v1707
    %v1713 = vmul.f32 %v1690, %v1696
    %v1714 = vmul.f32 %v1690, %v1700
    %v1715 = vmul.f32 %v1690, %v1704
    %v1716 = vmul.f32 %v1690, %v1708
    %v1717 = vadd.f32 %v1681, %v1713
    %v1718 = vadd.f32 %v1682, %v1714
    %v1719 = vadd.f32 %v1683, %v1715
    %v1720 = vadd.f32 %v1684, %v1716
    %v1721 = vld [vmem:[%s6] sm:$0xf]
    %v1723 = vlaneseq
    %v1724 = vshrl.u32 %v1723, 7
    %v1725 = vsub.s32 0, %v1724
    %v1726 = vrot.slane %v1721, %v1725
    %v1727 = vlaneseq
    %v1728 = vshrl.u32 %v1727, 7
    %v1729 = vsub.s32 1, %v1728
    %v1730 = vrot.slane %v1721, %v1729
    %v1731 = vlaneseq
    %v1732 = vshrl.u32 %v1731, 7
    %v1733 = vsub.s32 2, %v1732
    %v1734 = vrot.slane %v1721, %v1733
    %v1735 = vlaneseq
    %v1736 = vshrl.u32 %v1735, 7
    %v1737 = vsub.s32 3, %v1736
    %v1738 = vrot.slane %v1721, %v1737
    %v1743 = vadd.f32 %v1717, %v1726
    %v1744 = vadd.f32 %v1718, %v1730
    %v1745 = vadd.f32 %v1719, %v1734
    %v1746 = vadd.f32 %v1720, %v1738
    %v1747 = vmax.f32 %v1743, 0.0
    %v1748 = vmax.f32 %v1744, 0.0
    %v1749 = vmax.f32 %v1745, 0.0
    %v1750 = vmax.f32 %v1746, 0.0
    %v1751 = vpack.c.bf16 %v1747, %v1747
    %v1752 = vpack.c.bf16 %v1748, %v1748
    %v1753 = vpack.c.bf16 %v1749, %v1749
    %v1754 = vpack.c.bf16 %v1750, %v1750
    %v1755 = vld [vmem:[%s7] sm:$0xff]
    %v1756 = vld [vmem:[%s7 + $0x8] sm:$0xff]
    %v1757 = vld [vmem:[%s7 + $0x10] sm:$0xff]
    %v1758 = vld [vmem:[%s7 + $0x18] sm:$0xf]
    %v1759 = vld [vmem:[%s7 + $0x1c] sm:$0xff]
    %v1760 = vld [vmem:[%s7 + $0x24] sm:$0xff]
    %v1761 = vld [vmem:[%s7 + $0x2c] sm:$0xff]
    %v1762 = vld [vmem:[%s7 + $0x34] sm:$0xf]
    %v1763 = vld [vmem:[%s7 + $0x38] sm:$0xff]
    %v1764 = vld [vmem:[%s7 + $0x40] sm:$0xff]
    %v1765 = vld [vmem:[%s7 + $0x48] sm:$0xff]
    %v1766 = vld [vmem:[%s7 + $0x50] sm:$0xf]
    %v1767 = vld [vmem:[%s7 + $0x54] sm:$0xff]
    %v1768 = vld [vmem:[%s7 + $0x5c] sm:$0xff]
    %v1769 = vld [vmem:[%s7 + $0x64] sm:$0xff]
    %v1770 = vld [vmem:[%s7 + $0x6c] sm:$0xf]
    %v1771 = vld [vmem:[%s7 + $0x70] sm:$0xff]
    %v1772 = vld [vmem:[%s7 + $0x78] sm:$0xff]
    %v1773 = vld [vmem:[%s7 + $0x80] sm:$0xff]
    %v1774 = vld [vmem:[%s7 + $0x88] sm:$0xf]
    %v1775 = vld [vmem:[%s7 + $0x8c] sm:$0xff]
    %v1776 = vld [vmem:[%s7 + $0x94] sm:$0xff]
    %v1777 = vld [vmem:[%s7 + $0x9c] sm:$0xff]
    %v1778 = vld [vmem:[%s7 + $0xa4] sm:$0xf]
    %v1779 = vld [vmem:[%s7 + $0xa8] sm:$0xff]
    %v1780 = vld [vmem:[%s7 + $0xb0] sm:$0xff]
    %v1781 = vld [vmem:[%s7 + $0xb8] sm:$0xff]
    %v1782 = vld [vmem:[%s7 + $0xc0] sm:$0xf]
    %v1783 = vld [vmem:[%s7 + $0xc4] sm:$0xff]
    %v1784 = vld [vmem:[%s7 + $0xcc] sm:$0xff]
    %v1785 = vld [vmem:[%s7 + $0xd4] sm:$0xff]
    %v1786 = vld [vmem:[%s7 + $0xdc] sm:$0xf]
    %v1787 = vld [vmem:[%s7 + $0xe0] sm:$0xff]
    %v1788 = vld [vmem:[%s7 + $0xe8] sm:$0xff]
    %v1789 = vld [vmem:[%s7 + $0xf0] sm:$0xff]
    %v1790 = vld [vmem:[%s7 + $0xf8] sm:$0xf]
    %v1791 = vld [vmem:[%s7 + $0xfc] sm:$0xff]
    %v1792 = vld [vmem:[%s7 + $0x104] sm:$0xff]
    %v1793 = vld [vmem:[%s7 + $0x10c] sm:$0xff]
    %v1794 = vld [vmem:[%s7 + $0x114] sm:$0xf]
    %v1795 = vld [vmem:[%s7 + $0x118] sm:$0xff]
    %v1796 = vld [vmem:[%s7 + $0x120] sm:$0xff]
    %v1797 = vld [vmem:[%s7 + $0x128] sm:$0xff]
    %v1798 = vld [vmem:[%s7 + $0x130] sm:$0xf]
    %v1799 = vld [vmem:[%s7 + $0x134] sm:$0xff]
    %v1800 = vld [vmem:[%s7 + $0x13c] sm:$0xff]
    %v1801 = vld [vmem:[%s7 + $0x144] sm:$0xff]
    %v1802 = vld [vmem:[%s7 + $0x14c] sm:$0xf]
    %v1803 = vld [vmem:[%s7 + $0x150] sm:$0xff]
    %v1804 = vld [vmem:[%s7 + $0x158] sm:$0xff]
    %v1805 = vld [vmem:[%s7 + $0x160] sm:$0xff]
    %v1806 = vld [vmem:[%s7 + $0x168] sm:$0xf]
    %v1807 = vld [vmem:[%s7 + $0x16c] sm:$0xff]
    %v1808 = vld [vmem:[%s7 + $0x174] sm:$0xff]
    %v1809 = vld [vmem:[%s7 + $0x17c] sm:$0xff]
    %v1810 = vld [vmem:[%s7 + $0x184] sm:$0xf]
    %v1811 = vld [vmem:[%s7 + $0x188] sm:$0xff]
    %v1812 = vld [vmem:[%s7 + $0x190] sm:$0xff]
    %v1813 = vld [vmem:[%s7 + $0x198] sm:$0xff]
    %v1814 = vld [vmem:[%s7 + $0x1a0] sm:$0xf]
    %v1815 = vld [vmem:[%s7 + $0x1a4] sm:$0xff]
    %v1816 = vld [vmem:[%s7 + $0x1ac] sm:$0xff]
    %v1817 = vld [vmem:[%s7 + $0x1b4] sm:$0xff]
    %v1818 = vld [vmem:[%s7 + $0x1bc] sm:$0xf]
    %v1819 = vld [vmem:[%s7 + $0x1c0] sm:$0xff]
    %v1820 = vld [vmem:[%s7 + $0x1c8] sm:$0xff]
    %v1821 = vld [vmem:[%s7 + $0x1d0] sm:$0xff]
    %v1822 = vld [vmem:[%s7 + $0x1d8] sm:$0xf]
    %v1823 = vld [vmem:[%s7 + $0x1dc] sm:$0xff]
    %v1824 = vld [vmem:[%s7 + $0x1e4] sm:$0xff]
    %v1825 = vld [vmem:[%s7 + $0x1ec] sm:$0xff]
    %v1826 = vld [vmem:[%s7 + $0x1f4] sm:$0xf]
    %v1827 = vld [vmem:[%s7 + $0x1f8] sm:$0xff]
    %v1828 = vld [vmem:[%s7 + $0x200] sm:$0xff]
    %v1829 = vld [vmem:[%s7 + $0x208] sm:$0xff]
    %v1830 = vld [vmem:[%s7 + $0x210] sm:$0xf]
    %v1831 = vld [vmem:[%s7 + $0x214] sm:$0xff]
    %v1832 = vld [vmem:[%s7 + $0x21c] sm:$0xff]
    %v1833 = vld [vmem:[%s7 + $0x224] sm:$0xff]
    %v1834 = vld [vmem:[%s7 + $0x22c] sm:$0xf]
    %v1835 = vld [vmem:[%s7 + $0x230] sm:$0xff]
    %v1836 = vld [vmem:[%s7 + $0x238] sm:$0xff]
    %v1837 = vld [vmem:[%s7 + $0x240] sm:$0xff]
    %v1838 = vld [vmem:[%s7 + $0x248] sm:$0xf]
    %v1839 = vld [vmem:[%s7 + $0x24c] sm:$0xff]
    %v1840 = vld [vmem:[%s7 + $0x254] sm:$0xff]
    %v1841 = vld [vmem:[%s7 + $0x25c] sm:$0xff]
    %v1842 = vld [vmem:[%s7 + $0x264] sm:$0xf]
    %v1843 = vld [vmem:[%s7 + $0x268] sm:$0xff]
    %v1844 = vld [vmem:[%s7 + $0x270] sm:$0xff]
    %v1845 = vld [vmem:[%s7 + $0x278] sm:$0xff]
    %v1846 = vld [vmem:[%s7 + $0x280] sm:$0xf]
    %v1847 = vld [vmem:[%s7 + $0x284] sm:$0xff]
    %v1848 = vld [vmem:[%s7 + $0x28c] sm:$0xff]
    %v1849 = vld [vmem:[%s7 + $0x294] sm:$0xff]
    %v1850 = vld [vmem:[%s7 + $0x29c] sm:$0xf]
    %v1851 = vld [vmem:[%s7 + $0x2a0] sm:$0xff]
    %v1852 = vld [vmem:[%s7 + $0x2a8] sm:$0xff]
    %v1853 = vld [vmem:[%s7 + $0x2b0] sm:$0xff]
    %v1854 = vld [vmem:[%s7 + $0x2b8] sm:$0xf]
    %v1855 = vld [vmem:[%s7 + $0x2bc] sm:$0xff]
    %v1856 = vld [vmem:[%s7 + $0x2c4] sm:$0xff]
    %v1857 = vld [vmem:[%s7 + $0x2cc] sm:$0xff]
    %v1858 = vld [vmem:[%s7 + $0x2d4] sm:$0xf]
    %v1859 = vld [vmem:[%s7 + $0x2d8] sm:$0xff]
    %v1860 = vld [vmem:[%s7 + $0x2e0] sm:$0xff]
    %v1861 = vld [vmem:[%s7 + $0x2e8] sm:$0xff]
    %v1862 = vld [vmem:[%s7 + $0x2f0] sm:$0xf]
    %v1863 = vld [vmem:[%s7 + $0x2f4] sm:$0xff]
    %v1864 = vld [vmem:[%s7 + $0x2fc] sm:$0xff]
    %v1865 = vld [vmem:[%s7 + $0x304] sm:$0xff]
    %v1866 = vld [vmem:[%s7 + $0x30c] sm:$0xf]
    %v1867 = vld [vmem:[%s7 + $0x310] sm:$0xff]
    %v1868 = vld [vmem:[%s7 + $0x318] sm:$0xff]
    %v1869 = vld [vmem:[%s7 + $0x320] sm:$0xff]
    %v1870 = vld [vmem:[%s7 + $0x328] sm:$0xf]
    %v1871 = vld [vmem:[%s7 + $0x32c] sm:$0xff]
    %v1872 = vld [vmem:[%s7 + $0x334] sm:$0xff]
    %v1873 = vld [vmem:[%s7 + $0x33c] sm:$0xff]
    %v1874 = vld [vmem:[%s7 + $0x344] sm:$0xf]
    %v1875 = vld [vmem:[%s7 + $0x348] sm:$0xff]
    %v1876 = vld [vmem:[%s7 + $0x350] sm:$0xff]
    %v1877 = vld [vmem:[%s7 + $0x358] sm:$0xff]
    %v1878 = vld [vmem:[%s7 + $0x360] sm:$0xf]
    %v1879 = vld [vmem:[%s7 + $0x364] sm:$0xff]
    %v1880 = vld [vmem:[%s7 + $0x36c] sm:$0xff]
    %v1881 = vld [vmem:[%s7 + $0x374] sm:$0xff]
    %v1882 = vld [vmem:[%s7 + $0x37c] sm:$0xf]
    %v1883 = vld [vmem:[%s7 + $0x380] sm:$0xff]
    %v1884 = vld [vmem:[%s7 + $0x388] sm:$0xff]
    %v1885 = vld [vmem:[%s7 + $0x390] sm:$0xff]
    %v1886 = vld [vmem:[%s7 + $0x398] sm:$0xf]
    %v1887 = vld [vmem:[%s7 + $0x39c] sm:$0xff]
    %v1888 = vld [vmem:[%s7 + $0x3a4] sm:$0xff]
    %v1889 = vld [vmem:[%s7 + $0x3ac] sm:$0xff]
    %v1890 = vld [vmem:[%s7 + $0x3b4] sm:$0xf]
    %v1891 = vld [vmem:[%s7 + $0x3b8] sm:$0xff]
    %v1892 = vld [vmem:[%s7 + $0x3c0] sm:$0xff]
    %v1893 = vld [vmem:[%s7 + $0x3c8] sm:$0xff]
    %v1894 = vld [vmem:[%s7 + $0x3d0] sm:$0xf]
    %v1895 = vld [vmem:[%s7 + $0x3d4] sm:$0xff]
    %v1896 = vld [vmem:[%s7 + $0x3dc] sm:$0xff]
    %v1897 = vld [vmem:[%s7 + $0x3e4] sm:$0xff]
    %v1898 = vld [vmem:[%s7 + $0x3ec] sm:$0xf]
    %v1899 = vld [vmem:[%s7 + $0x3f0] sm:$0xff]
    %v1900 = vld [vmem:[%s7 + $0x3f8] sm:$0xff]
    %v1901 = vld [vmem:[%s7 + $0x400] sm:$0xff]
    %v1902 = vld [vmem:[%s7 + $0x408] sm:$0xf]
    %v1903 = vld [vmem:[%s7 + $0x40c] sm:$0xff]
    %v1904 = vld [vmem:[%s7 + $0x414] sm:$0xff]
    %v1905 = vld [vmem:[%s7 + $0x41c] sm:$0xff]
    %v1906 = vld [vmem:[%s7 + $0x424] sm:$0xf]
    %v1907 = vld [vmem:[%s7 + $0x428] sm:$0xff]
    %v1908 = vld [vmem:[%s7 + $0x430] sm:$0xff]
    %v1909 = vld [vmem:[%s7 + $0x438] sm:$0xff]
    %v1910 = vld [vmem:[%s7 + $0x440] sm:$0xf]
    %v1911 = vld [vmem:[%s7 + $0x444] sm:$0xff]
    %v1912 = vld [vmem:[%s7 + $0x44c] sm:$0xff]
    %v1913 = vld [vmem:[%s7 + $0x454] sm:$0xff]
    %v1914 = vld [vmem:[%s7 + $0x45c] sm:$0xf]
    %v1915 = vld [vmem:[%s7 + $0x460] sm:$0xff]
    %v1916 = vld [vmem:[%s7 + $0x468] sm:$0xff]
    %v1917 = vld [vmem:[%s7 + $0x470] sm:$0xff]
    %v1918 = vld [vmem:[%s7 + $0x478] sm:$0xf]
    %v1919 = vld [vmem:[%s7 + $0x47c] sm:$0xff]
    %v1920 = vld [vmem:[%s7 + $0x484] sm:$0xff]
    %v1921 = vld [vmem:[%s7 + $0x48c] sm:$0xff]
    %v1922 = vld [vmem:[%s7 + $0x494] sm:$0xf]
    %v1923 = vld [vmem:[%s7 + $0x498] sm:$0xff]
    %v1924 = vld [vmem:[%s7 + $0x4a0] sm:$0xff]
    %v1925 = vld [vmem:[%s7 + $0x4a8] sm:$0xff]
    %v1926 = vld [vmem:[%s7 + $0x4b0] sm:$0xf]
    %v1927 = vld [vmem:[%s7 + $0x4b4] sm:$0xff]
    %v1928 = vld [vmem:[%s7 + $0x4bc] sm:$0xff]
    %v1929 = vld [vmem:[%s7 + $0x4c4] sm:$0xff]
    %v1930 = vld [vmem:[%s7 + $0x4cc] sm:$0xf]
    %v1931 = vld [vmem:[%s7 + $0x4d0] sm:$0xff]
    %v1932 = vld [vmem:[%s7 + $0x4d8] sm:$0xff]
    %v1933 = vld [vmem:[%s7 + $0x4e0] sm:$0xff]
    %v1934 = vld [vmem:[%s7 + $0x4e8] sm:$0xf]
    %v1935 = vld [vmem:[%s7 + $0x4ec] sm:$0xff]
    %v1936 = vld [vmem:[%s7 + $0x4f4] sm:$0xff]
    %v1937 = vld [vmem:[%s7 + $0x4fc] sm:$0xff]
    %v1938 = vld [vmem:[%s7 + $0x504] sm:$0xf]
    %v1939 = vld [vmem:[%s7 + $0x508] sm:$0xff]
    %v1940 = vld [vmem:[%s7 + $0x510] sm:$0xff]
    %v1941 = vld [vmem:[%s7 + $0x518] sm:$0xff]
    %v1942 = vld [vmem:[%s7 + $0x520] sm:$0xf]
    %v1943 = vld [vmem:[%s7 + $0x524] sm:$0xff]
    %v1944 = vld [vmem:[%s7 + $0x52c] sm:$0xff]
    %v1945 = vld [vmem:[%s7 + $0x534] sm:$0xff]
    %v1946 = vld [vmem:[%s7 + $0x53c] sm:$0xf]
    %v1947 = vld [vmem:[%s7 + $0x540] sm:$0xff]
    %v1948 = vld [vmem:[%s7 + $0x548] sm:$0xff]
    %v1949 = vld [vmem:[%s7 + $0x550] sm:$0xff]
    %v1950 = vld [vmem:[%s7 + $0x558] sm:$0xf]
    %v1951 = vld [vmem:[%s7 + $0x55c] sm:$0xff]
    %v1952 = vld [vmem:[%s7 + $0x564] sm:$0xff]
    %v1953 = vld [vmem:[%s7 + $0x56c] sm:$0xff]
    %v1954 = vld [vmem:[%s7 + $0x574] sm:$0xf]
    %v1955 = vld [vmem:[%s7 + $0x578] sm:$0xff]
    %v1956 = vld [vmem:[%s7 + $0x580] sm:$0xff]
    %v1957 = vld [vmem:[%s7 + $0x588] sm:$0xff]
    %v1958 = vld [vmem:[%s7 + $0x590] sm:$0xf]
    %v1959 = vld [vmem:[%s7 + $0x594] sm:$0xff]
    %v1960 = vld [vmem:[%s7 + $0x59c] sm:$0xff]
    %v1961 = vld [vmem:[%s7 + $0x5a4] sm:$0xff]
    %v1962 = vld [vmem:[%s7 + $0x5ac] sm:$0xf]
    %v1963 = vld [vmem:[%s7 + $0x5b0] sm:$0xff]
    %v1964 = vld [vmem:[%s7 + $0x5b8] sm:$0xff]
    %v1965 = vld [vmem:[%s7 + $0x5c0] sm:$0xff]
    %v1966 = vld [vmem:[%s7 + $0x5c8] sm:$0xf]
    %v1967 = vld [vmem:[%s7 + $0x5cc] sm:$0xff]
    %v1968 = vld [vmem:[%s7 + $0x5d4] sm:$0xff]
    %v1969 = vld [vmem:[%s7 + $0x5dc] sm:$0xff]
    %v1970 = vld [vmem:[%s7 + $0x5e4] sm:$0xf]
    %v1971 = vld [vmem:[%s7 + $0x5e8] sm:$0xff]
    %v1972 = vld [vmem:[%s7 + $0x5f0] sm:$0xff]
    %v1973 = vld [vmem:[%s7 + $0x5f8] sm:$0xff]
    %v1974 = vld [vmem:[%s7 + $0x600] sm:$0xf]
    %v1975 = vld [vmem:[%s7 + $0x604] sm:$0xff]
    %v1976 = vld [vmem:[%s7 + $0x60c] sm:$0xff]
    %v1977 = vld [vmem:[%s7 + $0x614] sm:$0xff]
    %v1978 = vld [vmem:[%s7 + $0x61c] sm:$0xf]
    %v1979 = vld [vmem:[%s7 + $0x620] sm:$0xff]
    %v1980 = vld [vmem:[%s7 + $0x628] sm:$0xff]
    %v1981 = vld [vmem:[%s7 + $0x630] sm:$0xff]
    %v1982 = vld [vmem:[%s7 + $0x638] sm:$0xf]
    %v1983 = vld [vmem:[%s7 + $0x63c] sm:$0xff]
    %v1984 = vld [vmem:[%s7 + $0x644] sm:$0xff]
    %v1985 = vld [vmem:[%s7 + $0x64c] sm:$0xff]
    %v1986 = vld [vmem:[%s7 + $0x654] sm:$0xf]
    %v1987 = vld [vmem:[%s7 + $0x658] sm:$0xff]
    %v1988 = vld [vmem:[%s7 + $0x660] sm:$0xff]
    %v1989 = vld [vmem:[%s7 + $0x668] sm:$0xff]
    %v1990 = vld [vmem:[%s7 + $0x670] sm:$0xf]
    %v1991 = vld [vmem:[%s7 + $0x674] sm:$0xff]
    %v1992 = vld [vmem:[%s7 + $0x67c] sm:$0xff]
    %v1993 = vld [vmem:[%s7 + $0x684] sm:$0xff]
    %v1994 = vld [vmem:[%s7 + $0x68c] sm:$0xf]
    %v1995 = vld [vmem:[%s7 + $0x690] sm:$0xff]
    %v1996 = vld [vmem:[%s7 + $0x698] sm:$0xff]
    %v1997 = vld [vmem:[%s7 + $0x6a0] sm:$0xff]
    %v1998 = vld [vmem:[%s7 + $0x6a8] sm:$0xf]
    %v1999 = vld [vmem:[%s7 + $0x6ac] sm:$0xff]
    %v2000 = vld [vmem:[%s7 + $0x6b4] sm:$0xff]
    %v2001 = vld [vmem:[%s7 + $0x6bc] sm:$0xff]
    %v2002 = vld [vmem:[%s7 + $0x6c4] sm:$0xf]
    %v2003 = vld [vmem:[%s7 + $0x6c8] sm:$0xff]
    %v2004 = vld [vmem:[%s7 + $0x6d0] sm:$0xff]
    %v2005 = vld [vmem:[%s7 + $0x6d8] sm:$0xff]
    %v2006 = vld [vmem:[%s7 + $0x6e0] sm:$0xf]
    %v2007 = vld [vmem:[%s7 + $0x6e4] sm:$0xff]
    %v2008 = vld [vmem:[%s7 + $0x6ec] sm:$0xff]
    %v2009 = vld [vmem:[%s7 + $0x6f4] sm:$0xff]
    %v2010 = vld [vmem:[%s7 + $0x6fc] sm:$0xf]
    %v2011 = vld [vmem:[%s8] sm:$0x7f]
    %v2013 = vlaneseq
    %v2014 = vshrl.u32 %v2013, 7
    %v2015 = vsub.s32 0, %v2014
    %v2016 = vrot.slane %v2011, %v2015
    %v2017 = vlaneseq
    %v2018 = vshrl.u32 %v2017, 7
    %v2019 = vsub.s32 1, %v2018
    %v2020 = vrot.slane %v2011, %v2019
    %v2021 = vlaneseq
    %v2022 = vshrl.u32 %v2021, 7
    %v2023 = vsub.s32 2, %v2022
    %v2024 = vrot.slane %v2011, %v2023
    %v2025 = vlaneseq
    %v2026 = vshrl.u32 %v2025, 7
    %v2027 = vsub.s32 3, %v2026
    %v2028 = vrot.slane %v2011, %v2027
    %v2029 = vlaneseq
    %v2030 = vshrl.u32 %v2029, 7
    %v2031 = vsub.s32 4, %v2030
    %v2032 = vrot.slane %v2011, %v2031
    %v2033 = vlaneseq
    %v2034 = vshrl.u32 %v2033, 7
    %v2035 = vsub.s32 5, %v2034
    %v2036 = vrot.slane %v2011, %v2035
    %v2037 = vlaneseq
    %v2038 = vshrl.u32 %v2037, 7
    %v2039 = vsub.s32 6, %v2038
    %v2040 = vrot.slane %v2011, %v2039
    %v2304 = vunpack.c.l.b16 %v1755
    %v2305 = vunpack.c.h.b16 %v1755
    %v2306 = vunpack.c.l.b16 %v1756
    %v2307 = vunpack.c.h.b16 %v1756
    %v2308 = vunpack.c.l.b16 %v1757
    %v2309 = vunpack.c.h.b16 %v1757
    %v2310 = vunpack.c.l.b16 %v1758
    %v2311 = vunpack.c.l.b16 %v1759
    %v2312 = vunpack.c.h.b16 %v1759
    %v2313 = vunpack.c.l.b16 %v1760
    %v2314 = vunpack.c.h.b16 %v1760
    %v2315 = vunpack.c.l.b16 %v1761
    %v2316 = vunpack.c.h.b16 %v1761
    %v2317 = vunpack.c.l.b16 %v1762
    %v2318 = vunpack.c.l.b16 %v1763
    %v2319 = vunpack.c.h.b16 %v1763
    %v2320 = vunpack.c.l.b16 %v1764
    %v2321 = vunpack.c.h.b16 %v1764
    %v2322 = vunpack.c.l.b16 %v1765
    %v2323 = vunpack.c.h.b16 %v1765
    %v2324 = vunpack.c.l.b16 %v1766
    %v2325 = vunpack.c.l.b16 %v1767
    %v2326 = vunpack.c.h.b16 %v1767
    %v2327 = vunpack.c.l.b16 %v1768
    %v2328 = vunpack.c.h.b16 %v1768
    %v2329 = vunpack.c.l.b16 %v1769
    %v2330 = vunpack.c.h.b16 %v1769
    %v2331 = vunpack.c.l.b16 %v1770
    %v2332 = vunpack.c.l.b16 %v1771
    %v2333 = vunpack.c.h.b16 %v1771
    %v2334 = vunpack.c.l.b16 %v1772
    %v2335 = vunpack.c.h.b16 %v1772
    %v2336 = vunpack.c.l.b16 %v1773
    %v2337 = vunpack.c.h.b16 %v1773
    %v2338 = vunpack.c.l.b16 %v1774
    %v2339 = vunpack.c.l.b16 %v1775
    %v2340 = vunpack.c.h.b16 %v1775
    %v2341 = vunpack.c.l.b16 %v1776
    %v2342 = vunpack.c.h.b16 %v1776
    %v2343 = vunpack.c.l.b16 %v1777
    %v2344 = vunpack.c.h.b16 %v1777
    %v2345 = vunpack.c.l.b16 %v1778
    %v2346 = vunpack.c.l.b16 %v1779
    %v2347 = vunpack.c.h.b16 %v1779
    %v2348 = vunpack.c.l.b16 %v1780
    %v2349 = vunpack.c.h.b16 %v1780
    %v2350 = vunpack.c.l.b16 %v1781
    %v2351 = vunpack.c.h.b16 %v1781
    %v2352 = vunpack.c.l.b16 %v1782
    %v2353 = vunpack.c.l.b16 %v1783
    %v2354 = vunpack.c.h.b16 %v1783
    %v2355 = vunpack.c.l.b16 %v1784
    %v2356 = vunpack.c.h.b16 %v1784
    %v2357 = vunpack.c.l.b16 %v1785
    %v2358 = vunpack.c.h.b16 %v1785
    %v2359 = vunpack.c.l.b16 %v1786
    %v2360 = vunpack.c.l.b16 %v1787
    %v2361 = vunpack.c.h.b16 %v1787
    %v2362 = vunpack.c.l.b16 %v1788
    %v2363 = vunpack.c.h.b16 %v1788
    %v2364 = vunpack.c.l.b16 %v1789
    %v2365 = vunpack.c.h.b16 %v1789
    %v2366 = vunpack.c.l.b16 %v1790
    %v2367 = vunpack.c.l.b16 %v1791
    %v2368 = vunpack.c.h.b16 %v1791
    %v2369 = vunpack.c.l.b16 %v1792
    %v2370 = vunpack.c.h.b16 %v1792
    %v2371 = vunpack.c.l.b16 %v1793
    %v2372 = vunpack.c.h.b16 %v1793
    %v2373 = vunpack.c.l.b16 %v1794
    %v2374 = vunpack.c.l.b16 %v1795
    %v2375 = vunpack.c.h.b16 %v1795
    %v2376 = vunpack.c.l.b16 %v1796
    %v2377 = vunpack.c.h.b16 %v1796
    %v2378 = vunpack.c.l.b16 %v1797
    %v2379 = vunpack.c.h.b16 %v1797
    %v2380 = vunpack.c.l.b16 %v1798
    %v2381 = vunpack.c.l.b16 %v1799
    %v2382 = vunpack.c.h.b16 %v1799
    %v2383 = vunpack.c.l.b16 %v1800
    %v2384 = vunpack.c.h.b16 %v1800
    %v2385 = vunpack.c.l.b16 %v1801
    %v2386 = vunpack.c.h.b16 %v1801
    %v2387 = vunpack.c.l.b16 %v1802
    %v2388 = vunpack.c.l.b16 %v1803
    %v2389 = vunpack.c.h.b16 %v1803
    %v2390 = vunpack.c.l.b16 %v1804
    %v2391 = vunpack.c.h.b16 %v1804
    %v2392 = vunpack.c.l.b16 %v1805
    %v2393 = vunpack.c.h.b16 %v1805
    %v2394 = vunpack.c.l.b16 %v1806
    %v2395 = vunpack.c.l.b16 %v1807
    %v2396 = vunpack.c.h.b16 %v1807
    %v2397 = vunpack.c.l.b16 %v1808
    %v2398 = vunpack.c.h.b16 %v1808
    %v2399 = vunpack.c.l.b16 %v1809
    %v2400 = vunpack.c.h.b16 %v1809
    %v2401 = vunpack.c.l.b16 %v1810
    %v2402 = vunpack.c.l.b16 %v1811
    %v2403 = vunpack.c.h.b16 %v1811
    %v2404 = vunpack.c.l.b16 %v1812
    %v2405 = vunpack.c.h.b16 %v1812
    %v2406 = vunpack.c.l.b16 %v1813
    %v2407 = vunpack.c.h.b16 %v1813
    %v2408 = vunpack.c.l.b16 %v1814
    %v2409 = vunpack.c.l.b16 %v1815
    %v2410 = vunpack.c.h.b16 %v1815
    %v2411 = vunpack.c.l.b16 %v1816
    %v2412 = vunpack.c.h.b16 %v1816
    %v2413 = vunpack.c.l.b16 %v1817
    %v2414 = vunpack.c.h.b16 %v1817
    %v2415 = vunpack.c.l.b16 %v1818
    %v2416 = vunpack.c.l.b16 %v1819
    %v2417 = vunpack.c.h.b16 %v1819
    %v2418 = vunpack.c.l.b16 %v1820
    %v2419 = vunpack.c.h.b16 %v1820
    %v2420 = vunpack.c.l.b16 %v1821
    %v2421 = vunpack.c.h.b16 %v1821
    %v2422 = vunpack.c.l.b16 %v1822
    %v2423 = vunpack.c.l.b16 %v1823
    %v2424 = vunpack.c.h.b16 %v1823
    %v2425 = vunpack.c.l.b16 %v1824
    %v2426 = vunpack.c.h.b16 %v1824
    %v2427 = vunpack.c.l.b16 %v1825
    %v2428 = vunpack.c.h.b16 %v1825
    %v2429 = vunpack.c.l.b16 %v1826
    %v2430 = vunpack.c.l.b16 %v1827
    %v2431 = vunpack.c.h.b16 %v1827
    %v2432 = vunpack.c.l.b16 %v1828
    %v2433 = vunpack.c.h.b16 %v1828
    %v2434 = vunpack.c.l.b16 %v1829
    %v2435 = vunpack.c.h.b16 %v1829
    %v2436 = vunpack.c.l.b16 %v1830
    %v2437 = vunpack.c.l.b16 %v1831
    %v2438 = vunpack.c.h.b16 %v1831
    %v2439 = vunpack.c.l.b16 %v1832
    %v2440 = vunpack.c.h.b16 %v1832
    %v2441 = vunpack.c.l.b16 %v1833
    %v2442 = vunpack.c.h.b16 %v1833
    %v2443 = vunpack.c.l.b16 %v1834
    %v2444 = vunpack.c.l.b16 %v1835
    %v2445 = vunpack.c.h.b16 %v1835
    %v2446 = vunpack.c.l.b16 %v1836
    %v2447 = vunpack.c.h.b16 %v1836
    %v2448 = vunpack.c.l.b16 %v1837
    %v2449 = vunpack.c.h.b16 %v1837
    %v2450 = vunpack.c.l.b16 %v1838
    %v2451 = vunpack.c.l.b16 %v1839
    %v2452 = vunpack.c.h.b16 %v1839
    %v2453 = vunpack.c.l.b16 %v1840
    %v2454 = vunpack.c.h.b16 %v1840
    %v2455 = vunpack.c.l.b16 %v1841
    %v2456 = vunpack.c.h.b16 %v1841
    %v2457 = vunpack.c.l.b16 %v1842
    %v2458 = vunpack.c.l.b16 %v1843
    %v2459 = vunpack.c.h.b16 %v1843
    %v2460 = vunpack.c.l.b16 %v1844
    %v2461 = vunpack.c.h.b16 %v1844
    %v2462 = vunpack.c.l.b16 %v1845
    %v2463 = vunpack.c.h.b16 %v1845
    %v2464 = vunpack.c.l.b16 %v1846
    %v2465 = vunpack.c.l.b16 %v1847
    %v2466 = vunpack.c.h.b16 %v1847
    %v2467 = vunpack.c.l.b16 %v1848
    %v2468 = vunpack.c.h.b16 %v1848
    %v2469 = vunpack.c.l.b16 %v1849
    %v2470 = vunpack.c.h.b16 %v1849
    %v2471 = vunpack.c.l.b16 %v1850
    %v2472 = vunpack.c.l.b16 %v1851
    %v2473 = vunpack.c.h.b16 %v1851
    %v2474 = vunpack.c.l.b16 %v1852
    %v2475 = vunpack.c.h.b16 %v1852
    %v2476 = vunpack.c.l.b16 %v1853
    %v2477 = vunpack.c.h.b16 %v1853
    %v2478 = vunpack.c.l.b16 %v1854
    %v2479 = vunpack.c.l.b16 %v1855
    %v2480 = vunpack.c.h.b16 %v1855
    %v2481 = vunpack.c.l.b16 %v1856
    %v2482 = vunpack.c.h.b16 %v1856
    %v2483 = vunpack.c.l.b16 %v1857
    %v2484 = vunpack.c.h.b16 %v1857
    %v2485 = vunpack.c.l.b16 %v1858
    %v2486 = vunpack.c.l.b16 %v1859
    %v2487 = vunpack.c.h.b16 %v1859
    %v2488 = vunpack.c.l.b16 %v1860
    %v2489 = vunpack.c.h.b16 %v1860
    %v2490 = vunpack.c.l.b16 %v1861
    %v2491 = vunpack.c.h.b16 %v1861
    %v2492 = vunpack.c.l.b16 %v1862
    %v2493 = vunpack.c.l.b16 %v1863
    %v2494 = vunpack.c.h.b16 %v1863
    %v2495 = vunpack.c.l.b16 %v1864
    %v2496 = vunpack.c.h.b16 %v1864
    %v2497 = vunpack.c.l.b16 %v1865
    %v2498 = vunpack.c.h.b16 %v1865
    %v2499 = vunpack.c.l.b16 %v1866
    %v2500 = vunpack.c.l.b16 %v1867
    %v2501 = vunpack.c.h.b16 %v1867
    %v2502 = vunpack.c.l.b16 %v1868
    %v2503 = vunpack.c.h.b16 %v1868
    %v2504 = vunpack.c.l.b16 %v1869
    %v2505 = vunpack.c.h.b16 %v1869
    %v2506 = vunpack.c.l.b16 %v1870
    %v2507 = vunpack.c.l.b16 %v1871
    %v2508 = vunpack.c.h.b16 %v1871
    %v2509 = vunpack.c.l.b16 %v1872
    %v2510 = vunpack.c.h.b16 %v1872
    %v2511 = vunpack.c.l.b16 %v1873
    %v2512 = vunpack.c.h.b16 %v1873
    %v2513 = vunpack.c.l.b16 %v1874
    %v2514 = vunpack.c.l.b16 %v1875
    %v2515 = vunpack.c.h.b16 %v1875
    %v2516 = vunpack.c.l.b16 %v1876
    %v2517 = vunpack.c.h.b16 %v1876
    %v2518 = vunpack.c.l.b16 %v1877
    %v2519 = vunpack.c.h.b16 %v1877
    %v2520 = vunpack.c.l.b16 %v1878
    %v2521 = vunpack.c.l.b16 %v1879
    %v2522 = vunpack.c.h.b16 %v1879
    %v2523 = vunpack.c.l.b16 %v1880
    %v2524 = vunpack.c.h.b16 %v1880
    %v2525 = vunpack.c.l.b16 %v1881
    %v2526 = vunpack.c.h.b16 %v1881
    %v2527 = vunpack.c.l.b16 %v1882
    %v2528 = vunpack.c.l.b16 %v1883
    %v2529 = vunpack.c.h.b16 %v1883
    %v2530 = vunpack.c.l.b16 %v1884
    %v2531 = vunpack.c.h.b16 %v1884
    %v2532 = vunpack.c.l.b16 %v1885
    %v2533 = vunpack.c.h.b16 %v1885
    %v2534 = vunpack.c.l.b16 %v1886
    %v2535 = vunpack.c.l.b16 %v1887
    %v2536 = vunpack.c.h.b16 %v1887
    %v2537 = vunpack.c.l.b16 %v1888
    %v2538 = vunpack.c.h.b16 %v1888
    %v2539 = vunpack.c.l.b16 %v1889
    %v2540 = vunpack.c.h.b16 %v1889
    %v2541 = vunpack.c.l.b16 %v1890
    %v2542 = vunpack.c.l.b16 %v1891
    %v2543 = vunpack.c.h.b16 %v1891
    %v2544 = vunpack.c.l.b16 %v1892
    %v2545 = vunpack.c.h.b16 %v1892
    %v2546 = vunpack.c.l.b16 %v1893
    %v2547 = vunpack.c.h.b16 %v1893
    %v2548 = vunpack.c.l.b16 %v1894
    %v2549 = vunpack.c.l.b16 %v1895
    %v2550 = vunpack.c.h.b16 %v1895
    %v2551 = vunpack.c.l.b16 %v1896
    %v2552 = vunpack.c.h.b16 %v1896
    %v2553 = vunpack.c.l.b16 %v1897
    %v2554 = vunpack.c.h.b16 %v1897
    %v2555 = vunpack.c.l.b16 %v1898
    %v2556 = vunpack.c.l.b16 %v1899
    %v2557 = vunpack.c.h.b16 %v1899
    %v2558 = vunpack.c.l.b16 %v1900
    %v2559 = vunpack.c.h.b16 %v1900
    %v2560 = vunpack.c.l.b16 %v1901
    %v2561 = vunpack.c.h.b16 %v1901
    %v2562 = vunpack.c.l.b16 %v1902
    %v2563 = vunpack.c.l.b16 %v1903
    %v2564 = vunpack.c.h.b16 %v1903
    %v2565 = vunpack.c.l.b16 %v1904
    %v2566 = vunpack.c.h.b16 %v1904
    %v2567 = vunpack.c.l.b16 %v1905
    %v2568 = vunpack.c.h.b16 %v1905
    %v2569 = vunpack.c.l.b16 %v1906
    %v2570 = vunpack.c.l.b16 %v1907
    %v2571 = vunpack.c.h.b16 %v1907
    %v2572 = vunpack.c.l.b16 %v1908
    %v2573 = vunpack.c.h.b16 %v1908
    %v2574 = vunpack.c.l.b16 %v1909
    %v2575 = vunpack.c.h.b16 %v1909
    %v2576 = vunpack.c.l.b16 %v1910
    %v2577 = vunpack.c.l.b16 %v1911
    %v2578 = vunpack.c.h.b16 %v1911
    %v2579 = vunpack.c.l.b16 %v1912
    %v2580 = vunpack.c.h.b16 %v1912
    %v2581 = vunpack.c.l.b16 %v1913
    %v2582 = vunpack.c.h.b16 %v1913
    %v2583 = vunpack.c.l.b16 %v1914
    %v2584 = vunpack.c.l.b16 %v1915
    %v2585 = vunpack.c.h.b16 %v1915
    %v2586 = vunpack.c.l.b16 %v1916
    %v2587 = vunpack.c.h.b16 %v1916
    %v2588 = vunpack.c.l.b16 %v1917
    %v2589 = vunpack.c.h.b16 %v1917
    %v2590 = vunpack.c.l.b16 %v1918
    %v2591 = vunpack.c.l.b16 %v1919
    %v2592 = vunpack.c.h.b16 %v1919
    %v2593 = vunpack.c.l.b16 %v1920
    %v2594 = vunpack.c.h.b16 %v1920
    %v2595 = vunpack.c.l.b16 %v1921
    %v2596 = vunpack.c.h.b16 %v1921
    %v2597 = vunpack.c.l.b16 %v1922
    %v2598 = vunpack.c.l.b16 %v1923
    %v2599 = vunpack.c.h.b16 %v1923
    %v2600 = vunpack.c.l.b16 %v1924
    %v2601 = vunpack.c.h.b16 %v1924
    %v2602 = vunpack.c.l.b16 %v1925
    %v2603 = vunpack.c.h.b16 %v1925
    %v2604 = vunpack.c.l.b16 %v1926
    %v2605 = vunpack.c.l.b16 %v1927
    %v2606 = vunpack.c.h.b16 %v1927
    %v2607 = vunpack.c.l.b16 %v1928
    %v2608 = vunpack.c.h.b16 %v1928
    %v2609 = vunpack.c.l.b16 %v1929
    %v2610 = vunpack.c.h.b16 %v1929
    %v2611 = vunpack.c.l.b16 %v1930
    %v2612 = vunpack.c.l.b16 %v1931
    %v2613 = vunpack.c.h.b16 %v1931
    %v2614 = vunpack.c.l.b16 %v1932
    %v2615 = vunpack.c.h.b16 %v1932
    %v2616 = vunpack.c.l.b16 %v1933
    %v2617 = vunpack.c.h.b16 %v1933
    %v2618 = vunpack.c.l.b16 %v1934
    %v2619 = vunpack.c.l.b16 %v1935
    %v2620 = vunpack.c.h.b16 %v1935
    %v2621 = vunpack.c.l.b16 %v1936
    %v2622 = vunpack.c.h.b16 %v1936
    %v2623 = vunpack.c.l.b16 %v1937
    %v2624 = vunpack.c.h.b16 %v1937
    %v2625 = vunpack.c.l.b16 %v1938
    %v2626 = vunpack.c.l.b16 %v1939
    %v2627 = vunpack.c.h.b16 %v1939
    %v2628 = vunpack.c.l.b16 %v1940
    %v2629 = vunpack.c.h.b16 %v1940
    %v2630 = vunpack.c.l.b16 %v1941
    %v2631 = vunpack.c.h.b16 %v1941
    %v2632 = vunpack.c.l.b16 %v1942
    %v2633 = vunpack.c.l.b16 %v1943
    %v2634 = vunpack.c.h.b16 %v1943
    %v2635 = vunpack.c.l.b16 %v1944
    %v2636 = vunpack.c.h.b16 %v1944
    %v2637 = vunpack.c.l.b16 %v1945
    %v2638 = vunpack.c.h.b16 %v1945
    %v2639 = vunpack.c.l.b16 %v1946
    %v2640 = vunpack.c.l.b16 %v1947
    %v2641 = vunpack.c.h.b16 %v1947
    %v2642 = vunpack.c.l.b16 %v1948
    %v2643 = vunpack.c.h.b16 %v1948
    %v2644 = vunpack.c.l.b16 %v1949
    %v2645 = vunpack.c.h.b16 %v1949
    %v2646 = vunpack.c.l.b16 %v1950
    %v2647 = vunpack.c.l.b16 %v1951
    %v2648 = vunpack.c.h.b16 %v1951
    %v2649 = vunpack.c.l.b16 %v1952
    %v2650 = vunpack.c.h.b16 %v1952
    %v2651 = vunpack.c.l.b16 %v1953
    %v2652 = vunpack.c.h.b16 %v1953
    %v2653 = vunpack.c.l.b16 %v1954
    %v2654 = vunpack.c.l.b16 %v1955
    %v2655 = vunpack.c.h.b16 %v1955
    %v2656 = vunpack.c.l.b16 %v1956
    %v2657 = vunpack.c.h.b16 %v1956
    %v2658 = vunpack.c.l.b16 %v1957
    %v2659 = vunpack.c.h.b16 %v1957
    %v2660 = vunpack.c.l.b16 %v1958
    %v2661 = vunpack.c.l.b16 %v1959
    %v2662 = vunpack.c.h.b16 %v1959
    %v2663 = vunpack.c.l.b16 %v1960
    %v2664 = vunpack.c.h.b16 %v1960
    %v2665 = vunpack.c.l.b16 %v1961
    %v2666 = vunpack.c.h.b16 %v1961
    %v2667 = vunpack.c.l.b16 %v1962
    %v2668 = vunpack.c.l.b16 %v1963
    %v2669 = vunpack.c.h.b16 %v1963
    %v2670 = vunpack.c.l.b16 %v1964
    %v2671 = vunpack.c.h.b16 %v1964
    %v2672 = vunpack.c.l.b16 %v1965
    %v2673 = vunpack.c.h.b16 %v1965
    %v2674 = vunpack.c.l.b16 %v1966
    %v2675 = vunpack.c.l.b16 %v1967
    %v2676 = vunpack.c.h.b16 %v1967
    %v2677 = vunpack.c.l.b16 %v1968
    %v2678 = vunpack.c.h.b16 %v1968
    %v2679 = vunpack.c.l.b16 %v1969
    %v2680 = vunpack.c.h.b16 %v1969
    %v2681 = vunpack.c.l.b16 %v1970
    %v2682 = vunpack.c.l.b16 %v1971
    %v2683 = vunpack.c.h.b16 %v1971
    %v2684 = vunpack.c.l.b16 %v1972
    %v2685 = vunpack.c.h.b16 %v1972
    %v2686 = vunpack.c.l.b16 %v1973
    %v2687 = vunpack.c.h.b16 %v1973
    %v2688 = vunpack.c.l.b16 %v1974
    %v2689 = vunpack.c.l.b16 %v1975
    %v2690 = vunpack.c.h.b16 %v1975
    %v2691 = vunpack.c.l.b16 %v1976
    %v2692 = vunpack.c.h.b16 %v1976
    %v2693 = vunpack.c.l.b16 %v1977
    %v2694 = vunpack.c.h.b16 %v1977
    %v2695 = vunpack.c.l.b16 %v1978
    %v2696 = vunpack.c.l.b16 %v1979
    %v2697 = vunpack.c.h.b16 %v1979
    %v2698 = vunpack.c.l.b16 %v1980
    %v2699 = vunpack.c.h.b16 %v1980
    %v2700 = vunpack.c.l.b16 %v1981
    %v2701 = vunpack.c.h.b16 %v1981
    %v2702 = vunpack.c.l.b16 %v1982
    %v2703 = vunpack.c.l.b16 %v1983
    %v2704 = vunpack.c.h.b16 %v1983
    %v2705 = vunpack.c.l.b16 %v1984
    %v2706 = vunpack.c.h.b16 %v1984
    %v2707 = vunpack.c.l.b16 %v1985
    %v2708 = vunpack.c.h.b16 %v1985
    %v2709 = vunpack.c.l.b16 %v1986
    %v2710 = vunpack.c.l.b16 %v1987
    %v2711 = vunpack.c.h.b16 %v1987
    %v2712 = vunpack.c.l.b16 %v1988
    %v2713 = vunpack.c.h.b16 %v1988
    %v2714 = vunpack.c.l.b16 %v1989
    %v2715 = vunpack.c.h.b16 %v1989
    %v2716 = vunpack.c.l.b16 %v1990
    %v2717 = vunpack.c.l.b16 %v1991
    %v2718 = vunpack.c.h.b16 %v1991
    %v2719 = vunpack.c.l.b16 %v1992
    %v2720 = vunpack.c.h.b16 %v1992
    %v2721 = vunpack.c.l.b16 %v1993
    %v2722 = vunpack.c.h.b16 %v1993
    %v2723 = vunpack.c.l.b16 %v1994
    %v2724 = vunpack.c.l.b16 %v1995
    %v2725 = vunpack.c.h.b16 %v1995
    %v2726 = vunpack.c.l.b16 %v1996
    %v2727 = vunpack.c.h.b16 %v1996
    %v2728 = vunpack.c.l.b16 %v1997
    %v2729 = vunpack.c.h.b16 %v1997
    %v2730 = vunpack.c.l.b16 %v1998
    %v2731 = vunpack.c.l.b16 %v1999
    %v2732 = vunpack.c.h.b16 %v1999
    %v2733 = vunpack.c.l.b16 %v2000
    %v2734 = vunpack.c.h.b16 %v2000
    %v2735 = vunpack.c.l.b16 %v2001
    %v2736 = vunpack.c.h.b16 %v2001
    %v2737 = vunpack.c.l.b16 %v2002
    %v2738 = vunpack.c.l.b16 %v2003
    %v2739 = vunpack.c.h.b16 %v2003
    %v2740 = vunpack.c.l.b16 %v2004
    %v2741 = vunpack.c.h.b16 %v2004
    %v2742 = vunpack.c.l.b16 %v2005
    %v2743 = vunpack.c.h.b16 %v2005
    %v2744 = vunpack.c.l.b16 %v2006
    %v2745 = vunpack.c.l.b16 %v2007
    %v2746 = vunpack.c.h.b16 %v2007
    %v2747 = vunpack.c.l.b16 %v2008
    %v2748 = vunpack.c.h.b16 %v2008
    %v2749 = vunpack.c.l.b16 %v2009
    %v2750 = vunpack.c.h.b16 %v2009
    %v2751 = vunpack.c.l.b16 %v2010
    %v2752 = vpack.c.b16 %v2311, %v2304
    %v2753 = vpack.c.b16 %v2312, %v2305
    %v2754 = vpack.c.b16 %v2313, %v2306
    %v2755 = vpack.c.b16 %v2314, %v2307
    %v2756 = vpack.c.b16 %v2315, %v2308
    %v2757 = vpack.c.b16 %v2316, %v2309
    %v2758 = vpack.c.b16 %v2317, %v2310
    %v2759 = vpack.c.b16 %v2325, %v2318
    %v2760 = vpack.c.b16 %v2326, %v2319
    %v2761 = vpack.c.b16 %v2327, %v2320
    %v2762 = vpack.c.b16 %v2328, %v2321
    %v2763 = vpack.c.b16 %v2329, %v2322
    %v2764 = vpack.c.b16 %v2330, %v2323
    %v2765 = vpack.c.b16 %v2331, %v2324
    %v2766 = vpack.c.b16 %v2339, %v2332
    %v2767 = vpack.c.b16 %v2340, %v2333
    %v2768 = vpack.c.b16 %v2341, %v2334
    %v2769 = vpack.c.b16 %v2342, %v2335
    %v2770 = vpack.c.b16 %v2343, %v2336
    %v2771 = vpack.c.b16 %v2344, %v2337
    %v2772 = vpack.c.b16 %v2345, %v2338
    %v2773 = vpack.c.b16 %v2353, %v2346
    %v2774 = vpack.c.b16 %v2354, %v2347
    %v2775 = vpack.c.b16 %v2355, %v2348
    %v2776 = vpack.c.b16 %v2356, %v2349
    %v2777 = vpack.c.b16 %v2357, %v2350
    %v2778 = vpack.c.b16 %v2358, %v2351
    %v2779 = vpack.c.b16 %v2359, %v2352
    %v2780 = vpack.c.b16 %v2367, %v2360
    %v2781 = vpack.c.b16 %v2368, %v2361
    %v2782 = vpack.c.b16 %v2369, %v2362
    %v2783 = vpack.c.b16 %v2370, %v2363
    %v2784 = vpack.c.b16 %v2371, %v2364
    %v2785 = vpack.c.b16 %v2372, %v2365
    %v2786 = vpack.c.b16 %v2373, %v2366
    %v2787 = vpack.c.b16 %v2381, %v2374
    %v2788 = vpack.c.b16 %v2382, %v2375
    %v2789 = vpack.c.b16 %v2383, %v2376
    %v2790 = vpack.c.b16 %v2384, %v2377
    %v2791 = vpack.c.b16 %v2385, %v2378
    %v2792 = vpack.c.b16 %v2386, %v2379
    %v2793 = vpack.c.b16 %v2387, %v2380
    %v2794 = vpack.c.b16 %v2395, %v2388
    %v2795 = vpack.c.b16 %v2396, %v2389
    %v2796 = vpack.c.b16 %v2397, %v2390
    %v2797 = vpack.c.b16 %v2398, %v2391
    %v2798 = vpack.c.b16 %v2399, %v2392
    %v2799 = vpack.c.b16 %v2400, %v2393
    %v2800 = vpack.c.b16 %v2401, %v2394
    %v2801 = vpack.c.b16 %v2409, %v2402
    %v2802 = vpack.c.b16 %v2410, %v2403
    %v2803 = vpack.c.b16 %v2411, %v2404
    %v2804 = vpack.c.b16 %v2412, %v2405
    %v2805 = vpack.c.b16 %v2413, %v2406
    %v2806 = vpack.c.b16 %v2414, %v2407
    %v2807 = vpack.c.b16 %v2415, %v2408
    %v2808 = vpack.c.b16 %v2423, %v2416
    %v2809 = vpack.c.b16 %v2424, %v2417
    %v2810 = vpack.c.b16 %v2425, %v2418
    %v2811 = vpack.c.b16 %v2426, %v2419
    %v2812 = vpack.c.b16 %v2427, %v2420
    %v2813 = vpack.c.b16 %v2428, %v2421
    %v2814 = vpack.c.b16 %v2429, %v2422
    %v2815 = vpack.c.b16 %v2437, %v2430
    %v2816 = vpack.c.b16 %v2438, %v2431
    %v2817 = vpack.c.b16 %v2439, %v2432
    %v2818 = vpack.c.b16 %v2440, %v2433
    %v2819 = vpack.c.b16 %v2441, %v2434
    %v2820 = vpack.c.b16 %v2442, %v2435
    %v2821 = vpack.c.b16 %v2443, %v2436
    %v2822 = vpack.c.b16 %v2451, %v2444
    %v2823 = vpack.c.b16 %v2452, %v2445
    %v2824 = vpack.c.b16 %v2453, %v2446
    %v2825 = vpack.c.b16 %v2454, %v2447
    %v2826 = vpack.c.b16 %v2455, %v2448
    %v2827 = vpack.c.b16 %v2456, %v2449
    %v2828 = vpack.c.b16 %v2457, %v2450
    %v2829 = vpack.c.b16 %v2465, %v2458
    %v2830 = vpack.c.b16 %v2466, %v2459
    %v2831 = vpack.c.b16 %v2467, %v2460
    %v2832 = vpack.c.b16 %v2468, %v2461
    %v2833 = vpack.c.b16 %v2469, %v2462
    %v2834 = vpack.c.b16 %v2470, %v2463
    %v2835 = vpack.c.b16 %v2471, %v2464
    %v2836 = vpack.c.b16 %v2479, %v2472
    %v2837 = vpack.c.b16 %v2480, %v2473
    %v2838 = vpack.c.b16 %v2481, %v2474
    %v2839 = vpack.c.b16 %v2482, %v2475
    %v2840 = vpack.c.b16 %v2483, %v2476
    %v2841 = vpack.c.b16 %v2484, %v2477
    %v2842 = vpack.c.b16 %v2485, %v2478
    %v2843 = vpack.c.b16 %v2493, %v2486
    %v2844 = vpack.c.b16 %v2494, %v2487
    %v2845 = vpack.c.b16 %v2495, %v2488
    %v2846 = vpack.c.b16 %v2496, %v2489
    %v2847 = vpack.c.b16 %v2497, %v2490
    %v2848 = vpack.c.b16 %v2498, %v2491
    %v2849 = vpack.c.b16 %v2499, %v2492
    %v2850 = vpack.c.b16 %v2507, %v2500
    %v2851 = vpack.c.b16 %v2508, %v2501
    %v2852 = vpack.c.b16 %v2509, %v2502
    %v2853 = vpack.c.b16 %v2510, %v2503
    %v2854 = vpack.c.b16 %v2511, %v2504
    %v2855 = vpack.c.b16 %v2512, %v2505
    %v2856 = vpack.c.b16 %v2513, %v2506
    %v2857 = vpack.c.b16 %v2521, %v2514
    %v2858 = vpack.c.b16 %v2522, %v2515
    %v2859 = vpack.c.b16 %v2523, %v2516
    %v2860 = vpack.c.b16 %v2524, %v2517
    %v2861 = vpack.c.b16 %v2525, %v2518
    %v2862 = vpack.c.b16 %v2526, %v2519
    %v2863 = vpack.c.b16 %v2527, %v2520
    %v2864 = vpack.c.b16 %v2535, %v2528
    %v2865 = vpack.c.b16 %v2536, %v2529
    %v2866 = vpack.c.b16 %v2537, %v2530
    %v2867 = vpack.c.b16 %v2538, %v2531
    %v2868 = vpack.c.b16 %v2539, %v2532
    %v2869 = vpack.c.b16 %v2540, %v2533
    %v2870 = vpack.c.b16 %v2541, %v2534
    %v2871 = vpack.c.b16 %v2549, %v2542
    %v2872 = vpack.c.b16 %v2550, %v2543
    %v2873 = vpack.c.b16 %v2551, %v2544
    %v2874 = vpack.c.b16 %v2552, %v2545
    %v2875 = vpack.c.b16 %v2553, %v2546
    %v2876 = vpack.c.b16 %v2554, %v2547
    %v2877 = vpack.c.b16 %v2555, %v2548
    %v2878 = vpack.c.b16 %v2563, %v2556
    %v2879 = vpack.c.b16 %v2564, %v2557
    %v2880 = vpack.c.b16 %v2565, %v2558
    %v2881 = vpack.c.b16 %v2566, %v2559
    %v2882 = vpack.c.b16 %v2567, %v2560
    %v2883 = vpack.c.b16 %v2568, %v2561
    %v2884 = vpack.c.b16 %v2569, %v2562
    %v2885 = vpack.c.b16 %v2577, %v2570
    %v2886 = vpack.c.b16 %v2578, %v2571
    %v2887 = vpack.c.b16 %v2579, %v2572
    %v2888 = vpack.c.b16 %v2580, %v2573
    %v2889 = vpack.c.b16 %v2581, %v2574
    %v2890 = vpack.c.b16 %v2582, %v2575
    %v2891 = vpack.c.b16 %v2583, %v2576
    %v2892 = vpack.c.b16 %v2591, %v2584
    %v2893 = vpack.c.b16 %v2592, %v2585
    %v2894 = vpack.c.b16 %v2593, %v2586
    %v2895 = vpack.c.b16 %v2594, %v2587
    %v2896 = vpack.c.b16 %v2595, %v2588
    %v2897 = vpack.c.b16 %v2596, %v2589
    %v2898 = vpack.c.b16 %v2597, %v2590
    %v2899 = vpack.c.b16 %v2605, %v2598
    %v2900 = vpack.c.b16 %v2606, %v2599
    %v2901 = vpack.c.b16 %v2607, %v2600
    %v2902 = vpack.c.b16 %v2608, %v2601
    %v2903 = vpack.c.b16 %v2609, %v2602
    %v2904 = vpack.c.b16 %v2610, %v2603
    %v2905 = vpack.c.b16 %v2611, %v2604
    %v2906 = vpack.c.b16 %v2619, %v2612
    %v2907 = vpack.c.b16 %v2620, %v2613
    %v2908 = vpack.c.b16 %v2621, %v2614
    %v2909 = vpack.c.b16 %v2622, %v2615
    %v2910 = vpack.c.b16 %v2623, %v2616
    %v2911 = vpack.c.b16 %v2624, %v2617
    %v2912 = vpack.c.b16 %v2625, %v2618
    %v2913 = vpack.c.b16 %v2633, %v2626
    %v2914 = vpack.c.b16 %v2634, %v2627
    %v2915 = vpack.c.b16 %v2635, %v2628
    %v2916 = vpack.c.b16 %v2636, %v2629
    %v2917 = vpack.c.b16 %v2637, %v2630
    %v2918 = vpack.c.b16 %v2638, %v2631
    %v2919 = vpack.c.b16 %v2639, %v2632
    %v2920 = vpack.c.b16 %v2647, %v2640
    %v2921 = vpack.c.b16 %v2648, %v2641
    %v2922 = vpack.c.b16 %v2649, %v2642
    %v2923 = vpack.c.b16 %v2650, %v2643
    %v2924 = vpack.c.b16 %v2651, %v2644
    %v2925 = vpack.c.b16 %v2652, %v2645
    %v2926 = vpack.c.b16 %v2653, %v2646
    %v2927 = vpack.c.b16 %v2661, %v2654
    %v2928 = vpack.c.b16 %v2662, %v2655
    %v2929 = vpack.c.b16 %v2663, %v2656
    %v2930 = vpack.c.b16 %v2664, %v2657
    %v2931 = vpack.c.b16 %v2665, %v2658
    %v2932 = vpack.c.b16 %v2666, %v2659
    %v2933 = vpack.c.b16 %v2667, %v2660
    %v2934 = vpack.c.b16 %v2675, %v2668
    %v2935 = vpack.c.b16 %v2676, %v2669
    %v2936 = vpack.c.b16 %v2677, %v2670
    %v2937 = vpack.c.b16 %v2678, %v2671
    %v2938 = vpack.c.b16 %v2679, %v2672
    %v2939 = vpack.c.b16 %v2680, %v2673
    %v2940 = vpack.c.b16 %v2681, %v2674
    %v2941 = vpack.c.b16 %v2689, %v2682
    %v2942 = vpack.c.b16 %v2690, %v2683
    %v2943 = vpack.c.b16 %v2691, %v2684
    %v2944 = vpack.c.b16 %v2692, %v2685
    %v2945 = vpack.c.b16 %v2693, %v2686
    %v2946 = vpack.c.b16 %v2694, %v2687
    %v2947 = vpack.c.b16 %v2695, %v2688
    %v2948 = vpack.c.b16 %v2703, %v2696
    %v2949 = vpack.c.b16 %v2704, %v2697
    %v2950 = vpack.c.b16 %v2705, %v2698
    %v2951 = vpack.c.b16 %v2706, %v2699
    %v2952 = vpack.c.b16 %v2707, %v2700
    %v2953 = vpack.c.b16 %v2708, %v2701
    %v2954 = vpack.c.b16 %v2709, %v2702
    %v2955 = vpack.c.b16 %v2717, %v2710
    %v2956 = vpack.c.b16 %v2718, %v2711
    %v2957 = vpack.c.b16 %v2719, %v2712
    %v2958 = vpack.c.b16 %v2720, %v2713
    %v2959 = vpack.c.b16 %v2721, %v2714
    %v2960 = vpack.c.b16 %v2722, %v2715
    %v2961 = vpack.c.b16 %v2723, %v2716
    %v2962 = vpack.c.b16 %v2731, %v2724
    %v2963 = vpack.c.b16 %v2732, %v2725
    %v2964 = vpack.c.b16 %v2733, %v2726
    %v2965 = vpack.c.b16 %v2734, %v2727
    %v2966 = vpack.c.b16 %v2735, %v2728
    %v2967 = vpack.c.b16 %v2736, %v2729
    %v2968 = vpack.c.b16 %v2737, %v2730
    %v2969 = vpack.c.b16 %v2745, %v2738
    %v2970 = vpack.c.b16 %v2746, %v2739
    %v2971 = vpack.c.b16 %v2747, %v2740
    %v2972 = vpack.c.b16 %v2748, %v2741
    %v2973 = vpack.c.b16 %v2749, %v2742
    %v2974 = vpack.c.b16 %v2750, %v2743
    %v2975 = vpack.c.b16 %v2751, %v2744
    %3200 = vmatprep.subr.bf16.mxu0 %v2753
    %3201 = vmatpush1.bf16.msra.mxu0 %v2752
    %3202 = vmatprep.subr.bf16.mxu0 %v2760
    %3203 = vmatpush1.bf16.msra.mxu0 %v2759
    %3204 = vmatprep.subr.bf16.mxu0 %v2767
    %3205 = vmatpush1.bf16.msra.mxu0 %v2766
    %3206 = vmatprep.subr.bf16.mxu0 %v2774
    %3207 = vmatpush1.bf16.msra.mxu0 %v2773
    %3208 = vmatprep.subr.bf16.mxu0 %v2781
    %3209 = vmatpush1.bf16.msra.mxu0 %v2780
    %3210 = vmatprep.subr.bf16.mxu0 %v2788
    %3211 = vmatpush1.bf16.msra.mxu0 %v2787
    %3212 = vmatprep.subr.bf16.mxu0 %v2795
    %3213 = vmatpush1.bf16.msra.mxu0 %v2794
    %3214 = vmatprep.subr.bf16.mxu0 %v2802
    %3215 = vmatpush1.bf16.msra.mxu0 %v2801
    %3216 = vmatprep.subr.bf16.mxu0 %v2809
    %3217 = vmatpush1.bf16.msra.mxu0 %v2808
    %3218 = vmatprep.subr.bf16.mxu0 %v2816
    %3219 = vmatpush1.bf16.msra.mxu0 %v2815
    %3220 = vmatprep.subr.bf16.mxu0 %v2823
    %3221 = vmatpush1.bf16.msra.mxu0 %v2822
    %3222 = vmatprep.subr.bf16.mxu0 %v2830
    %3223 = vmatpush1.bf16.msra.mxu0 %v2829
    %3224 = vmatprep.subr.bf16.mxu0 %v2837
    %3225 = vmatpush1.bf16.msra.mxu0 %v2836
    %3226 = vmatprep.subr.bf16.mxu0 %v2844
    %3227 = vmatpush1.bf16.msra.mxu0 %v2843
    %3228 = vmatprep.subr.bf16.mxu0 %v2851
    %3229 = vmatpush1.bf16.msra.mxu0 %v2850
    %3230 = vmatprep.subr.bf16.mxu0 %v2858
    %3231 = vmatpush1.bf16.msra.mxu0 %v2857
    %3232 = vmatprep.mubr.bf16.mxu0 %v1752
    %3233 = vmatmul.mubr.bf16.gmra.mrb[0].mxu0 %v1751
    %v3234 = vpop.f32.mrb[0].mxu0
    %v3235 = vadd.f32 %v2016, %v3234
    %v3236 = vpop.f32.mrb[0].mxu0
    %v3237 = vadd.f32 %v2020, %v3236
    %v3238 = vpop.f32.mrb[0].mxu0
    %v3239 = vpop.f32.mrb[0].mxu0
    %3240 = vdwg.mxu0
    %3241 = vmatprep.subr.bf16.mxu0 %v2865
    %3242 = vmatpush1.bf16.msra.mxu0 %v2864
    %3243 = vmatprep.subr.bf16.mxu0 %v2872
    %3244 = vmatpush1.bf16.msra.mxu0 %v2871
    %3245 = vmatprep.subr.bf16.mxu0 %v2879
    %3246 = vmatpush1.bf16.msra.mxu0 %v2878
    %3247 = vmatprep.subr.bf16.mxu0 %v2886
    %3248 = vmatpush1.bf16.msra.mxu0 %v2885
    %3249 = vmatprep.subr.bf16.mxu0 %v2893
    %3250 = vmatpush1.bf16.msra.mxu0 %v2892
    %3251 = vmatprep.subr.bf16.mxu0 %v2900
    %3252 = vmatpush1.bf16.msra.mxu0 %v2899
    %3253 = vmatprep.subr.bf16.mxu0 %v2907
    %3254 = vmatpush1.bf16.msra.mxu0 %v2906
    %3255 = vmatprep.subr.bf16.mxu0 %v2914
    %3256 = vmatpush1.bf16.msra.mxu0 %v2913
    %3257 = vmatprep.subr.bf16.mxu0 %v2921
    %3258 = vmatpush1.bf16.msra.mxu0 %v2920
    %3259 = vmatprep.subr.bf16.mxu0 %v2928
    %3260 = vmatpush1.bf16.msra.mxu0 %v2927
    %3261 = vmatprep.subr.bf16.mxu0 %v2935
    %3262 = vmatpush1.bf16.msra.mxu0 %v2934
    %3263 = vmatprep.subr.bf16.mxu0 %v2942
    %3264 = vmatpush1.bf16.msra.mxu0 %v2941
    %3265 = vmatprep.subr.bf16.mxu0 %v2949
    %3266 = vmatpush1.bf16.msra.mxu0 %v2948
    %3267 = vmatprep.subr.bf16.mxu0 %v2956
    %3268 = vmatpush1.bf16.msra.mxu0 %v2955
    %3269 = vmatprep.subr.bf16.mxu0 %v2963
    %3270 = vmatpush1.bf16.msra.mxu0 %v2962
    %3271 = vmatprep.subr.bf16.mxu0 %v2970
    %3272 = vmatpush1.bf16.msra.mxu0 %v2969
    %3273 = vmatprep.mubr.bf16.mxu0 %v1754
    %3274 = vmatmul.mubr.bf16.gmra.mrb[0].mxu0 %v1753
    %v3275 = vpop.f32.mrb[0].mxu0
    %v3276 = vadd.f32 %v3235, %v3275
    %v3277 = vpop.f32.mrb[0].mxu0
    %v3278 = vadd.f32 %v3237, %v3277
    %v3279 = vpop.f32.mrb[0].mxu0
    %v3280 = vpop.f32.mrb[0].mxu0
    %3281 = vdwg.mxu0
    %3282 = vmatprep.subr.bf16.mxu0 %v2755
    %3283 = vmatpush1.bf16.msra.mxu0 %v2754
    %3284 = vmatprep.subr.bf16.mxu0 %v2762
    %3285 = vmatpush1.bf16.msra.mxu0 %v2761
    %3286 = vmatprep.subr.bf16.mxu0 %v2769
    %3287 = vmatpush1.bf16.msra.mxu0 %v2768
    %3288 = vmatprep.subr.bf16.mxu0 %v2776
    %3289 = vmatpush1.bf16.msra.mxu0 %v2775
    %3290 = vmatprep.subr.bf16.mxu0 %v2783
    %3291 = vmatpush1.bf16.msra.mxu0 %v2782
    %3292 = vmatprep.subr.bf16.mxu0 %v2790
    %3293 = vmatpush1.bf16.msra.mxu0 %v2789
    %3294 = vmatprep.subr.bf16.mxu0 %v2797
    %3295 = vmatpush1.bf16.msra.mxu0 %v2796
    %3296 = vmatprep.subr.bf16.mxu0 %v2804
    %3297 = vmatpush1.bf16.msra.mxu0 %v2803
    %3298 = vmatprep.subr.bf16.mxu0 %v2811
    %3299 = vmatpush1.bf16.msra.mxu0 %v2810
    %3300 = vmatprep.subr.bf16.mxu0 %v2818
    %3301 = vmatpush1.bf16.msra.mxu0 %v2817
    %3302 = vmatprep.subr.bf16.mxu0 %v2825
    %3303 = vmatpush1.bf16.msra.mxu0 %v2824
    %3304 = vmatprep.subr.bf16.mxu0 %v2832
    %3305 = vmatpush1.bf16.msra.mxu0 %v2831
    %3306 = vmatprep.subr.bf16.mxu0 %v2839
    %3307 = vmatpush1.bf16.msra.mxu0 %v2838
    %3308 = vmatprep.subr.bf16.mxu0 %v2846
    %3309 = vmatpush1.bf16.msra.mxu0 %v2845
    %3310 = vmatprep.subr.bf16.mxu0 %v2853
    %3311 = vmatpush1.bf16.msra.mxu0 %v2852
    %3312 = vmatprep.subr.bf16.mxu0 %v2860
    %3313 = vmatpush1.bf16.msra.mxu0 %v2859
    %3314 = vmatprep.mubr.bf16.mxu0 %v1752
    %3315 = vmatmul.mubr.bf16.gmra.mrb[0].mxu0 %v1751
    %v3316 = vpop.f32.mrb[0].mxu0
    %v3317 = vadd.f32 %v2024, %v3316
    %v3318 = vpop.f32.mrb[0].mxu0
    %v3319 = vadd.f32 %v2028, %v3318
    %v3320 = vpop.f32.mrb[0].mxu0
    %v3321 = vpop.f32.mrb[0].mxu0
    %3322 = vdwg.mxu0
    %3323 = vmatprep.subr.bf16.mxu0 %v2867
    %3324 = vmatpush1.bf16.msra.mxu0 %v2866
    %3325 = vmatprep.subr.bf16.mxu0 %v2874
    %3326 = vmatpush1.bf16.msra.mxu0 %v2873
    %3327 = vmatprep.subr.bf16.mxu0 %v2881
    %3328 = vmatpush1.bf16.msra.mxu0 %v2880
    %3329 = vmatprep.subr.bf16.mxu0 %v2888
    %3330 = vmatpush1.bf16.msra.mxu0 %v2887
    %3331 = vmatprep.subr.bf16.mxu0 %v2895
    %3332 = vmatpush1.bf16.msra.mxu0 %v2894
    %3333 = vmatprep.subr.bf16.mxu0 %v2902
    %3334 = vmatpush1.bf16.msra.mxu0 %v2901
    %3335 = vmatprep.subr.bf16.mxu0 %v2909
    %3336 = vmatpush1.bf16.msra.mxu0 %v2908
    %3337 = vmatprep.subr.bf16.mxu0 %v2916
    %3338 = vmatpush1.bf16.msra.mxu0 %v2915
    %3339 = vmatprep.subr.bf16.mxu0 %v2923
    %3340 = vmatpush1.bf16.msra.mxu0 %v2922
    %3341 = vmatprep.subr.bf16.mxu0 %v2930
    %3342 = vmatpush1.bf16.msra.mxu0 %v2929
    %3343 = vmatprep.subr.bf16.mxu0 %v2937
    %3344 = vmatpush1.bf16.msra.mxu0 %v2936
    %3345 = vmatprep.subr.bf16.mxu0 %v2944
    %3346 = vmatpush1.bf16.msra.mxu0 %v2943
    %3347 = vmatprep.subr.bf16.mxu0 %v2951
    %3348 = vmatpush1.bf16.msra.mxu0 %v2950
    %3349 = vmatprep.subr.bf16.mxu0 %v2958
    %3350 = vmatpush1.bf16.msra.mxu0 %v2957
    %3351 = vmatprep.subr.bf16.mxu0 %v2965
    %3352 = vmatpush1.bf16.msra.mxu0 %v2964
    %3353 = vmatprep.subr.bf16.mxu0 %v2972
    %3354 = vmatpush1.bf16.msra.mxu0 %v2971
    %3355 = vmatprep.mubr.bf16.mxu0 %v1754
    %3356 = vmatmul.mubr.bf16.gmra.mrb[0].mxu0 %v1753
    %v3357 = vpop.f32.mrb[0].mxu0
    %v3358 = vadd.f32 %v3317, %v3357
    %v3359 = vpop.f32.mrb[0].mxu0
    %v3360 = vadd.f32 %v3319, %v3359
    %v3361 = vpop.f32.mrb[0].mxu0
    %v3362 = vpop.f32.mrb[0].mxu0
    %3363 = vdwg.mxu0
    %3364 = vmatprep.subr.bf16.mxu0 %v2757
    %3365 = vmatpush1.bf16.msra.mxu0 %v2756
    %3366 = vmatprep.subr.bf16.mxu0 %v2764
    %3367 = vmatpush1.bf16.msra.mxu0 %v2763
    %3368 = vmatprep.subr.bf16.mxu0 %v2771
    %3369 = vmatpush1.bf16.msra.mxu0 %v2770
    %3370 = vmatprep.subr.bf16.mxu0 %v2778
    %3371 = vmatpush1.bf16.msra.mxu0 %v2777
    %3372 = vmatprep.subr.bf16.mxu0 %v2785
    %3373 = vmatpush1.bf16.msra.mxu0 %v2784
    %3374 = vmatprep.subr.bf16.mxu0 %v2792
    %3375 = vmatpush1.bf16.msra.mxu0 %v2791
    %3376 = vmatprep.subr.bf16.mxu0 %v2799
    %3377 = vmatpush1.bf16.msra.mxu0 %v2798
    %3378 = vmatprep.subr.bf16.mxu0 %v2806
    %3379 = vmatpush1.bf16.msra.mxu0 %v2805
    %3380 = vmatprep.subr.bf16.mxu0 %v2813
    %3381 = vmatpush1.bf16.msra.mxu0 %v2812
    %3382 = vmatprep.subr.bf16.mxu0 %v2820
    %3383 = vmatpush1.bf16.msra.mxu0 %v2819
    %3384 = vmatprep.subr.bf16.mxu0 %v2827
    %3385 = vmatpush1.bf16.msra.mxu0 %v2826
    %3386 = vmatprep.subr.bf16.mxu0 %v2834
    %3387 = vmatpush1.bf16.msra.mxu0 %v2833
    %3388 = vmatprep.subr.bf16.mxu0 %v2841
    %3389 = vmatpush1.bf16.msra.mxu0 %v2840
    %3390 = vmatprep.subr.bf16.mxu0 %v2848
    %3391 = vmatpush1.bf16.msra.mxu0 %v2847
    %3392 = vmatprep.subr.bf16.mxu0 %v2855
    %3393 = vmatpush1.bf16.msra.mxu0 %v2854
    %3394 = vmatprep.subr.bf16.mxu0 %v2862
    %3395 = vmatpush1.bf16.msra.mxu0 %v2861
    %3396 = vmatprep.mubr.bf16.mxu0 %v1752
    %3397 = vmatmul.mubr.bf16.gmra.mrb[0].mxu0 %v1751
    %v3398 = vpop.f32.mrb[0].mxu0
    %v3399 = vadd.f32 %v2032, %v3398
    %v3400 = vpop.f32.mrb[0].mxu0
    %v3401 = vadd.f32 %v2036, %v3400
    %v3402 = vpop.f32.mrb[0].mxu0
    %v3403 = vpop.f32.mrb[0].mxu0
    %3404 = vdwg.mxu0
    %3405 = vmatprep.subr.bf16.mxu0 %v2869
    %3406 = vmatpush1.bf16.msra.mxu0 %v2868
    %3407 = vmatprep.subr.bf16.mxu0 %v2876
    %3408 = vmatpush1.bf16.msra.mxu0 %v2875
    %3409 = vmatprep.subr.bf16.mxu0 %v2883
    %3410 = vmatpush1.bf16.msra.mxu0 %v2882
    %3411 = vmatprep.subr.bf16.mxu0 %v2890
    %3412 = vmatpush1.bf16.msra.mxu0 %v2889
    %3413 = vmatprep.subr.bf16.mxu0 %v2897
    %3414 = vmatpush1.bf16.msra.mxu0 %v2896
    %3415 = vmatprep.subr.bf16.mxu0 %v2904
    %3416 = vmatpush1.bf16.msra.mxu0 %v2903
    %3417 = vmatprep.subr.bf16.mxu0 %v2911
    %3418 = vmatpush1.bf16.msra.mxu0 %v2910
    %3419 = vmatprep.subr.bf16.mxu0 %v2918
    %3420 = vmatpush1.bf16.msra.mxu0 %v2917
    %3421 = vmatprep.subr.bf16.mxu0 %v2925
    %3422 = vmatpush1.bf16.msra.mxu0 %v2924
    %3423 = vmatprep.subr.bf16.mxu0 %v2932
    %3424 = vmatpush1.bf16.msra.mxu0 %v2931
    %3425 = vmatprep.subr.bf16.mxu0 %v2939
    %3426 = vmatpush1.bf16.msra.mxu0 %v2938
    %3427 = vmatprep.subr.bf16.mxu0 %v2946
    %3428 = vmatpush1.bf16.msra.mxu0 %v2945
    %3429 = vmatprep.subr.bf16.mxu0 %v2953
    %3430 = vmatpush1.bf16.msra.mxu0 %v2952
    %3431 = vmatprep.subr.bf16.mxu0 %v2960
    %3432 = vmatpush1.bf16.msra.mxu0 %v2959
    %3433 = vmatprep.subr.bf16.mxu0 %v2967
    %3434 = vmatpush1.bf16.msra.mxu0 %v2966
    %3435 = vmatprep.subr.bf16.mxu0 %v2974
    %3436 = vmatpush1.bf16.msra.mxu0 %v2973
    %3437 = vmatprep.mubr.bf16.mxu0 %v1754
    %3438 = vmatmul.mubr.bf16.gmra.mrb[0].mxu0 %v1753
    %v3439 = vpop.f32.mrb[0].mxu0
    %v3440 = vadd.f32 %v3399, %v3439
    %v3441 = vpop.f32.mrb[0].mxu0
    %v3442 = vadd.f32 %v3401, %v3441
    %v3443 = vpop.f32.mrb[0].mxu0
    %v3444 = vpop.f32.mrb[0].mxu0
    %3445 = vdwg.mxu0
    %3446 = vmatprep.subr.bf16.mxu0 0
    %3447 = vmatpush1.bf16.msra.mxu0 %v2758
    %3448 = vmatprep.subr.bf16.mxu0 0
    %3449 = vmatpush1.bf16.msra.mxu0 %v2765
    %3450 = vmatprep.subr.bf16.mxu0 0
    %3451 = vmatpush1.bf16.msra.mxu0 %v2772
    %3452 = vmatprep.subr.bf16.mxu0 0
    %3453 = vmatpush1.bf16.msra.mxu0 %v2779
    %3454 = vmatprep.subr.bf16.mxu0 0
    %3455 = vmatpush1.bf16.msra.mxu0 %v2786
    %3456 = vmatprep.subr.bf16.mxu0 0
    %3457 = vmatpush1.bf16.msra.mxu0 %v2793
    %3458 = vmatprep.subr.bf16.mxu0 0
    %3459 = vmatpush1.bf16.msra.mxu0 %v2800
    %3460 = vmatprep.subr.bf16.mxu0 0
    %3461 = vmatpush1.bf16.msra.mxu0 %v2807
    %3462 = vmatprep.subr.bf16.mxu0 0
    %3463 = vmatpush1.bf16.msra.mxu0 %v2814
    %3464 = vmatprep.subr.bf16.mxu0 0
    %3465 = vmatpush1.bf16.msra.mxu0 %v2821
    %3466 = vmatprep.subr.bf16.mxu0 0
    %3467 = vmatpush1.bf16.msra.mxu0 %v2828
    %3468 = vmatprep.subr.bf16.mxu0 0
    %3469 = vmatpush1.bf16.msra.mxu0 %v2835
    %3470 = vmatprep.subr.bf16.mxu0 0
    %3471 = vmatpush1.bf16.msra.mxu0 %v2842
    %3472 = vmatprep.subr.bf16.mxu0 0
    %3473 = vmatpush1.bf16.msra.mxu0 %v2849
    %3474 = vmatprep.subr.bf16.mxu0 0
    %3475 = vmatpush1.bf16.msra.mxu0 %v2856
    %3476 = vmatprep.subr.bf16.mxu0 0
    %3477 = vmatpush1.bf16.msra.mxu0 %v2863
    %3478 = vmatprep.mubr.bf16.mxu0 %v1752
    %3479 = vmatmul.mubr.bf16.gmra.mrb[0].mxu0 %v1751
    %v3480 = vpop.f32.mrb[0].mxu0
    %v3481 = vadd.f32 %v2040, %v3480
    %v3482 = vpop.f32.mrb[0].mxu0
    %v3483 = vpop.f32.mrb[0].mxu0
    %v3484 = vpop.f32.mrb[0].mxu0
    %3485 = vdwg.mxu0
    %3486 = vmatprep.subr.bf16.mxu0 0
    %3487 = vmatpush1.bf16.msra.mxu0 %v2870
    %3488 = vmatprep.subr.bf16.mxu0 0
    %3489 = vmatpush1.bf16.msra.mxu0 %v2877
    %3490 = vmatprep.subr.bf16.mxu0 0
    %3491 = vmatpush1.bf16.msra.mxu0 %v2884
    %3492 = vmatprep.subr.bf16.mxu0 0
    %3493 = vmatpush1.bf16.msra.mxu0 %v2891
    %3494 = vmatprep.subr.bf16.mxu0 0
    %3495 = vmatpush1.bf16.msra.mxu0 %v2898
    %3496 = vmatprep.subr.bf16.mxu0 0
    %3497 = vmatpush1.bf16.msra.mxu0 %v2905
    %3498 = vmatprep.subr.bf16.mxu0 0
    %3499 = vmatpush1.bf16.msra.mxu0 %v2912
    %3500 = vmatprep.subr.bf16.mxu0 0
    %3501 = vmatpush1.bf16.msra.mxu0 %v2919
    %3502 = vmatprep.subr.bf16.mxu0 0
    %3503 = vmatpush1.bf16.msra.mxu0 %v2926
    %3504 = vmatprep.subr.bf16.mxu0 0
    %3505 = vmatpush1.bf16.msra.mxu0 %v2933
    %3506 = vmatprep.subr.bf16.mxu0 0
    %3507 = vmatpush1.bf16.msra.mxu0 %v2940
    %3508 = vmatprep.subr.bf16.mxu0 0
    %3509 = vmatpush1.bf16.msra.mxu0 %v2947
    %3510 = vmatprep.subr.bf16.mxu0 0
    %3511 = vmatpush1.bf16.msra.mxu0 %v2954
    %3512 = vmatprep.subr.bf16.mxu0 0
    %3513 = vmatpush1.bf16.msra.mxu0 %v2961
    %3514 = vmatprep.subr.bf16.mxu0 0
    %3515 = vmatpush1.bf16.msra.mxu0 %v2968
    %3516 = vmatprep.subr.bf16.mxu0 0
    %3517 = vmatpush1.bf16.msra.mxu0 %v2975
    %3518 = vmatprep.mubr.bf16.mxu0 %v1754
    %3519 = vmatmul.mubr.bf16.gmra.mrb[0].mxu0 %v1753
    %v3520 = vpop.f32.mrb[0].mxu0
    %v3521 = vadd.f32 %v3481, %v3520
    %v3522 = vpop.f32.mrb[0].mxu0
    %v3523 = vpop.f32.mrb[0].mxu0
    %v3524 = vpop.f32.mrb[0].mxu0
    %3525 = vdwg.mxu0
    %v3526 = vmul.f32 %v3276, 0.5
    %v3527 = vmul.f32 %v3278, 0.5
    %v3528 = vmul.f32 %v3358, 0.5
    %v3529 = vmul.f32 %v3360, 0.5
    %v3530 = vmul.f32 %v3440, 0.5
    %v3531 = vmul.f32 %v3442, 0.5
    %v3532 = vmul.f32 %v3521, 0.5
    %v3533 = vtanh.pop %v3526
    %v3534 = vtanh.pop %v3527
    %v3535 = vtanh.pop %v3528
    %v3536 = vtanh.pop %v3529
    %v3537 = vtanh.pop %v3530
    %v3538 = vtanh.pop %v3531
    %v3539 = vtanh.pop %v3532
    %v3540 = vadd.f32 %v3533, 1.0
    %v3541 = vadd.f32 %v3534, 1.0
    %v3542 = vadd.f32 %v3535, 1.0
    %v3543 = vadd.f32 %v3536, 1.0
    %v3544 = vadd.f32 %v3537, 1.0
    %v3545 = vadd.f32 %v3538, 1.0
    %v3546 = vadd.f32 %v3539, 1.0
    %v3547 = vmul.f32 %v3540, 0.5
    %v3548 = vmul.f32 %v3541, 0.5
    %v3549 = vmul.f32 %v3542, 0.5
    %v3550 = vmul.f32 %v3543, 0.5
    %v3551 = vmul.f32 %v3544, 0.5
    %v3552 = vmul.f32 %v3545, 0.5
    %v3553 = vmul.f32 %v3546, 0.5
    %3554 = vst [vmem:[#allocation2] sm:$0xff] %v3547
    %3555 = vst [vmem:[#allocation2 + $0x8] sm:$0xff] %v3548
    %3556 = vst [vmem:[#allocation2 + $0x10] sm:$0xff] %v3549
    %3557 = vst [vmem:[#allocation2 + $0x18] sm:$0xff] %v3550
    %3558 = vst [vmem:[#allocation2 + $0x20] sm:$0xff] %v3551
    %3559 = vst [vmem:[#allocation2 + $0x28] sm:$0xff] %v3552
    %3560 = vst.msk [vmem:[#allocation2 + $0x30] sm:$0xff] %vm1246, %v3553
    // Predicated region
    $region38: #{tpu_custom_call.1} parent=1 // pred_check
      _
    $region39: #{tpu_custom_call.1} parent=1 // pred_check_branch
      %3562 = sbr.rel (0) target = $region41
    $region40: #{tpu_custom_call.1} parent=1 // pred_region
      %s3564 = ssub.s32 896, 896
      %3565 = vsyncadd [#allocation3], %s3564
      %s3567 = sshll.u32 [#allocation2], 4
      %s3568 = int_to_ptr.vmem [resolvable:$true] %s3567
      %3570 = dma.vmem_to_hbm [thread:$0]  %s3568, 896, %s9, [#allocation3]
    $region41: #{tpu_custom_call.1} parent=1 // pred_fallthru
      _
    // Predicated region
    $region42: #{tpu_custom_call.1} parent=1 // pred_check
      _
    $region43: #{tpu_custom_call.1} parent=1 // pred_check_branch
      %3572 = sbr.rel (0) target = $region45
    $region44: #{tpu_custom_call.1} parent=1 // pred_region
      %3573 = dma.done [#allocation3], 896
    $region45: #{tpu_custom_call.1} parent=1 // pred_fallthru
      _
    %3574 = vsyncpa [#allocation3], 1

// kernel: tpu_custom_call.1
$region0: #{tpu_custom_call.1}
  #allocation0 [shape = 'u32[]', space=smem, size = 0x4, offset = 0x4, fixed_abs, tag = 'smem constant byte address 0x4 - core index']
  #allocation1 [shape = 'u32[144,128]{1,0:T(1,128)}', space=vmem, size = 0x12000, scoped, tag = 'internal scratch']
  %s0 = inlined_call_operand.vmem [shape: f32[8,784], index: 0, kind: input, shape index: {}]
  %s1 = inlined_call_operand.vmem [shape: bf16[784,512], index: 1, kind: input, shape index: {}]
  %s2 = inlined_call_operand.vmem [shape: f32[1,512], index: 2, kind: input, shape index: {}]
  %s3 = inlined_call_operand.vmem [shape: f32[2,512], index: 3, kind: input, shape index: {}]
  %s4 = inlined_call_operand.vmem [shape: f32[1,2], index: 4, kind: input, shape index: {}]
  %s5 = inlined_call_operand.vmem [shape: f32[2,512], index: 5, kind: input, shape index: {}]
  %s6 = inlined_call_operand.vmem [shape: f32[1,512], index: 6, kind: input, shape index: {}]
  %s7 = inlined_call_operand.vmem [shape: bf16[512,784], index: 7, kind: input, shape index: {}]
  %s8 = inlined_call_operand.vmem [shape: f32[1,784], index: 8, kind: input, shape index: {}]
  %s9 = inlined_call_operand.hbm [shape: f32[8,784], index: 9, kind: output, shape index: {}]
  %s10 = sld [smem:[#allocation0]]
  $region46: #{tpu_custom_call.1} parent=0
    _
  %s12 = ssub.s32 1, %s10
  %s13 = scalar_select 0, %s12, %s10
  $region1: #{tpu_custom_call.1} parent=0
    #allocation2 [shape = 'u8[28672]{0}', space=vmem, size = 0x7000, scoped, tag = 'output window, operand 0, single buffered']
    #allocation3 [shape = 's32[1]{0}', space=sflag, size = 0x4, scoped, tag = 'scoped memory for tpu_custom_call.1']
    %14 = vsyncpa [#allocation3], 0
    // Predicated region
    $region2: #{tpu_custom_call.1} parent=1 // pred_check
      _
    $region3: #{tpu_custom_call.1} parent=1 // pred_check_branch
      %16 = sbr.rel (0) target = $region5
    $region4: #{tpu_custom_call.1} parent=1 // pred_region
      _
    $region5: #{tpu_custom_call.1} parent=1 // pred_fallthru
      _
    // Predicated region
    $region6: #{tpu_custom_call.1} parent=1 // pred_check
      _
    $region7: #{tpu_custom_call.1} parent=1 // pred_check_branch
      %18 = sbr.rel (0) target = $region9
    $region8: #{tpu_custom_call.1} parent=1 // pred_region
      _
    $region9: #{tpu_custom_call.1} parent=1 // pred_fallthru
      _
    // Predicated region
    $region10: #{tpu_custom_call.1} parent=1 // pred_check
      _
    $region11: #{tpu_custom_call.1} parent=1 // pred_check_branch
      %20 = sbr.rel (0) target = $region13
    $region12: #{tpu_custom_call.1} parent=1 // pred_region
      _
    $region13: #{tpu_custom_call.1} parent=1 // pred_fallthru
      _
    // Predicated region
    $region14: #{tpu_custom_call.1} parent=1 // pred_check
      _
    $region15: #{tpu_custom_call.1} parent=1 // pred_check_branch
      %22 = sbr.rel (0) target = $region17
    $region16: #{tpu_custom_call.1} parent=1 // pred_region
      _
    $region17: #{tpu_custom_call.1} parent=1 // pred_fallthru
      _
    // Predicated region
    $region18: #{tpu_custom_call.1} parent=1 // pred_check
      _
    $region19: #{tpu_custom_call.1} parent=1 // pred_check_branch
      %24 = sbr.rel (0) target = $region21
    $region20: #{tpu_custom_call.1} parent=1 // pred_region
      _
    $region21: #{tpu_custom_call.1} parent=1 // pred_fallthru
      _
    // Predicated region
    $region22: #{tpu_custom_call.1} parent=1 // pred_check
      _
    $region23: #{tpu_custom_call.1} parent=1 // pred_check_branch
      %26 = sbr.rel (0) target = $region25
    $region24: #{tpu_custom_call.1} parent=1 // pred_region
      _
    $region25: #{tpu_custom_call.1} parent=1 // pred_fallthru
      _
    // Predicated region
    $region26: #{tpu_custom_call.1} parent=1 // pred_check
      _
    $region27: #{tpu_custom_call.1} parent=1 // pred_check_branch
      %28 = sbr.rel (0) target = $region29
    $region28: #{tpu_custom_call.1} parent=1 // pred_region
      _
    $region29: #{tpu_custom_call.1} parent=1 // pred_fallthru
      _
    // Predicated region
    $region30: #{tpu_custom_call.1} parent=1 // pred_check
      _
    $region31: #{tpu_custom_call.1} parent=1 // pred_check_branch
      %30 = sbr.rel (0) target = $region33
    $region32: #{tpu_custom_call.1} parent=1 // pred_region
      _
    $region33: #{tpu_custom_call.1} parent=1 // pred_fallthru
      _
    // Predicated region
    $region34: #{tpu_custom_call.1} parent=1 // pred_check
      _
    $region35: #{tpu_custom_call.1} parent=1 // pred_check_branch
      %32 = sbr.rel (0) target = $region37
    $region36: #{tpu_custom_call.1} parent=1 // pred_region
      _
    $region37: #{tpu_custom_call.1} parent=1 // pred_fallthru
      _
    %v34 = vld [vmem:[%s0] sm:$0xff]
    %v35 = vld [vmem:[%s0 + $0x8] sm:$0xff]
    %v36 = vld [vmem:[%s0 + $0x10] sm:$0xff]
    %v37 = vld [vmem:[%s0 + $0x18] sm:$0xff]
    %v38 = vld [vmem:[%s0 + $0x20] sm:$0xff]
    %v39 = vld [vmem:[%s0 + $0x28] sm:$0xff]
    %v40 = vld [vmem:[%s0 + $0x30] sm:$0xff]
    %v41 = vpack.c.bf16 %v34, %v34
    %v42 = vpack.c.bf16 %v35, %v35
    %v43 = vpack.c.bf16 %v36, %v36
    %v44 = vpack.c.bf16 %v37, %v37
    %v45 = vpack.c.bf16 %v38, %v38
    %v46 = vpack.c.bf16 %v39, %v39
    %v47 = vpack.c.bf16 %v40, %v40
    %v48 = vld [vmem:[%s1] sm:$0xff]
    %v49 = vld [vmem:[%s1 + $0x8] sm:$0xff]
    %v50 = vld [vmem:[%s1 + $0x10] sm:$0xff]
    %v51 = vld [vmem:[%s1 + $0x18] sm:$0xff]
    %v52 = vld [vmem:[%s1 + $0x20] sm:$0xff]
    %v53 = vld [vmem:[%s1 + $0x28] sm:$0xff]
    %v54 = vld [vmem:[%s1 + $0x30] sm:$0xff]
    %v55 = vld [vmem:[%s1 + $0x38] sm:$0xff]
    %v56 = vld [vmem:[%s1 + $0x40] sm:$0xff]
    %v57 = vld [vmem:[%s1 + $0x48] sm:$0xff]
    %v58 = vld [vmem:[%s1 + $0x50] sm:$0xff]
    %v59 = vld [vmem:[%s1 + $0x58] sm:$0xff]
    %v60 = vld [vmem:[%s1 + $0x60] sm:$0xff]
    %v61 = vld [vmem:[%s1 + $0x68] sm:$0xff]
    %v62 = vld [vmem:[%s1 + $0x70] sm:$0xff]
    %v63 = vld [vmem:[%s1 + $0x78] sm:$0xff]
    %v64 = vld [vmem:[%s1 + $0x80] sm:$0xff]
    %v65 = vld [vmem:[%s1 + $0x88] sm:$0xff]
    %v66 = vld [vmem:[%s1 + $0x90] sm:$0xff]
    %v67 = vld [vmem:[%s1 + $0x98] sm:$0xff]
    %v68 = vld [vmem:[%s1 + $0xa0] sm:$0xff]
    %v69 = vld [vmem:[%s1 + $0xa8] sm:$0xff]
    %v70 = vld [vmem:[%s1 + $0xb0] sm:$0xff]
    %v71 = vld [vmem:[%s1 + $0xb8] sm:$0xff]
    %v72 = vld [vmem:[%s1 + $0xc0] sm:$0xff]
    %v73 = vld [vmem:[%s1 + $0xc8] sm:$0xff]
    %v74 = vld [vmem:[%s1 + $0xd0] sm:$0xff]
    %v75 = vld [vmem:[%s1 + $0xd8] sm:$0xff]
    %v76 = vld [vmem:[%s1 + $0xe0] sm:$0xff]
    %v77 = vld [vmem:[%s1 + $0xe8] sm:$0xff]
    %v78 = vld [vmem:[%s1 + $0xf0] sm:$0xff]
    %v79 = vld [vmem:[%s1 + $0xf8] sm:$0xff]
    %v80 = vld [vmem:[%s1 + $0x100] sm:$0xff]
    %v81 = vld [vmem:[%s1 + $0x108] sm:$0xff]
    %v82 = vld [vmem:[%s1 + $0x110] sm:$0xff]
    %v83 = vld [vmem:[%s1 + $0x118] sm:$0xff]
    %v84 = vld [vmem:[%s1 + $0x120] sm:$0xff]
    %v85 = vld [vmem:[%s1 + $0x128] sm:$0xff]
    %v86 = vld [vmem:[%s1 + $0x130] sm:$0xff]
    %v87 = vld [vmem:[%s1 + $0x138] sm:$0xff]
    %v88 = vld [vmem:[%s1 + $0x140] sm:$0xff]
    %v89 = vld [vmem:[%s1 + $0x148] sm:$0xff]
    %v90 = vld [vmem:[%s1 + $0x150] sm:$0xff]
    %v91 = vld [vmem:[%s1 + $0x158] sm:$0xff]
    %v92 = vld [vmem:[%s1 + $0x160] sm:$0xff]
    %v93 = vld [vmem:[%s1 + $0x168] sm:$0xff]
    %v94 = vld [vmem:[%s1 + $0x170] sm:$0xff]
    %v95 = vld [vmem:[%s1 + $0x178] sm:$0xff]
    %v96 = vld [vmem:[%s1 + $0x180] sm:$0xff]
    %v97 = vld [vmem:[%s1 + $0x188] sm:$0xff]
    %v98 = vld [vmem:[%s1 + $0x190] sm:$0xff]
    %v99 = vld [vmem:[%s1 + $0x198] sm:$0xff]
    %v100 = vld [vmem:[%s1 + $0x1a0] sm:$0xff]
    %v101 = vld [vmem:[%s1 + $0x1a8] sm:$0xff]
    %v102 = vld [vmem:[%s1 + $0x1b0] sm:$0xff]
    %v103 = vld [vmem:[%s1 + $0x1b8] sm:$0xff]
    %v104 = vld [vmem:[%s1 + $0x1c0] sm:$0xff]
    %v105 = vld [vmem:[%s1 + $0x1c8] sm:$0xff]
    %v106 = vld [vmem:[%s1 + $0x1d0] sm:$0xff]
    %v107 = vld [vmem:[%s1 + $0x1d8] sm:$0xff]
    %v108 = vld [vmem:[%s1 + $0x1e0] sm:$0xff]
    %v109 = vld [vmem:[%s1 + $0x1e8] sm:$0xff]
    %v110 = vld [vmem:[%s1 + $0x1f0] sm:$0xff]
    %v111 = vld [vmem:[%s1 + $0x1f8] sm:$0xff]
    %v112 = vld [vmem:[%s1 + $0x200] sm:$0xff]
    %v113 = vld [vmem:[%s1 + $0x208] sm:$0xff]
    %v114 = vld [vmem:[%s1 + $0x210] sm:$0xff]
    %v115 = vld [vmem:[%s1 + $0x218] sm:$0xff]
    %v116 = vld [vmem:[%s1 + $0x220] sm:$0xff]
    %v117 = vld [vmem:[%s1 + $0x228] sm:$0xff]
    %v118 = vld [vmem:[%s1 + $0x230] sm:$0xff]
    %v119 = vld [vmem:[%s1 + $0x238] sm:$0xff]
    %v120 = vld [vmem:[%s1 + $0x240] sm:$0xff]
    %v121 = vld [vmem:[%s1 + $0x248] sm:$0xff]
    %v122 = vld [vmem:[%s1 + $0x250] sm:$0xff]
    %v123 = vld [vmem:[%s1 + $0x258] sm:$0xff]
    %v124 = vld [vmem:[%s1 + $0x260] sm:$0xff]
    %v125 = vld [vmem:[%s1 + $0x268] sm:$0xff]
    %v126 = vld [vmem:[%s1 + $0x270] sm:$0xff]
    %v127 = vld [vmem:[%s1 + $0x278] sm:$0xff]
    %v128 = vld [vmem:[%s1 + $0x280] sm:$0xff]
    %v129 = vld [vmem:[%s1 + $0x288] sm:$0xff]
    %v130 = vld [vmem:[%s1 + $0x290] sm:$0xff]
    %v131 = vld [vmem:[%s1 + $0x298] sm:$0xff]
    %v132 = vld [vmem:[%s1 + $0x2a0] sm:$0xff]
    %v133 = vld [vmem:[%s1 + $0x2a8] sm:$0xff]
    %v134 = vld [vmem:[%s1 + $0x2b0] sm:$0xff]
    %v135 = vld [vmem:[%s1 + $0x2b8] sm:$0xff]
    %v136 = vld [vmem:[%s1 + $0x2c0] sm:$0xff]
    %v137 = vld [vmem:[%s1 + $0x2c8] sm:$0xff]
    %v138 = vld [vmem:[%s1 + $0x2d0] sm:$0xff]
    %v139 = vld [vmem:[%s1 + $0x2d8] sm:$0xff]
    %v140 = vld [vmem:[%s1 + $0x2e0] sm:$0xff]
    %v141 = vld [vmem:[%s1 + $0x2e8] sm:$0xff]
    %v142 = vld [vmem:[%s1 + $0x2f0] sm:$0xff]
    %v143 = vld [vmem:[%s1 + $0x2f8] sm:$0xff]
    %v144 = vld [vmem:[%s1 + $0x300] sm:$0xff]
    %v145 = vld [vmem:[%s1 + $0x308] sm:$0xff]
    %v146 = vld [vmem:[%s1 + $0x310] sm:$0xff]
    %v147 = vld [vmem:[%s1 + $0x318] sm:$0xff]
    %v148 = vld [vmem:[%s1 + $0x320] sm:$0xff]
    %v149 = vld [vmem:[%s1 + $0x328] sm:$0xff]
    %v150 = vld [vmem:[%s1 + $0x330] sm:$0xff]
    %v151 = vld [vmem:[%s1 + $0x338] sm:$0xff]
    %v152 = vld [vmem:[%s1 + $0x340] sm:$0xff]
    %v153 = vld [vmem:[%s1 + $0x348] sm:$0xff]
    %v154 = vld [vmem:[%s1 + $0x350] sm:$0xff]
    %v155 = vld [vmem:[%s1 + $0x358] sm:$0xff]
    %v156 = vld [vmem:[%s1 + $0x360] sm:$0xff]
    %v157 = vld [vmem:[%s1 + $0x368] sm:$0xff]
    %v158 = vld [vmem:[%s1 + $0x370] sm:$0xff]
    %v159 = vld [vmem:[%s1 + $0x378] sm:$0xff]
    %v160 = vld [vmem:[%s1 + $0x380] sm:$0xff]
    %v161 = vld [vmem:[%s1 + $0x388] sm:$0xff]
    %v162 = vld [vmem:[%s1 + $0x390] sm:$0xff]
    %v163 = vld [vmem:[%s1 + $0x398] sm:$0xff]
    %v164 = vld [vmem:[%s1 + $0x3a0] sm:$0xff]
    %v165 = vld [vmem:[%s1 + $0x3a8] sm:$0xff]
    %v166 = vld [vmem:[%s1 + $0x3b0] sm:$0xff]
    %v167 = vld [vmem:[%s1 + $0x3b8] sm:$0xff]
    %v168 = vld [vmem:[%s1 + $0x3c0] sm:$0xff]
    %v169 = vld [vmem:[%s1 + $0x3c8] sm:$0xff]
    %v170 = vld [vmem:[%s1 + $0x3d0] sm:$0xff]
    %v171 = vld [vmem:[%s1 + $0x3d8] sm:$0xff]
    %v172 = vld [vmem:[%s1 + $0x3e0] sm:$0xff]
    %v173 = vld [vmem:[%s1 + $0x3e8] sm:$0xff]
    %v174 = vld [vmem:[%s1 + $0x3f0] sm:$0xff]
    %v175 = vld [vmem:[%s1 + $0x3f8] sm:$0xff]
    %v176 = vld [vmem:[%s1 + $0x400] sm:$0xff]
    %v177 = vld [vmem:[%s1 + $0x408] sm:$0xff]
    %v178 = vld [vmem:[%s1 + $0x410] sm:$0xff]
    %v179 = vld [vmem:[%s1 + $0x418] sm:$0xff]
    %v180 = vld [vmem:[%s1 + $0x420] sm:$0xff]
    %v181 = vld [vmem:[%s1 + $0x428] sm:$0xff]
    %v182 = vld [vmem:[%s1 + $0x430] sm:$0xff]
    %v183 = vld [vmem:[%s1 + $0x438] sm:$0xff]
    %v184 = vld [vmem:[%s1 + $0x440] sm:$0xff]
    %v185 = vld [vmem:[%s1 + $0x448] sm:$0xff]
    %v186 = vld [vmem:[%s1 + $0x450] sm:$0xff]
    %v187 = vld [vmem:[%s1 + $0x458] sm:$0xff]
    %v188 = vld [vmem:[%s1 + $0x460] sm:$0xff]
    %v189 = vld [vmem:[%s1 + $0x468] sm:$0xff]
    %v190 = vld [vmem:[%s1 + $0x470] sm:$0xff]
    %v191 = vld [vmem:[%s1 + $0x478] sm:$0xff]
    %v192 = vld [vmem:[%s1 + $0x480] sm:$0xff]
    %v193 = vld [vmem:[%s1 + $0x488] sm:$0xff]
    %v194 = vld [vmem:[%s1 + $0x490] sm:$0xff]
    %v195 = vld [vmem:[%s1 + $0x498] sm:$0xff]
    %v196 = vld [vmem:[%s1 + $0x4a0] sm:$0xff]
    %v197 = vld [vmem:[%s1 + $0x4a8] sm:$0xff]
    %v198 = vld [vmem:[%s1 + $0x4b0] sm:$0xff]
    %v199 = vld [vmem:[%s1 + $0x4b8] sm:$0xff]
    %v200 = vld [vmem:[%s1 + $0x4c0] sm:$0xff]
    %v201 = vld [vmem:[%s1 + $0x4c8] sm:$0xff]
    %v202 = vld [vmem:[%s1 + $0x4d0] sm:$0xff]
    %v203 = vld [vmem:[%s1 + $0x4d8] sm:$0xff]
    %v204 = vld [vmem:[%s1 + $0x4e0] sm:$0xff]
    %v205 = vld [vmem:[%s1 + $0x4e8] sm:$0xff]
    %v206 = vld [vmem:[%s1 + $0x4f0] sm:$0xff]
    %v207 = vld [vmem:[%s1 + $0x4f8] sm:$0xff]
    %v208 = vld [vmem:[%s1 + $0x500] sm:$0xff]
    %v209 = vld [vmem:[%s1 + $0x508] sm:$0xff]
    %v210 = vld [vmem:[%s1 + $0x510] sm:$0xff]
    %v211 = vld [vmem:[%s1 + $0x518] sm:$0xff]
    %v212 = vld [vmem:[%s1 + $0x520] sm:$0xff]
    %v213 = vld [vmem:[%s1 + $0x528] sm:$0xff]
    %v214 = vld [vmem:[%s1 + $0x530] sm:$0xff]
    %v215 = vld [vmem:[%s1 + $0x538] sm:$0xff]
    %v216 = vld [vmem:[%s1 + $0x540] sm:$0xff]
    %v217 = vld [vmem:[%s1 + $0x548] sm:$0xff]
    %v218 = vld [vmem:[%s1 + $0x550] sm:$0xff]
    %v219 = vld [vmem:[%s1 + $0x558] sm:$0xff]
    %v220 = vld [vmem:[%s1 + $0x560] sm:$0xff]
    %v221 = vld [vmem:[%s1 + $0x568] sm:$0xff]
    %v222 = vld [vmem:[%s1 + $0x570] sm:$0xff]
    %v223 = vld [vmem:[%s1 + $0x578] sm:$0xff]
    %v224 = vld [vmem:[%s1 + $0x580] sm:$0xff]
    %v225 = vld [vmem:[%s1 + $0x588] sm:$0xff]
    %v226 = vld [vmem:[%s1 + $0x590] sm:$0xff]
    %v227 = vld [vmem:[%s1 + $0x598] sm:$0xff]
    %v228 = vld [vmem:[%s1 + $0x5a0] sm:$0xff]
    %v229 = vld [vmem:[%s1 + $0x5a8] sm:$0xff]
    %v230 = vld [vmem:[%s1 + $0x5b0] sm:$0xff]
    %v231 = vld [vmem:[%s1 + $0x5b8] sm:$0xff]
    %v232 = vld [vmem:[%s1 + $0x5c0] sm:$0xff]
    %v233 = vld [vmem:[%s1 + $0x5c8] sm:$0xff]
    %v234 = vld [vmem:[%s1 + $0x5d0] sm:$0xff]
    %v235 = vld [vmem:[%s1 + $0x5d8] sm:$0xff]
    %v236 = vld [vmem:[%s1 + $0x5e0] sm:$0xff]
    %v237 = vld [vmem:[%s1 + $0x5e8] sm:$0xff]
    %v238 = vld [vmem:[%s1 + $0x5f0] sm:$0xff]
    %v239 = vld [vmem:[%s1 + $0x5f8] sm:$0xff]
    %v240 = vld [vmem:[%s1 + $0x600] sm:$0xff]
    %v241 = vld [vmem:[%s1 + $0x608] sm:$0xff]
    %v242 = vld [vmem:[%s1 + $0x610] sm:$0xff]
    %v243 = vld [vmem:[%s1 + $0x618] sm:$0xff]
    %v244 = vld [vmem:[%s2] sm:$0xf]
    %v246 = vlaneseq
    %v247 = vshrl.u32 %v246, 7
    %v248 = vsub.s32 0, %v247
    %v249 = vrot.slane %v244, %v248
    %v250 = vlaneseq
    %v251 = vshrl.u32 %v250, 7
    %v252 = vsub.s32 1, %v251
    %v253 = vrot.slane %v244, %v252
    %v254 = vlaneseq
    %v255 = vshrl.u32 %v254, 7
    %v256 = vsub.s32 2, %v255
    %v257 = vrot.slane %v244, %v256
    %v258 = vlaneseq
    %v259 = vshrl.u32 %v258, 7
    %v260 = vsub.s32 3, %v259
    %v261 = vrot.slane %v244, %v260
    %v462 = vunpack.c.l.b16 %v48
    %v463 = vunpack.c.h.b16 %v48
    %v464 = vunpack.c.l.b16 %v49
    %v465 = vunpack.c.h.b16 %v49
    %v466 = vunpack.c.l.b16 %v50
    %v467 = vunpack.c.h.b16 %v50
    %v468 = vunpack.c.l.b16 %v51
    %v469 = vunpack.c.h.b16 %v51
    %v470 = vunpack.c.l.b16 %v52
    %v471 = vunpack.c.h.b16 %v52
    %v472 = vunpack.c.l.b16 %v53
    %v473 = vunpack.c.h.b16 %v53
    %v474 = vunpack.c.l.b16 %v54
    %v475 = vunpack.c.h.b16 %v54
    %v476 = vunpack.c.l.b16 %v55
    %v477 = vunpack.c.h.b16 %v55
    %v478 = vunpack.c.l.b16 %v56
    %v479 = vunpack.c.h.b16 %v56
    %v480 = vunpack.c.l.b16 %v57
    %v481 = vunpack.c.h.b16 %v57
    %v482 = vunpack.c.l.b16 %v58
    %v483 = vunpack.c.h.b16 %v58
    %v484 = vunpack.c.l.b16 %v59
    %v485 = vunpack.c.h.b16 %v59
    %v486 = vunpack.c.l.b16 %v60
    %v487 = vunpack.c.h.b16 %v60
    %v488 = vunpack.c.l.b16 %v61
    %v489 = vunpack.c.h.b16 %v61
    %v490 = vunpack.c.l.b16 %v62
    %v491 = vunpack.c.h.b16 %v62
    %v492 = vunpack.c.l.b16 %v63
    %v493 = vunpack.c.h.b16 %v63
    %v494 = vunpack.c.l.b16 %v64
    %v495 = vunpack.c.h.b16 %v64
    %v496 = vunpack.c.l.b16 %v65
    %v497 = vunpack.c.h.b16 %v65
    %v498 = vunpack.c.l.b16 %v66
    %v499 = vunpack.c.h.b16 %v66
    %v500 = vunpack.c.l.b16 %v67
    %v501 = vunpack.c.h.b16 %v67
    %v502 = vunpack.c.l.b16 %v68
    %v503 = vunpack.c.h.b16 %v68
    %v504 = vunpack.c.l.b16 %v69
    %v505 = vunpack.c.h.b16 %v69
    %v506 = vunpack.c.l.b16 %v70
    %v507 = vunpack.c.h.b16 %v70
    %v508 = vunpack.c.l.b16 %v71
    %v509 = vunpack.c.h.b16 %v71
    %v510 = vunpack.c.l.b16 %v72
    %v511 = vunpack.c.h.b16 %v72
    %v512 = vunpack.c.l.b16 %v73
    %v513 = vunpack.c.h.b16 %v73
    %v514 = vunpack.c.l.b16 %v74
    %v515 = vunpack.c.h.b16 %v74
    %v516 = vunpack.c.l.b16 %v75
    %v517 = vunpack.c.h.b16 %v75
    %v518 = vunpack.c.l.b16 %v76
    %v519 = vunpack.c.h.b16 %v76
    %v520 = vunpack.c.l.b16 %v77
    %v521 = vunpack.c.h.b16 %v77
    %v522 = vunpack.c.l.b16 %v78
    %v523 = vunpack.c.h.b16 %v78
    %v524 = vunpack.c.l.b16 %v79
    %v525 = vunpack.c.h.b16 %v79
    %v526 = vunpack.c.l.b16 %v80
    %v527 = vunpack.c.h.b16 %v80
    %v528 = vunpack.c.l.b16 %v81
    %v529 = vunpack.c.h.b16 %v81
    %v530 = vunpack.c.l.b16 %v82
    %v531 = vunpack.c.h.b16 %v82
    %v532 = vunpack.c.l.b16 %v83
    %v533 = vunpack.c.h.b16 %v83
    %v534 = vunpack.c.l.b16 %v84
    %v535 = vunpack.c.h.b16 %v84
    %v536 = vunpack.c.l.b16 %v85
    %v537 = vunpack.c.h.b16 %v85
    %v538 = vunpack.c.l.b16 %v86
    %v539 = vunpack.c.h.b16 %v86
    %v540 = vunpack.c.l.b16 %v87
    %v541 = vunpack.c.h.b16 %v87
    %v542 = vunpack.c.l.b16 %v88
    %v543 = vunpack.c.h.b16 %v88
    %v544 = vunpack.c.l.b16 %v89
    %v545 = vunpack.c.h.b16 %v89
    %v546 = vunpack.c.l.b16 %v90
    %v547 = vunpack.c.h.b16 %v90
    %v548 = vunpack.c.l.b16 %v91
    %v549 = vunpack.c.h.b16 %v91
    %v550 = vunpack.c.l.b16 %v92
    %v551 = vunpack.c.h.b16 %v92
    %v552 = vunpack.c.l.b16 %v93
    %v553 = vunpack.c.h.b16 %v93
    %v554 = vunpack.c.l.b16 %v94
    %v555 = vunpack.c.h.b16 %v94
    %v556 = vunpack.c.l.b16 %v95
    %v557 = vunpack.c.h.b16 %v95
    %v558 = vunpack.c.l.b16 %v96
    %v559 = vunpack.c.h.b16 %v96
    %v560 = vunpack.c.l.b16 %v97
    %v561 = vunpack.c.h.b16 %v97
    %v562 = vunpack.c.l.b16 %v98
    %v563 = vunpack.c.h.b16 %v98
    %v564 = vunpack.c.l.b16 %v99
    %v565 = vunpack.c.h.b16 %v99
    %v566 = vunpack.c.l.b16 %v100
    %v567 = vunpack.c.h.b16 %v100
    %v568 = vunpack.c.l.b16 %v101
    %v569 = vunpack.c.h.b16 %v101
    %v570 = vunpack.c.l.b16 %v102
    %v571 = vunpack.c.h.b16 %v102
    %v572 = vunpack.c.l.b16 %v103
    %v573 = vunpack.c.h.b16 %v103
    %v574 = vunpack.c.l.b16 %v104
    %v575 = vunpack.c.h.b16 %v104
    %v576 = vunpack.c.l.b16 %v105
    %v577 = vunpack.c.h.b16 %v105
    %v578 = vunpack.c.l.b16 %v106
    %v579 = vunpack.c.h.b16 %v106
    %v580 = vunpack.c.l.b16 %v107
    %v581 = vunpack.c.h.b16 %v107
    %v582 = vunpack.c.l.b16 %v108
    %v583 = vunpack.c.h.b16 %v108
    %v584 = vunpack.c.l.b16 %v109
    %v585 = vunpack.c.h.b16 %v109
    %v586 = vunpack.c.l.b16 %v110
    %v587 = vunpack.c.h.b16 %v110
    %v588 = vunpack.c.l.b16 %v111
    %v589 = vunpack.c.h.b16 %v111
    %v590 = vunpack.c.l.b16 %v112
    %v591 = vunpack.c.h.b16 %v112
    %v592 = vunpack.c.l.b16 %v113
    %v593 = vunpack.c.h.b16 %v113
    %v594 = vunpack.c.l.b16 %v114
    %v595 = vunpack.c.h.b16 %v114
    %v596 = vunpack.c.l.b16 %v115
    %v597 = vunpack.c.h.b16 %v115
    %v598 = vunpack.c.l.b16 %v116
    %v599 = vunpack.c.h.b16 %v116
    %v600 = vunpack.c.l.b16 %v117
    %v601 = vunpack.c.h.b16 %v117
    %v602 = vunpack.c.l.b16 %v118
    %v603 = vunpack.c.h.b16 %v118
    %v604 = vunpack.c.l.b16 %v119
    %v605 = vunpack.c.h.b16 %v119
    %v606 = vunpack.c.l.b16 %v120
    %v607 = vunpack.c.h.b16 %v120
    %v608 = vunpack.c.l.b16 %v121
    %v609 = vunpack.c.h.b16 %v121
    %v610 = vunpack.c.l.b16 %v122
    %v611 = vunpack.c.h.b16 %v122
    %v612 = vunpack.c.l.b16 %v123
    %v613 = vunpack.c.h.b16 %v123
    %v614 = vunpack.c.l.b16 %v124
    %v615 = vunpack.c.h.b16 %v124
    %v616 = vunpack.c.l.b16 %v125
    %v617 = vunpack.c.h.b16 %v125
    %v618 = vunpack.c.l.b16 %v126
    %v619 = vunpack.c.h.b16 %v126
    %v620 = vunpack.c.l.b16 %v127
    %v621 = vunpack.c.h.b16 %v127
    %v622 = vunpack.c.l.b16 %v128
    %v623 = vunpack.c.h.b16 %v128
    %v624 = vunpack.c.l.b16 %v129
    %v625 = vunpack.c.h.b16 %v129
    %v626 = vunpack.c.l.b16 %v130
    %v627 = vunpack.c.h.b16 %v130
    %v628 = vunpack.c.l.b16 %v131
    %v629 = vunpack.c.h.b16 %v131
    %v630 = vunpack.c.l.b16 %v132
    %v631 = vunpack.c.h.b16 %v132
    %v632 = vunpack.c.l.b16 %v133
    %v633 = vunpack.c.h.b16 %v133
    %v634 = vunpack.c.l.b16 %v134
    %v635 = vunpack.c.h.b16 %v134
    %v636 = vunpack.c.l.b16 %v135
    %v637 = vunpack.c.h.b16 %v135
    %v638 = vunpack.c.l.b16 %v136
    %v639 = vunpack.c.h.b16 %v136
    %v640 = vunpack.c.l.b16 %v137
    %v641 = vunpack.c.h.b16 %v137
    %v642 = vunpack.c.l.b16 %v138
    %v643 = vunpack.c.h.b16 %v138
    %v644 = vunpack.c.l.b16 %v139
    %v645 = vunpack.c.h.b16 %v139
    %v646 = vunpack.c.l.b16 %v140
    %v647 = vunpack.c.h.b16 %v140
    %v648 = vunpack.c.l.b16 %v141
    %v649 = vunpack.c.h.b16 %v141
    %v650 = vunpack.c.l.b16 %v142
    %v651 = vunpack.c.h.b16 %v142
    %v652 = vunpack.c.l.b16 %v143
    %v653 = vunpack.c.h.b16 %v143
    %v654 = vunpack.c.l.b16 %v144
    %v655 = vunpack.c.h.b16 %v144
    %v656 = vunpack.c.l.b16 %v145
    %v657 = vunpack.c.h.b16 %v145
    %v658 = vunpack.c.l.b16 %v146
    %v659 = vunpack.c.h.b16 %v146
    %v660 = vunpack.c.l.b16 %v147
    %v661 = vunpack.c.h.b16 %v147
    %v662 = vunpack.c.l.b16 %v148
    %v663 = vunpack.c.h.b16 %v148
    %v664 = vunpack.c.l.b16 %v149
    %v665 = vunpack.c.h.b16 %v149
    %v666 = vunpack.c.l.b16 %v150
    %v667 = vunpack.c.h.b16 %v150
    %v668 = vunpack.c.l.b16 %v151
    %v669 = vunpack.c.h.b16 %v151
    %v670 = vunpack.c.l.b16 %v152
    %v671 = vunpack.c.h.b16 %v152
    %v672 = vunpack.c.l.b16 %v153
    %v673 = vunpack.c.h.b16 %v153
    %v674 = vunpack.c.l.b16 %v154
    %v675 = vunpack.c.h.b16 %v154
    %v676 = vunpack.c.l.b16 %v155
    %v677 = vunpack.c.h.b16 %v155
    %v678 = vunpack.c.l.b16 %v156
    %v679 = vunpack.c.h.b16 %v156
    %v680 = vunpack.c.l.b16 %v157
    %v681 = vunpack.c.h.b16 %v157
    %v682 = vunpack.c.l.b16 %v158
    %v683 = vunpack.c.h.b16 %v158
    %v684 = vunpack.c.l.b16 %v159
    %v685 = vunpack.c.h.b16 %v159
    %v686 = vunpack.c.l.b16 %v160
    %v687 = vunpack.c.h.b16 %v160
    %v688 = vunpack.c.l.b16 %v161
    %v689 = vunpack.c.h.b16 %v161
    %v690 = vunpack.c.l.b16 %v162
    %v691 = vunpack.c.h.b16 %v162
    %v692 = vunpack.c.l.b16 %v163
    %v693 = vunpack.c.h.b16 %v163
    %v694 = vunpack.c.l.b16 %v164
    %v695 = vunpack.c.h.b16 %v164
    %v696 = vunpack.c.l.b16 %v165
    %v697 = vunpack.c.h.b16 %v165
    %v698 = vunpack.c.l.b16 %v166
    %v699 = vunpack.c.h.b16 %v166
    %v700 = vunpack.c.l.b16 %v167
    %v701 = vunpack.c.h.b16 %v167
    %v702 = vunpack.c.l.b16 %v168
    %v703 = vunpack.c.h.b16 %v168
    %v704 = vunpack.c.l.b16 %v169
    %v705 = vunpack.c.h.b16 %v169
    %v706 = vunpack.c.l.b16 %v170
    %v707 = vunpack.c.h.b16 %v170
    %v708 = vunpack.c.l.b16 %v171
    %v709 = vunpack.c.h.b16 %v171
    %v710 = vunpack.c.l.b16 %v172
    %v711 = vunpack.c.h.b16 %v172
    %v712 = vunpack.c.l.b16 %v173
    %v713 = vunpack.c.h.b16 %v173
    %v714 = vunpack.c.l.b16 %v174
    %v715 = vunpack.c.h.b16 %v174
    %v716 = vunpack.c.l.b16 %v175
    %v717 = vunpack.c.h.b16 %v175
    %v718 = vunpack.c.l.b16 %v176
    %v719 = vunpack.c.h.b16 %v176
    %v720 = vunpack.c.l.b16 %v177
    %v721 = vunpack.c.h.b16 %v177
    %v722 = vunpack.c.l.b16 %v178
    %v723 = vunpack.c.h.b16 %v178
    %v724 = vunpack.c.l.b16 %v179
    %v725 = vunpack.c.h.b16 %v179
    %v726 = vunpack.c.l.b16 %v180
    %v727 = vunpack.c.h.b16 %v180
    %v728 = vunpack.c.l.b16 %v181
    %v729 = vunpack.c.h.b16 %v181
    %v730 = vunpack.c.l.b16 %v182
    %v731 = vunpack.c.h.b16 %v182
    %v732 = vunpack.c.l.b16 %v183
    %v733 = vunpack.c.h.b16 %v183
    %v734 = vunpack.c.l.b16 %v184
    %v735 = vunpack.c.h.b16 %v184
    %v736 = vunpack.c.l.b16 %v185
    %v737 = vunpack.c.h.b16 %v185
    %v738 = vunpack.c.l.b16 %v186
    %v739 = vunpack.c.h.b16 %v186
    %v740 = vunpack.c.l.b16 %v187
    %v741 = vunpack.c.h.b16 %v187
    %v742 = vunpack.c.l.b16 %v188
    %v743 = vunpack.c.h.b16 %v188
    %v744 = vunpack.c.l.b16 %v189
    %v745 = vunpack.c.h.b16 %v189
    %v746 = vunpack.c.l.b16 %v190
    %v747 = vunpack.c.h.b16 %v190
    %v748 = vunpack.c.l.b16 %v191
    %v749 = vunpack.c.h.b16 %v191
    %v750 = vunpack.c.l.b16 %v192
    %v751 = vunpack.c.h.b16 %v192
    %v752 = vunpack.c.l.b16 %v193
    %v753 = vunpack.c.h.b16 %v193
    %v754 = vunpack.c.l.b16 %v194
    %v755 = vunpack.c.h.b16 %v194
    %v756 = vunpack.c.l.b16 %v195
    %v757 = vunpack.c.h.b16 %v195
    %v758 = vunpack.c.l.b16 %v196
    %v759 = vunpack.c.h.b16 %v196
    %v760 = vunpack.c.l.b16 %v197
    %v761 = vunpack.c.h.b16 %v197
    %v762 = vunpack.c.l.b16 %v198
    %v763 = vunpack.c.h.b16 %v198
    %v764 = vunpack.c.l.b16 %v199
    %v765 = vunpack.c.h.b16 %v199
    %v766 = vunpack.c.l.b16 %v200
    %v767 = vunpack.c.h.b16 %v200
    %v768 = vunpack.c.l.b16 %v201
    %v769 = vunpack.c.h.b16 %v201
    %v770 = vunpack.c.l.b16 %v202
    %v771 = vunpack.c.h.b16 %v202
    %v772 = vunpack.c.l.b16 %v203
    %v773 = vunpack.c.h.b16 %v203
    %v774 = vunpack.c.l.b16 %v204
    %v775 = vunpack.c.h.b16 %v204
    %v776 = vunpack.c.l.b16 %v205
    %v777 = vunpack.c.h.b16 %v205
    %v778 = vunpack.c.l.b16 %v206
    %v779 = vunpack.c.h.b16 %v206
    %v780 = vunpack.c.l.b16 %v207
    %v781 = vunpack.c.h.b16 %v207
    %v782 = vunpack.c.l.b16 %v208
    %v783 = vunpack.c.h.b16 %v208
    %v784 = vunpack.c.l.b16 %v209
    %v785 = vunpack.c.h.b16 %v209
    %v786 = vunpack.c.l.b16 %v210
    %v787 = vunpack.c.h.b16 %v210
    %v788 = vunpack.c.l.b16 %v211
    %v789 = vunpack.c.h.b16 %v211
    %v790 = vunpack.c.l.b16 %v212
    %v791 = vunpack.c.h.b16 %v212
    %v792 = vunpack.c.l.b16 %v213
    %v793 = vunpack.c.h.b16 %v213
    %v794 = vunpack.c.l.b16 %v214
    %v795 = vunpack.c.h.b16 %v214
    %v796 = vunpack.c.l.b16 %v215
    %v797 = vunpack.c.h.b16 %v215
    %v798 = vunpack.c.l.b16 %v216
    %v799 = vunpack.c.h.b16 %v216
    %v800 = vunpack.c.l.b16 %v217
    %v801 = vunpack.c.h.b16 %v217
    %v802 = vunpack.c.l.b16 %v218
    %v803 = vunpack.c.h.b16 %v218
    %v804 = vunpack.c.l.b16 %v219
    %v805 = vunpack.c.h.b16 %v219
    %v806 = vunpack.c.l.b16 %v220
    %v807 = vunpack.c.h.b16 %v220
    %v808 = vunpack.c.l.b16 %v221
    %v809 = vunpack.c.h.b16 %v221
    %v810 = vunpack.c.l.b16 %v222
    %v811 = vunpack.c.h.b16 %v222
    %v812 = vunpack.c.l.b16 %v223
    %v813 = vunpack.c.h.b16 %v223
    %v814 = vunpack.c.l.b16 %v224
    %v815 = vunpack.c.h.b16 %v224
    %v816 = vunpack.c.l.b16 %v225
    %v817 = vunpack.c.h.b16 %v225
    %v818 = vunpack.c.l.b16 %v226
    %v819 = vunpack.c.h.b16 %v226
    %v820 = vunpack.c.l.b16 %v227
    %v821 = vunpack.c.h.b16 %v227
    %v822 = vunpack.c.l.b16 %v228
    %v823 = vunpack.c.h.b16 %v228
    %v824 = vunpack.c.l.b16 %v229
    %v825 = vunpack.c.h.b16 %v229
    %v826 = vunpack.c.l.b16 %v230
    %v827 = vunpack.c.h.b16 %v230
    %v828 = vunpack.c.l.b16 %v231
    %v829 = vunpack.c.h.b16 %v231
    %v830 = vunpack.c.l.b16 %v232
    %v831 = vunpack.c.h.b16 %v232
    %v832 = vunpack.c.l.b16 %v233
    %v833 = vunpack.c.h.b16 %v233
    %v834 = vunpack.c.l.b16 %v234
    %v835 = vunpack.c.h.b16 %v234
    %v836 = vunpack.c.l.b16 %v235
    %v837 = vunpack.c.h.b16 %v235
    %v838 = vunpack.c.l.b16 %v236
    %v839 = vunpack.c.h.b16 %v236
    %v840 = vunpack.c.l.b16 %v237
    %v841 = vunpack.c.h.b16 %v237
    %v842 = vunpack.c.l.b16 %v238
    %v843 = vunpack.c.h.b16 %v238
    %v844 = vunpack.c.l.b16 %v239
    %v845 = vunpack.c.h.b16 %v239
    %v846 = vunpack.c.l.b16 %v240
    %v847 = vunpack.c.h.b16 %v240
    %v848 = vunpack.c.l.b16 %v241
    %v849 = vunpack.c.h.b16 %v241
    %v850 = vunpack.c.l.b16 %v242
    %v851 = vunpack.c.h.b16 %v242
    %v852 = vunpack.c.l.b16 %v243
    %v853 = vunpack.c.h.b16 %v243
    %v854 = vpack.c.b16 %v466, %v462
    %v855 = vpack.c.b16 %v467, %v463
    %v856 = vpack.c.b16 %v468, %v464
    %v857 = vpack.c.b16 %v469, %v465
    %v858 = vpack.c.b16 %v474, %v470
    %v859 = vpack.c.b16 %v475, %v471
    %v860 = vpack.c.b16 %v476, %v472
    %v861 = vpack.c.b16 %v477, %v473
    %v862 = vpack.c.b16 %v482, %v478
    %v863 = vpack.c.b16 %v483, %v479
    %v864 = vpack.c.b16 %v484, %v480
    %v865 = vpack.c.b16 %v485, %v481
    %v866 = vpack.c.b16 %v490, %v486
    %v867 = vpack.c.b16 %v491, %v487
    %v868 = vpack.c.b16 %v492, %v488
    %v869 = vpack.c.b16 %v493, %v489
    %v870 = vpack.c.b16 %v498, %v494
    %v871 = vpack.c.b16 %v499, %v495
    %v872 = vpack.c.b16 %v500, %v496
    %v873 = vpack.c.b16 %v501, %v497
    %v874 = vpack.c.b16 %v506, %v502
    %v875 = vpack.c.b16 %v507, %v503
    %v876 = vpack.c.b16 %v508, %v504
    %v877 = vpack.c.b16 %v509, %v505
    %v878 = vpack.c.b16 %v514, %v510
    %v879 = vpack.c.b16 %v515, %v511
    %v880 = vpack.c.b16 %v516, %v512
    %v881 = vpack.c.b16 %v517, %v513
    %v882 = vpack.c.b16 %v522, %v518
    %v883 = vpack.c.b16 %v523, %v519
    %v884 = vpack.c.b16 %v524, %v520
    %v885 = vpack.c.b16 %v525, %v521
    %v886 = vpack.c.b16 %v530, %v526
    %v887 = vpack.c.b16 %v531, %v527
    %v888 = vpack.c.b16 %v532, %v528
    %v889 = vpack.c.b16 %v533, %v529
    %v890 = vpack.c.b16 %v538, %v534
    %v891 = vpack.c.b16 %v539, %v535
    %v892 = vpack.c.b16 %v540, %v536
    %v893 = vpack.c.b16 %v541, %v537
    %v894 = vpack.c.b16 %v546, %v542
    %v895 = vpack.c.b16 %v547, %v543
    %v896 = vpack.c.b16 %v548, %v544
    %v897 = vpack.c.b16 %v549, %v545
    %v898 = vpack.c.b16 %v554, %v550
    %v899 = vpack.c.b16 %v555, %v551
    %v900 = vpack.c.b16 %v556, %v552
    %v901 = vpack.c.b16 %v557, %v553
    %v902 = vpack.c.b16 %v562, %v558
    %v903 = vpack.c.b16 %v563, %v559
    %v904 = vpack.c.b16 %v564, %v560
    %v905 = vpack.c.b16 %v565, %v561
    %v906 = vpack.c.b16 %v570, %v566
    %v907 = vpack.c.b16 %v571, %v567
    %v908 = vpack.c.b16 %v572, %v568
    %v909 = vpack.c.b16 %v573, %v569
    %v910 = vpack.c.b16 %v578, %v574
    %v911 = vpack.c.b16 %v579, %v575
    %v912 = vpack.c.b16 %v580, %v576
    %v913 = vpack.c.b16 %v581, %v577
    %v914 = vpack.c.b16 %v586, %v582
    %v915 = vpack.c.b16 %v587, %v583
    %v916 = vpack.c.b16 %v588, %v584
    %v917 = vpack.c.b16 %v589, %v585
    %v918 = vpack.c.b16 %v594, %v590
    %v919 = vpack.c.b16 %v595, %v591
    %v920 = vpack.c.b16 %v596, %v592
    %v921 = vpack.c.b16 %v597, %v593
    %v922 = vpack.c.b16 %v602, %v598
    %v923 = vpack.c.b16 %v603, %v599
    %v924 = vpack.c.b16 %v604, %v600
    %v925 = vpack.c.b16 %v605, %v601
    %v926 = vpack.c.b16 %v610, %v606
    %v927 = vpack.c.b16 %v611, %v607
    %v928 = vpack.c.b16 %v612, %v608
    %v929 = vpack.c.b16 %v613, %v609
    %v930 = vpack.c.b16 %v618, %v614
    %v931 = vpack.c.b16 %v619, %v615
    %v932 = vpack.c.b16 %v620, %v616
    %v933 = vpack.c.b16 %v621, %v617
    %v934 = vpack.c.b16 %v626, %v622
    %v935 = vpack.c.b16 %v627, %v623
    %v936 = vpack.c.b16 %v628, %v624
    %v937 = vpack.c.b16 %v629, %v625
    %v938 = vpack.c.b16 %v634, %v630
    %v939 = vpack.c.b16 %v635, %v631
    %v940 = vpack.c.b16 %v636, %v632
    %v941 = vpack.c.b16 %v637, %v633
    %v942 = vpack.c.b16 %v642, %v638
    %v943 = vpack.c.b16 %v643, %v639
    %v944 = vpack.c.b16 %v644, %v640
    %v945 = vpack.c.b16 %v645, %v641
    %v946 = vpack.c.b16 %v650, %v646
    %v947 = vpack.c.b16 %v651, %v647
    %v948 = vpack.c.b16 %v652, %v648
    %v949 = vpack.c.b16 %v653, %v649
    %v950 = vpack.c.b16 %v658, %v654
    %v951 = vpack.c.b16 %v659, %v655
    %v952 = vpack.c.b16 %v660, %v656
    %v953 = vpack.c.b16 %v661, %v657
    %v954 = vpack.c.b16 %v666, %v662
    %v955 = vpack.c.b16 %v667, %v663
    %v956 = vpack.c.b16 %v668, %v664
    %v957 = vpack.c.b16 %v669, %v665
    %v958 = vpack.c.b16 %v674, %v670
    %v959 = vpack.c.b16 %v675, %v671
    %v960 = vpack.c.b16 %v676, %v672
    %v961 = vpack.c.b16 %v677, %v673
    %v962 = vpack.c.b16 %v682, %v678
    %v963 = vpack.c.b16 %v683, %v679
    %v964 = vpack.c.b16 %v684, %v680
    %v965 = vpack.c.b16 %v685, %v681
    %v966 = vpack.c.b16 %v690, %v686
    %v967 = vpack.c.b16 %v691, %v687
    %v968 = vpack.c.b16 %v692, %v688
    %v969 = vpack.c.b16 %v693, %v689
    %v970 = vpack.c.b16 %v698, %v694
    %v971 = vpack.c.b16 %v699, %v695
    %v972 = vpack.c.b16 %v700, %v696
    %v973 = vpack.c.b16 %v701, %v697
    %v974 = vpack.c.b16 %v706, %v702
    %v975 = vpack.c.b16 %v707, %v703
    %v976 = vpack.c.b16 %v708, %v704
    %v977 = vpack.c.b16 %v709, %v705
    %v978 = vpack.c.b16 %v714, %v710
    %v979 = vpack.c.b16 %v715, %v711
    %v980 = vpack.c.b16 %v716, %v712
    %v981 = vpack.c.b16 %v717, %v713
    %v982 = vpack.c.b16 %v722, %v718
    %v983 = vpack.c.b16 %v723, %v719
    %v984 = vpack.c.b16 %v724, %v720
    %v985 = vpack.c.b16 %v725, %v721
    %v986 = vpack.c.b16 %v730, %v726
    %v987 = vpack.c.b16 %v731, %v727
    %v988 = vpack.c.b16 %v732, %v728
    %v989 = vpack.c.b16 %v733, %v729
    %v990 = vpack.c.b16 %v738, %v734
    %v991 = vpack.c.b16 %v739, %v735
    %v992 = vpack.c.b16 %v740, %v736
    %v993 = vpack.c.b16 %v741, %v737
    %v994 = vpack.c.b16 %v746, %v742
    %v995 = vpack.c.b16 %v747, %v743
    %v996 = vpack.c.b16 %v748, %v744
    %v997 = vpack.c.b16 %v749, %v745
    %v998 = vpack.c.b16 %v754, %v750
    %v999 = vpack.c.b16 %v755, %v751
    %v1000 = vpack.c.b16 %v756, %v752
    %v1001 = vpack.c.b16 %v757, %v753
    %v1002 = vpack.c.b16 %v762, %v758
    %v1003 = vpack.c.b16 %v763, %v759
    %v1004 = vpack.c.b16 %v764, %v760
    %v1005 = vpack.c.b16 %v765, %v761
    %v1006 = vpack.c.b16 %v770, %v766
    %v1007 = vpack.c.b16 %v771, %v767
    %v1008 = vpack.c.b16 %v772, %v768
    %v1009 = vpack.c.b16 %v773, %v769
    %v1010 = vpack.c.b16 %v778, %v774
    %v1011 = vpack.c.b16 %v779, %v775
    %v1012 = vpack.c.b16 %v780, %v776
    %v1013 = vpack.c.b16 %v781, %v777
    %v1014 = vpack.c.b16 %v786, %v782
    %v1015 = vpack.c.b16 %v787, %v783
    %v1016 = vpack.c.b16 %v788, %v784
    %v1017 = vpack.c.b16 %v789, %v785
    %v1018 = vpack.c.b16 %v794, %v790
    %v1019 = vpack.c.b16 %v795, %v791
    %v1020 = vpack.c.b16 %v796, %v792
    %v1021 = vpack.c.b16 %v797, %v793
    %v1022 = vpack.c.b16 %v802, %v798
    %v1023 = vpack.c.b16 %v803, %v799
    %v1024 = vpack.c.b16 %v804, %v800
    %v1025 = vpack.c.b16 %v805, %v801
    %v1026 = vpack.c.b16 %v810, %v806
    %v1027 = vpack.c.b16 %v811, %v807
    %v1028 = vpack.c.b16 %v812, %v808
    %v1029 = vpack.c.b16 %v813, %v809
    %v1030 = vpack.c.b16 %v818, %v814
    %v1031 = vpack.c.b16 %v819, %v815
    %v1032 = vpack.c.b16 %v820, %v816
    %v1033 = vpack.c.b16 %v821, %v817
    %v1034 = vpack.c.b16 %v826, %v822
    %v1035 = vpack.c.b16 %v827, %v823
    %v1036 = vpack.c.b16 %v828, %v824
    %v1037 = vpack.c.b16 %v829, %v825
    %v1038 = vpack.c.b16 %v834, %v830
    %v1039 = vpack.c.b16 %v835, %v831
    %v1040 = vpack.c.b16 %v836, %v832
    %v1041 = vpack.c.b16 %v837, %v833
    %v1042 = vpack.c.b16 %v842, %v838
    %v1043 = vpack.c.b16 %v843, %v839
    %v1044 = vpack.c.b16 %v844, %v840
    %v1045 = vpack.c.b16 %v845, %v841
    %v1046 = vpack.c.b16 %v850, %v846
    %v1047 = vpack.c.b16 %v851, %v847
    %v1048 = vpack.c.b16 %v852, %v848
    %v1049 = vpack.c.b16 %v853, %v849
    %vm1246 = vcmask 130048
    %v1248 = vsel %vm1246, %v47, 0
    %1250 = vmatprep.subr.bf16.mxu0 %v855
    %1251 = vmatpush1.bf16.msra.mxu0 %v854
    %1252 = vmatprep.subr.bf16.mxu0 %v859
    %1253 = vmatpush1.bf16.msra.mxu0 %v858
    %1254 = vmatprep.subr.bf16.mxu0 %v863
    %1255 = vmatpush1.bf16.msra.mxu0 %v862
    %1256 = vmatprep.subr.bf16.mxu0 %v867
    %1257 = vmatpush1.bf16.msra.mxu0 %v866
    %1258 = vmatprep.subr.bf16.mxu0 %v871
    %1259 = vmatpush1.bf16.msra.mxu0 %v870
    %1260 = vmatprep.subr.bf16.mxu0 %v875
    %1261 = vmatpush1.bf16.msra.mxu0 %v874
    %1262 = vmatprep.subr.bf16.mxu0 %v879
    %1263 = vmatpush1.bf16.msra.mxu0 %v878
    %1264 = vmatprep.subr.bf16.mxu0 %v883
    %1265 = vmatpush1.bf16.msra.mxu0 %v882
    %1266 = vmatprep.subr.bf16.mxu0 %v887
    %1267 = vmatpush1.bf16.msra.mxu0 %v886
    %1268 = vmatprep.subr.bf16.mxu0 %v891
    %1269 = vmatpush1.bf16.msra.mxu0 %v890
    %1270 = vmatprep.subr.bf16.mxu0 %v895
    %1271 = vmatpush1.bf16.msra.mxu0 %v894
    %1272 = vmatprep.subr.bf16.mxu0 %v899
    %1273 = vmatpush1.bf16.msra.mxu0 %v898
    %1274 = vmatprep.subr.bf16.mxu0 %v903
    %1275 = vmatpush1.bf16.msra.mxu0 %v902
    %1276 = vmatprep.subr.bf16.mxu0 %v907
    %1277 = vmatpush1.bf16.msra.mxu0 %v906
    %1278 = vmatprep.subr.bf16.mxu0 %v911
    %1279 = vmatpush1.bf16.msra.mxu0 %v910
    %1280 = vmatprep.subr.bf16.mxu0 %v915
    %1281 = vmatpush1.bf16.msra.mxu0 %v914
    %1282 = vmatprep.mubr.bf16.mxu0 %v42
    %1283 = vmatmul.mubr.bf16.gmra.mrb[0].mxu0 %v41
    %v1284 = vpop.f32.mrb[0].mxu0
    %v1285 = vadd.f32 %v249, %v1284
    %v1286 = vpop.f32.mrb[0].mxu0
    %v1287 = vadd.f32 %v253, %v1286
    %v1288 = vpop.f32.mrb[0].mxu0
    %v1289 = vpop.f32.mrb[0].mxu0
    %1290 = vdwg.mxu0
    %1291 = vmatprep.subr.bf16.mxu0 %v919
    %1292 = vmatpush1.bf16.msra.mxu0 %v918
    %1293 = vmatprep.subr.bf16.mxu0 %v923
    %1294 = vmatpush1.bf16.msra.mxu0 %v922
    %1295 = vmatprep.subr.bf16.mxu0 %v927
    %1296 = vmatpush1.bf16.msra.mxu0 %v926
    %1297 = vmatprep.subr.bf16.mxu0 %v931
    %1298 = vmatpush1.bf16.msra.mxu0 %v930
    %1299 = vmatprep.subr.bf16.mxu0 %v935
    %1300 = vmatpush1.bf16.msra.mxu0 %v934
    %1301 = vmatprep.subr.bf16.mxu0 %v939
    %1302 = vmatpush1.bf16.msra.mxu0 %v938
    %1303 = vmatprep.subr.bf16.mxu0 %v943
    %1304 = vmatpush1.bf16.msra.mxu0 %v942
    %1305 = vmatprep.subr.bf16.mxu0 %v947
    %1306 = vmatpush1.bf16.msra.mxu0 %v946
    %1307 = vmatprep.subr.bf16.mxu0 %v951
    %1308 = vmatpush1.bf16.msra.mxu0 %v950
    %1309 = vmatprep.subr.bf16.mxu0 %v955
    %1310 = vmatpush1.bf16.msra.mxu0 %v954
    %1311 = vmatprep.subr.bf16.mxu0 %v959
    %1312 = vmatpush1.bf16.msra.mxu0 %v958
    %1313 = vmatprep.subr.bf16.mxu0 %v963
    %1314 = vmatpush1.bf16.msra.mxu0 %v962
    %1315 = vmatprep.subr.bf16.mxu0 %v967
    %1316 = vmatpush1.bf16.msra.mxu0 %v966
    %1317 = vmatprep.subr.bf16.mxu0 %v971
    %1318 = vmatpush1.bf16.msra.mxu0 %v970
    %1319 = vmatprep.subr.bf16.mxu0 %v975
    %1320 = vmatpush1.bf16.msra.mxu0 %v974
    %1321 = vmatprep.subr.bf16.mxu0 %v979
    %1322 = vmatpush1.bf16.msra.mxu0 %v978
    %1323 = vmatprep.mubr.bf16.mxu0 %v44
    %1324 = vmatmul.mubr.bf16.gmra.mrb[0].mxu0 %v43
    %v1325 = vpop.f32.mrb[0].mxu0
    %v1326 = vadd.f32 %v1285, %v1325
    %v1327 = vpop.f32.mrb[0].mxu0
    %v1328 = vadd.f32 %v1287, %v1327
    %v1329 = vpop.f32.mrb[0].mxu0
    %v1330 = vpop.f32.mrb[0].mxu0
    %1331 = vdwg.mxu0
    %1332 = vmatprep.subr.bf16.mxu0 %v983
    %1333 = vmatpush1.bf16.msra.mxu0 %v982
    %1334 = vmatprep.subr.bf16.mxu0 %v987
    %1335 = vmatpush1.bf16.msra.mxu0 %v986
    %1336 = vmatprep.subr.bf16.mxu0 %v991
    %1337 = vmatpush1.bf16.msra.mxu0 %v990
    %1338 = vmatprep.subr.bf16.mxu0 %v995
    %1339 = vmatpush1.bf16.msra.mxu0 %v994
    %1340 = vmatprep.subr.bf16.mxu0 %v999
    %1341 = vmatpush1.bf16.msra.mxu0 %v998
    %1342 = vmatprep.subr.bf16.mxu0 %v1003
    %1343 = vmatpush1.bf16.msra.mxu0 %v1002
    %1344 = vmatprep.subr.bf16.mxu0 %v1007
    %1345 = vmatpush1.bf16.msra.mxu0 %v1006
    %1346 = vmatprep.subr.bf16.mxu0 %v1011
    %1347 = vmatpush1.bf16.msra.mxu0 %v1010
    %1348 = vmatprep.subr.bf16.mxu0 %v1015
    %1349 = vmatpush1.bf16.msra.mxu0 %v1014
    %1350 = vmatprep.subr.bf16.mxu0 %v1019
    %1351 = vmatpush1.bf16.msra.mxu0 %v1018
    %1352 = vmatprep.subr.bf16.mxu0 %v1023
    %1353 = vmatpush1.bf16.msra.mxu0 %v1022
    %1354 = vmatprep.subr.bf16.mxu0 %v1027
    %1355 = vmatpush1.bf16.msra.mxu0 %v1026
    %1356 = vmatprep.subr.bf16.mxu0 %v1031
    %1357 = vmatpush1.bf16.msra.mxu0 %v1030
    %1358 = vmatprep.subr.bf16.mxu0 %v1035
    %1359 = vmatpush1.bf16.msra.mxu0 %v1034
    %1360 = vmatprep.subr.bf16.mxu0 %v1039
    %1361 = vmatpush1.bf16.msra.mxu0 %v1038
    %1362 = vmatprep.subr.bf16.mxu0 %v1043
    %1363 = vmatpush1.bf16.msra.mxu0 %v1042
    %1364 = vmatprep.mubr.bf16.mxu0 %v46
    %1365 = vmatmul.mubr.bf16.gmra.mrb[0].mxu0 %v45
    %v1366 = vpop.f32.mrb[0].mxu0
    %v1367 = vadd.f32 %v1326, %v1366
    %v1368 = vpop.f32.mrb[0].mxu0
    %v1369 = vadd.f32 %v1328, %v1368
    %v1370 = vpop.f32.mrb[0].mxu0
    %v1371 = vpop.f32.mrb[0].mxu0
    %1372 = vdwg.mxu0
    %1373 = vmatprep.subr.bf16.mxu0 %v1047
    %1374 = vmatpush1.bf16.msra.mxu0 %v1046
    %1375 = vmatprep.subr.bf16.mxu0 0
    %1376 = vmatpush1.bf16.msra.mxu0 0
    %1377 = vmatprep.subr.bf16.mxu0 0
    %1378 = vmatpush1.bf16.msra.mxu0 0
    %1379 = vmatprep.subr.bf16.mxu0 0
    %1380 = vmatpush1.bf16.msra.mxu0 0
    %1381 = vmatprep.subr.bf16.mxu0 0
    %1382 = vmatpush1.bf16.msra.mxu0 0
    %1383 = vmatprep.subr.bf16.mxu0 0
    %1384 = vmatpush1.bf16.msra.mxu0 0
    %1385 = vmatprep.subr.bf16.mxu0 0
    %1386 = vmatpush1.bf16.msra.mxu0 0
    %1387 = vmatprep.subr.bf16.mxu0 0
    %1388 = vmatpush1.bf16.msra.mxu0 0
    %1389 = vmatprep.subr.bf16.mxu0 0
    %1390 = vmatpush1.bf16.msra.mxu0 0
    %1391 = vmatprep.subr.bf16.mxu0 0
    %1392 = vmatpush1.bf16.msra.mxu0 0
    %1393 = vmatprep.subr.bf16.mxu0 0
    %1394 = vmatpush1.bf16.msra.mxu0 0
    %1395 = vmatprep.subr.bf16.mxu0 0
    %1396 = vmatpush1.bf16.msra.mxu0 0
    %1397 = vmatprep.subr.bf16.mxu0 0
    %1398 = vmatpush1.bf16.msra.mxu0 0
    %1399 = vmatprep.subr.bf16.mxu0 0
    %1400 = vmatpush1.bf16.msra.mxu0 0
    %1401 = vmatprep.subr.bf16.mxu0 0
    %1402 = vmatpush1.bf16.msra.mxu0 0
    %1403 = vmatprep.subr.bf16.mxu0 0
    %1404 = vmatpush1.bf16.msra.mxu0 0
    %1405 = vmatprep.mubr.bf16.mxu0 0
    %1406 = vmatmul.mubr.bf16.gmra.mrb[0].mxu0 %v1248
    %v1407 = vpop.f32.mrb[0].mxu0
    %v1408 = vadd.f32 %v1367, %v1407
    %v1409 = vpop.f32.mrb[0].mxu0
    %v1410 = vadd.f32 %v1369, %v1409
    %v1411 = vpop.f32.mrb[0].mxu0
    %v1412 = vpop.f32.mrb[0].mxu0
    %1413 = vdwg.mxu0
    %1414 = vmatprep.subr.bf16.mxu0 %v857
    %1415 = vmatpush1.bf16.msra.mxu0 %v856
    %1416 = vmatprep.subr.bf16.mxu0 %v861
    %1417 = vmatpush1.bf16.msra.mxu0 %v860
    %1418 = vmatprep.subr.bf16.mxu0 %v865
    %1419 = vmatpush1.bf16.msra.mxu0 %v864
    %1420 = vmatprep.subr.bf16.mxu0 %v869
    %1421 = vmatpush1.bf16.msra.mxu0 %v868
    %1422 = vmatprep.subr.bf16.mxu0 %v873
    %1423 = vmatpush1.bf16.msra.mxu0 %v872
    %1424 = vmatprep.subr.bf16.mxu0 %v877
    %1425 = vmatpush1.bf16.msra.mxu0 %v876
    %1426 = vmatprep.subr.bf16.mxu0 %v881
    %1427 = vmatpush1.bf16.msra.mxu0 %v880
    %1428 = vmatprep.subr.bf16.mxu0 %v885
    %1429 = vmatpush1.bf16.msra.mxu0 %v884
    %1430 = vmatprep.subr.bf16.mxu0 %v889
    %1431 = vmatpush1.bf16.msra.mxu0 %v888
    %1432 = vmatprep.subr.bf16.mxu0 %v893
    %1433 = vmatpush1.bf16.msra.mxu0 %v892
    %1434 = vmatprep.subr.bf16.mxu0 %v897
    %1435 = vmatpush1.bf16.msra.mxu0 %v896
    %1436 = vmatprep.subr.bf16.mxu0 %v901
    %1437 = vmatpush1.bf16.msra.mxu0 %v900
    %1438 = vmatprep.subr.bf16.mxu0 %v905
    %1439 = vmatpush1.bf16.msra.mxu0 %v904
    %1440 = vmatprep.subr.bf16.mxu0 %v909
    %1441 = vmatpush1.bf16.msra.mxu0 %v908
    %1442 = vmatprep.subr.bf16.mxu0 %v913
    %1443 = vmatpush1.bf16.msra.mxu0 %v912
    %1444 = vmatprep.subr.bf16.mxu0 %v917
    %1445 = vmatpush1.bf16.msra.mxu0 %v916
    %1446 = vmatprep.mubr.bf16.mxu0 %v42
    %1447 = vmatmul.mubr.bf16.gmra.mrb[0].mxu0 %v41
    %v1448 = vpop.f32.mrb[0].mxu0
    %v1449 = vadd.f32 %v257, %v1448
    %v1450 = vpop.f32.mrb[0].mxu0
    %v1451 = vadd.f32 %v261, %v1450
    %v1452 = vpop.f32.mrb[0].mxu0
    %v1453 = vpop.f32.mrb[0].mxu0
    %1454 = vdwg.mxu0
    %1455 = vmatprep.subr.bf16.mxu0 %v921
    %1456 = vmatpush1.bf16.msra.mxu0 %v920
    %1457 = vmatprep.subr.bf16.mxu0 %v925
    %1458 = vmatpush1.bf16.msra.mxu0 %v924
    %1459 = vmatprep.subr.bf16.mxu0 %v929
    %1460 = vmatpush1.bf16.msra.mxu0 %v928
    %1461 = vmatprep.subr.bf16.mxu0 %v933
    %1462 = vmatpush1.bf16.msra.mxu0 %v932
    %1463 = vmatprep.subr.bf16.mxu0 %v937
    %1464 = vmatpush1.bf16.msra.mxu0 %v936
    %1465 = vmatprep.subr.bf16.mxu0 %v941
    %1466 = vmatpush1.bf16.msra.mxu0 %v940
    %1467 = vmatprep.subr.bf16.mxu0 %v945
    %1468 = vmatpush1.bf16.msra.mxu0 %v944
    %1469 = vmatprep.subr.bf16.mxu0 %v949
    %1470 = vmatpush1.bf16.msra.mxu0 %v948
    %1471 = vmatprep.subr.bf16.mxu0 %v953
    %1472 = vmatpush1.bf16.msra.mxu0 %v952
    %1473 = vmatprep.subr.bf16.mxu0 %v957
    %1474 = vmatpush1.bf16.msra.mxu0 %v956
    %1475 = vmatprep.subr.bf16.mxu0 %v961
    %1476 = vmatpush1.bf16.msra.mxu0 %v960
    %1477 = vmatprep.subr.bf16.mxu0 %v965
    %1478 = vmatpush1.bf16.msra.mxu0 %v964
    %1479 = vmatprep.subr.bf16.mxu0 %v969
    %1480 = vmatpush1.bf16.msra.mxu0 %v968
    %1481 = vmatprep.subr.bf16.mxu0 %v973
    %1482 = vmatpush1.bf16.msra.mxu0 %v972
    %1483 = vmatprep.subr.bf16.mxu0 %v977
    %1484 = vmatpush1.bf16.msra.mxu0 %v976
    %1485 = vmatprep.subr.bf16.mxu0 %v981
    %1486 = vmatpush1.bf16.msra.mxu0 %v980
    %1487 = vmatprep.mubr.bf16.mxu0 %v44
    %1488 = vmatmul.mubr.bf16.gmra.mrb[0].mxu0 %v43
    %v1489 = vpop.f32.mrb[0].mxu0
    %v1490 = vadd.f32 %v1449, %v1489
    %v1491 = vpop.f32.mrb[0].mxu0
    %v1492 = vadd.f32 %v1451, %v1491
    %v1493 = vpop.f32.mrb[0].mxu0
    %v1494 = vpop.f32.mrb[0].mxu0
    %1495 = vdwg.mxu0
    %1496 = vmatprep.subr.bf16.mxu0 %v985
    %1497 = vmatpush1.bf16.msra.mxu0 %v984
    %1498 = vmatprep.subr.bf16.mxu0 %v989
    %1499 = vmatpush1.bf16.msra.mxu0 %v988
    %1500 = vmatprep.subr.bf16.mxu0 %v993
    %1501 = vmatpush1.bf16.msra.mxu0 %v992
    %1502 = vmatprep.subr.bf16.mxu0 %v997
    %1503 = vmatpush1.bf16.msra.mxu0 %v996
    %1504 = vmatprep.subr.bf16.mxu0 %v1001
    %1505 = vmatpush1.bf16.msra.mxu0 %v1000
    %1506 = vmatprep.subr.bf16.mxu0 %v1005
    %1507 = vmatpush1.bf16.msra.mxu0 %v1004
    %1508 = vmatprep.subr.bf16.mxu0 %v1009
    %1509 = vmatpush1.bf16.msra.mxu0 %v1008
    %1510 = vmatprep.subr.bf16.mxu0 %v1013
    %1511 = vmatpush1.bf16.msra.mxu0 %v1012
    %1512 = vmatprep.subr.bf16.mxu0 %v1017
    %1513 = vmatpush1.bf16.msra.mxu0 %v1016
    %1514 = vmatprep.subr.bf16.mxu0 %v1021
    %1515 = vmatpush1.bf16.msra.mxu0 %v1020
    %1516 = vmatprep.subr.bf16.mxu0 %v1025
    %1517 = vmatpush1.bf16.msra.mxu0 %v1024
    %1518 = vmatprep.subr.bf16.mxu0 %v1029
    %1519 = vmatpush1.bf16.msra.mxu0 %v1028
    %1520 = vmatprep.subr.bf16.mxu0 %v1033
    %1521 = vmatpush1.bf16.msra.mxu0 %v1032
    %1522 = vmatprep.subr.bf16.mxu0 %v1037
    %1523 = vmatpush1.bf16.msra.mxu0 %v1036
    %1524 = vmatprep.subr.bf16.mxu0 %v1041
    %1525 = vmatpush1.bf16.msra.mxu0 %v1040
    %1526 = vmatprep.subr.bf16.mxu0 %v1045
    %1527 = vmatpush1.bf16.msra.mxu0 %v1044
    %1528 = vmatprep.mubr.bf16.mxu0 %v46
    %1529 = vmatmul.mubr.bf16.gmra.mrb[0].mxu0 %v45
    %v1530 = vpop.f32.mrb[0].mxu0
    %v1531 = vadd.f32 %v1490, %v1530
    %v1532 = vpop.f32.mrb[0].mxu0
    %v1533 = vadd.f32 %v1492, %v1532
    %v1534 = vpop.f32.mrb[0].mxu0
    %v1535 = vpop.f32.mrb[0].mxu0
    %1536 = vdwg.mxu0
    %1537 = vmatprep.subr.bf16.mxu0 %v1049
    %1538 = vmatpush1.bf16.msra.mxu0 %v1048
    %1539 = vmatprep.subr.bf16.mxu0 0
    %1540 = vmatpush1.bf16.msra.mxu0 0
    %1541 = vmatprep.subr.bf16.mxu0 0
    %1542 = vmatpush1.bf16.msra.mxu0 0
    %1543 = vmatprep.subr.bf16.mxu0 0
    %1544 = vmatpush1.bf16.msra.mxu0 0
    %1545 = vmatprep.subr.bf16.mxu0 0
    %1546 = vmatpush1.bf16.msra.mxu0 0
    %1547 = vmatprep.subr.bf16.mxu0 0
    %1548 = vmatpush1.bf16.msra.mxu0 0
    %1549 = vmatprep.subr.bf16.mxu0 0
    %1550 = vmatpush1.bf16.msra.mxu0 0
    %1551 = vmatprep.subr.bf16.mxu0 0
    %1552 = vmatpush1.bf16.msra.mxu0 0
    %1553 = vmatprep.subr.bf16.mxu0 0
    %1554 = vmatpush1.bf16.msra.mxu0 0
    %1555 = vmatprep.subr.bf16.mxu0 0
    %1556 = vmatpush1.bf16.msra.mxu0 0
    %1557 = vmatprep.subr.bf16.mxu0 0
    %1558 = vmatpush1.bf16.msra.mxu0 0
    %1559 = vmatprep.subr.bf16.mxu0 0
    %1560 = vmatpush1.bf16.msra.mxu0 0
    %1561 = vmatprep.subr.bf16.mxu0 0
    %1562 = vmatpush1.bf16.msra.mxu0 0
    %1563 = vmatprep.subr.bf16.mxu0 0
    %1564 = vmatpush1.bf16.msra.mxu0 0
    %1565 = vmatprep.subr.bf16.mxu0 0
    %1566 = vmatpush1.bf16.msra.mxu0 0
    %1567 = vmatprep.subr.bf16.mxu0 0
    %1568 = vmatpush1.bf16.msra.mxu0 0
    %1569 = vmatprep.mubr.bf16.mxu0 0
    %1570 = vmatmul.mubr.bf16.gmra.mrb[0].mxu0 %v1248
    %v1571 = vpop.f32.mrb[0].mxu0
    %v1572 = vadd.f32 %v1531, %v1571
    %v1573 = vpop.f32.mrb[0].mxu0
    %v1574 = vadd.f32 %v1533, %v1573
    %v1575 = vpop.f32.mrb[0].mxu0
    %v1576 = vpop.f32.mrb[0].mxu0
    %1577 = vdwg.mxu0
    %v1578 = vmax.f32 %v1408, 0.0
    %v1579 = vmax.f32 %v1410, 0.0
    %v1580 = vmax.f32 %v1572, 0.0
    %v1581 = vmax.f32 %v1574, 0.0
    %v1582 = vld [vmem:[%s3] ss:$2 sm:$0xf]
    %v1584 = vlaneseq
    %v1585 = vshrl.u32 %v1584, 7
    %v1586 = vsub.s32 0, %v1585
    %v1587 = vrot.slane %v1582, %v1586
    %v1588 = vlaneseq
    %v1589 = vshrl.u32 %v1588, 7
    %v1590 = vsub.s32 1, %v1589
    %v1591 = vrot.slane %v1582, %v1590
    %v1592 = vlaneseq
    %v1593 = vshrl.u32 %v1592, 7
    %v1594 = vsub.s32 2, %v1593
    %v1595 = vrot.slane %v1582, %v1594
    %v1596 = vlaneseq
    %v1597 = vshrl.u32 %v1596, 7
    %v1598 = vsub.s32 3, %v1597
    %v1599 = vrot.slane %v1582, %v1598
    %v1604 = vmul.f32 %v1578, %v1587
    %v1605 = vmul.f32 %v1579, %v1591
    %v1606 = vmul.f32 %v1580, %v1595
    %v1607 = vmul.f32 %v1581, %v1599
    %v1608 = vadd.f32 %v1604, %v1605
    %v1609 = vadd.f32 %v1608, %v1606
    %v1610 = vadd.f32 %v1609, %v1607
    %1611 = vadd.xlane.f32.xlu0 %v1610
    %v1612 = vpop.xlane.xlu0 %1611
    %v1613 = vld [vmem:[%s4] sm:$0x1]
    %v1615 = vlaneseq
    %v1616 = vshrl.u32 %v1615, 7
    %v1617 = vsub.s32 0, %v1616
    %v1618 = vrot.slane %v1613, %v1617
    %v1620 = vadd.f32 %v1612, %v1618
    %s1621 = scalar_lea.vmem %s3, 1
    %v1622 = vld [vmem:[%s1621] ss:$2 sm:$0xf]
    %v1624 = vlaneseq
    %v1625 = vshrl.u32 %v1624, 7
    %v1626 = vsub.s32 0, %v1625
    %v1627 = vrot.slane %v1622, %v1626
    %v1628 = vlaneseq
    %v1629 = vshrl.u32 %v1628, 7
    %v1630 = vsub.s32 1, %v1629
    %v1631 = vrot.slane %v1622, %v1630
    %v1632 = vlaneseq
    %v1633 = vshrl.u32 %v1632, 7
    %v1634 = vsub.s32 2, %v1633
    %v1635 = vrot.slane %v1622, %v1634
    %v1636 = vlaneseq
    %v1637 = vshrl.u32 %v1636, 7
    %v1638 = vsub.s32 3, %v1637
    %v1639 = vrot.slane %v1622, %v1638
    %v1644 = vmul.f32 %v1578, %v1627
    %v1645 = vmul.f32 %v1579, %v1631
    %v1646 = vmul.f32 %v1580, %v1635
    %v1647 = vmul.f32 %v1581, %v1639
    %v1648 = vadd.f32 %v1644, %v1645
    %v1649 = vadd.f32 %v1648, %v1646
    %v1650 = vadd.f32 %v1649, %v1647
    %1651 = vadd.xlane.f32.xlu0 %v1650
    %v1652 = vpop.xlane.xlu0 %1651
    %v1653 = vadd.f32 %v1652, %v1618
    %v1654 = vld [vmem:[%s5] ss:$2 sm:$0xf]
    %1656 = vset.pattern.permute.xlu0 0
    %1657 = vperm.xlu0 %1656, %v1620
    %v1658 = vpop.permute.xlu0 %1657
    %v1661 = vlaneseq
    %v1662 = vshrl.u32 %v1661, 7
    %v1663 = vsub.s32 0, %v1662
    %v1664 = vrot.slane %v1654, %v1663
    %v1665 = vlaneseq
    %v1666 = vshrl.u32 %v1665, 7
    %v1667 = vsub.s32 1, %v1666
    %v1668 = vrot.slane %v1654, %v1667
    %v1669 = vlaneseq
    %v1670 = vshrl.u32 %v1669, 7
    %v1671 = vsub.s32 2, %v1670
    %v1672 = vrot.slane %v1654, %v1671
    %v1673 = vlaneseq
    %v1674 = vshrl.u32 %v1673, 7
    %v1675 = vsub.s32 3, %v1674
    %v1676 = vrot.slane %v1654, %v1675
    %v1681 = vmul.f32 %v1658, %v1664
    %v1682 = vmul.f32 %v1658, %v1668
    %v1683 = vmul.f32 %v1658, %v1672
    %v1684 = vmul.f32 %v1658, %v1676
    %s1685 = scalar_lea.vmem %s5, 1
    %v1686 = vld [vmem:[%s1685] ss:$2 sm:$0xf]
    %1688 = vset.pattern.permute.xlu0 1
    %1689 = vperm.xlu0 %1688, %v1653
    %v1690 = vpop.permute.xlu0 %1689
    %v1693 = vlaneseq
    %v1694 = vshrl.u32 %v1693, 7
    %v1695 = vsub.s32 0, %v1694
    %v1696 = vrot.slane %v1686, %v1695
    %v1697 = vlaneseq
    %v1698 = vshrl.u32 %v1697, 7
    %v1699 = vsub.s32 1, %v1698
    %v1700 = vrot.slane %v1686, %v1699
    %v1701 = vlaneseq
    %v1702 = vshrl.u32 %v1701, 7
    %v1703 = vsub.s32 2, %v1702
    %v1704 = vrot.slane %v1686, %v1703
    %v1705 = vlaneseq
    %v1706 = vshrl.u32 %v1705, 7
    %v1707 = vsub.s32 3, %v1706
    %v1708 = vrot.slane %v1686, %v1707
    %v1713 = vmul.f32 %v1690, %v1696
    %v1714 = vmul.f32 %v1690, %v1700
    %v1715 = vmul.f32 %v1690, %v1704
    %v1716 = vmul.f32 %v1690, %v1708
    %v1717 = vadd.f32 %v1681, %v1713
    %v1718 = vadd.f32 %v1682, %v1714
    %v1719 = vadd.f32 %v1683, %v1715
    %v1720 = vadd.f32 %v1684, %v1716
    %v1721 = vld [vmem:[%s6] sm:$0xf]
    %v1723 = vlaneseq
    %v1724 = vshrl.u32 %v1723, 7
    %v1725 = vsub.s32 0, %v1724
    %v1726 = vrot.slane %v1721, %v1725
    %v1727 = vlaneseq
    %v1728 = vshrl.u32 %v1727, 7
    %v1729 = vsub.s32 1, %v1728
    %v1730 = vrot.slane %v1721, %v1729
    %v1731 = vlaneseq
    %v1732 = vshrl.u32 %v1731, 7
    %v1733 = vsub.s32 2, %v1732
    %v1734 = vrot.slane %v1721, %v1733
    %v1735 = vlaneseq
    %v1736 = vshrl.u32 %v1735, 7
    %v1737 = vsub.s32 3, %v1736
    %v1738 = vrot.slane %v1721, %v1737
    %v1743 = vadd.f32 %v1717, %v1726
    %v1744 = vadd.f32 %v1718, %v1730
    %v1745 = vadd.f32 %v1719, %v1734
    %v1746 = vadd.f32 %v1720, %v1738
    %v1747 = vmax.f32 %v1743, 0.0
    %v1748 = vmax.f32 %v1744, 0.0
    %v1749 = vmax.f32 %v1745, 0.0
    %v1750 = vmax.f32 %v1746, 0.0
    %v1751 = vpack.c.bf16 %v1747, %v1747
    %v1752 = vpack.c.bf16 %v1748, %v1748
    %v1753 = vpack.c.bf16 %v1749, %v1749
    %v1754 = vpack.c.bf16 %v1750, %v1750
    %v1755 = vld [vmem:[%s7] sm:$0xff]
    %v1756 = vld [vmem:[%s7 + $0x8] sm:$0xff]
    %v1757 = vld [vmem:[%s7 + $0x10] sm:$0xff]
    %v1758 = vld [vmem:[%s7 + $0x18] sm:$0xf]
    %v1759 = vld [vmem:[%s7 + $0x1c] sm:$0xff]
    %v1760 = vld [vmem:[%s7 + $0x24] sm:$0xff]
    %v1761 = vld [vmem:[%s7 + $0x2c] sm:$0xff]
    %v1762 = vld [vmem:[%s7 + $0x34] sm:$0xf]
    %v1763 = vld [vmem:[%s7 + $0x38] sm:$0xff]
    %v1764 = vld [vmem:[%s7 + $0x40] sm:$0xff]
    %v1765 = vld [vmem:[%s7 + $0x48] sm:$0xff]
    %v1766 = vld [vmem:[%s7 + $0x50] sm:$0xf]
    %v1767 = vld [vmem:[%s7 + $0x54] sm:$0xff]
    %v1768 = vld [vmem:[%s7 + $0x5c] sm:$0xff]
    %v1769 = vld [vmem:[%s7 + $0x64] sm:$0xff]
    %v1770 = vld [vmem:[%s7 + $0x6c] sm:$0xf]
    %v1771 = vld [vmem:[%s7 + $0x70] sm:$0xff]
    %v1772 = vld [vmem:[%s7 + $0x78] sm:$0xff]
    %v1773 = vld [vmem:[%s7 + $0x80] sm:$0xff]
    %v1774 = vld [vmem:[%s7 + $0x88] sm:$0xf]
    %v1775 = vld [vmem:[%s7 + $0x8c] sm:$0xff]
    %v1776 = vld [vmem:[%s7 + $0x94] sm:$0xff]
    %v1777 = vld [vmem:[%s7 + $0x9c] sm:$0xff]
    %v1778 = vld [vmem:[%s7 + $0xa4] sm:$0xf]
    %v1779 = vld [vmem:[%s7 + $0xa8] sm:$0xff]
    %v1780 = vld [vmem:[%s7 + $0xb0] sm:$0xff]
    %v1781 = vld [vmem:[%s7 + $0xb8] sm:$0xff]
    %v1782 = vld [vmem:[%s7 + $0xc0] sm:$0xf]
    %v1783 = vld [vmem:[%s7 + $0xc4] sm:$0xff]
    %v1784 = vld [vmem:[%s7 + $0xcc] sm:$0xff]
    %v1785 = vld [vmem:[%s7 + $0xd4] sm:$0xff]
    %v1786 = vld [vmem:[%s7 + $0xdc] sm:$0xf]
    %v1787 = vld [vmem:[%s7 + $0xe0] sm:$0xff]
    %v1788 = vld [vmem:[%s7 + $0xe8] sm:$0xff]
    %v1789 = vld [vmem:[%s7 + $0xf0] sm:$0xff]
    %v1790 = vld [vmem:[%s7 + $0xf8] sm:$0xf]
    %v1791 = vld [vmem:[%s7 + $0xfc] sm:$0xff]
    %v1792 = vld [vmem:[%s7 + $0x104] sm:$0xff]
    %v1793 = vld [vmem:[%s7 + $0x10c] sm:$0xff]
    %v1794 = vld [vmem:[%s7 + $0x114] sm:$0xf]
    %v1795 = vld [vmem:[%s7 + $0x118] sm:$0xff]
    %v1796 = vld [vmem:[%s7 + $0x120] sm:$0xff]
    %v1797 = vld [vmem:[%s7 + $0x128] sm:$0xff]
    %v1798 = vld [vmem:[%s7 + $0x130] sm:$0xf]
    %v1799 = vld [vmem:[%s7 + $0x134] sm:$0xff]
    %v1800 = vld [vmem:[%s7 + $0x13c] sm:$0xff]
    %v1801 = vld [vmem:[%s7 + $0x144] sm:$0xff]
    %v1802 = vld [vmem:[%s7 + $0x14c] sm:$0xf]
    %v1803 = vld [vmem:[%s7 + $0x150] sm:$0xff]
    %v1804 = vld [vmem:[%s7 + $0x158] sm:$0xff]
    %v1805 = vld [vmem:[%s7 + $0x160] sm:$0xff]
    %v1806 = vld [vmem:[%s7 + $0x168] sm:$0xf]
    %v1807 = vld [vmem:[%s7 + $0x16c] sm:$0xff]
    %v1808 = vld [vmem:[%s7 + $0x174] sm:$0xff]
    %v1809 = vld [vmem:[%s7 + $0x17c] sm:$0xff]
    %v1810 = vld [vmem:[%s7 + $0x184] sm:$0xf]
    %v1811 = vld [vmem:[%s7 + $0x188] sm:$0xff]
    %v1812 = vld [vmem:[%s7 + $0x190] sm:$0xff]
    %v1813 = vld [vmem:[%s7 + $0x198] sm:$0xff]
    %v1814 = vld [vmem:[%s7 + $0x1a0] sm:$0xf]
    %v1815 = vld [vmem:[%s7 + $0x1a4] sm:$0xff]
    %v1816 = vld [vmem:[%s7 + $0x1ac] sm:$0xff]
    %v1817 = vld [vmem:[%s7 + $0x1b4] sm:$0xff]
    %v1818 = vld [vmem:[%s7 + $0x1bc] sm:$0xf]
    %v1819 = vld [vmem:[%s7 + $0x1c0] sm:$0xff]
    %v1820 = vld [vmem:[%s7 + $0x1c8] sm:$0xff]
    %v1821 = vld [vmem:[%s7 + $0x1d0] sm:$0xff]
    %v1822 = vld [vmem:[%s7 + $0x1d8] sm:$0xf]
    %v1823 = vld [vmem:[%s7 + $0x1dc] sm:$0xff]
    %v1824 = vld [vmem:[%s7 + $0x1e4] sm:$0xff]
    %v1825 = vld [vmem:[%s7 + $0x1ec] sm:$0xff]
    %v1826 = vld [vmem:[%s7 + $0x1f4] sm:$0xf]
    %v1827 = vld [vmem:[%s7 + $0x1f8] sm:$0xff]
    %v1828 = vld [vmem:[%s7 + $0x200] sm:$0xff]
    %v1829 = vld [vmem:[%s7 + $0x208] sm:$0xff]
    %v1830 = vld [vmem:[%s7 + $0x210] sm:$0xf]
    %v1831 = vld [vmem:[%s7 + $0x214] sm:$0xff]
    %v1832 = vld [vmem:[%s7 + $0x21c] sm:$0xff]
    %v1833 = vld [vmem:[%s7 + $0x224] sm:$0xff]
    %v1834 = vld [vmem:[%s7 + $0x22c] sm:$0xf]
    %v1835 = vld [vmem:[%s7 + $0x230] sm:$0xff]
    %v1836 = vld [vmem:[%s7 + $0x238] sm:$0xff]
    %v1837 = vld [vmem:[%s7 + $0x240] sm:$0xff]
    %v1838 = vld [vmem:[%s7 + $0x248] sm:$0xf]
    %v1839 = vld [vmem:[%s7 + $0x24c] sm:$0xff]
    %v1840 = vld [vmem:[%s7 + $0x254] sm:$0xff]
    %v1841 = vld [vmem:[%s7 + $0x25c] sm:$0xff]
    %v1842 = vld [vmem:[%s7 + $0x264] sm:$0xf]
    %v1843 = vld [vmem:[%s7 + $0x268] sm:$0xff]
    %v1844 = vld [vmem:[%s7 + $0x270] sm:$0xff]
    %v1845 = vld [vmem:[%s7 + $0x278] sm:$0xff]
    %v1846 = vld [vmem:[%s7 + $0x280] sm:$0xf]
    %v1847 = vld [vmem:[%s7 + $0x284] sm:$0xff]
    %v1848 = vld [vmem:[%s7 + $0x28c] sm:$0xff]
    %v1849 = vld [vmem:[%s7 + $0x294] sm:$0xff]
    %v1850 = vld [vmem:[%s7 + $0x29c] sm:$0xf]
    %v1851 = vld [vmem:[%s7 + $0x2a0] sm:$0xff]
    %v1852 = vld [vmem:[%s7 + $0x2a8] sm:$0xff]
    %v1853 = vld [vmem:[%s7 + $0x2b0] sm:$0xff]
    %v1854 = vld [vmem:[%s7 + $0x2b8] sm:$0xf]
    %v1855 = vld [vmem:[%s7 + $0x2bc] sm:$0xff]
    %v1856 = vld [vmem:[%s7 + $0x2c4] sm:$0xff]
    %v1857 = vld [vmem:[%s7 + $0x2cc] sm:$0xff]
    %v1858 = vld [vmem:[%s7 + $0x2d4] sm:$0xf]
    %v1859 = vld [vmem:[%s7 + $0x2d8] sm:$0xff]
    %v1860 = vld [vmem:[%s7 + $0x2e0] sm:$0xff]
    %v1861 = vld [vmem:[%s7 + $0x2e8] sm:$0xff]
    %v1862 = vld [vmem:[%s7 + $0x2f0] sm:$0xf]
    %v1863 = vld [vmem:[%s7 + $0x2f4] sm:$0xff]
    %v1864 = vld [vmem:[%s7 + $0x2fc] sm:$0xff]
    %v1865 = vld [vmem:[%s7 + $0x304] sm:$0xff]
    %v1866 = vld [vmem:[%s7 + $0x30c] sm:$0xf]
    %v1867 = vld [vmem:[%s7 + $0x310] sm:$0xff]
    %v1868 = vld [vmem:[%s7 + $0x318] sm:$0xff]
    %v1869 = vld [vmem:[%s7 + $0x320] sm:$0xff]
    %v1870 = vld [vmem:[%s7 + $0x328] sm:$0xf]
    %v1871 = vld [vmem:[%s7 + $0x32c] sm:$0xff]
    %v1872 = vld [vmem:[%s7 + $0x334] sm:$0xff]
    %v1873 = vld [vmem:[%s7 + $0x33c] sm:$0xff]
    %v1874 = vld [vmem:[%s7 + $0x344] sm:$0xf]
    %v1875 = vld [vmem:[%s7 + $0x348] sm:$0xff]
    %v1876 = vld [vmem:[%s7 + $0x350] sm:$0xff]
    %v1877 = vld [vmem:[%s7 + $0x358] sm:$0xff]
    %v1878 = vld [vmem:[%s7 + $0x360] sm:$0xf]
    %v1879 = vld [vmem:[%s7 + $0x364] sm:$0xff]
    %v1880 = vld [vmem:[%s7 + $0x36c] sm:$0xff]
    %v1881 = vld [vmem:[%s7 + $0x374] sm:$0xff]
    %v1882 = vld [vmem:[%s7 + $0x37c] sm:$0xf]
    %v1883 = vld [vmem:[%s7 + $0x380] sm:$0xff]
    %v1884 = vld [vmem:[%s7 + $0x388] sm:$0xff]
    %v1885 = vld [vmem:[%s7 + $0x390] sm:$0xff]
    %v1886 = vld [vmem:[%s7 + $0x398] sm:$0xf]
    %v1887 = vld [vmem:[%s7 + $0x39c] sm:$0xff]
    %v1888 = vld [vmem:[%s7 + $0x3a4] sm:$0xff]
    %v1889 = vld [vmem:[%s7 + $0x3ac] sm:$0xff]
    %v1890 = vld [vmem:[%s7 + $0x3b4] sm:$0xf]
    %v1891 = vld [vmem:[%s7 + $0x3b8] sm:$0xff]
    %v1892 = vld [vmem:[%s7 + $0x3c0] sm:$0xff]
    %v1893 = vld [vmem:[%s7 + $0x3c8] sm:$0xff]
    %v1894 = vld [vmem:[%s7 + $0x3d0] sm:$0xf]
    %v1895 = vld [vmem:[%s7 + $0x3d4] sm:$0xff]
    %v1896 = vld [vmem:[%s7 + $0x3dc] sm:$0xff]
    %v1897 = vld [vmem:[%s7 + $0x3e4] sm:$0xff]
    %v1898 = vld [vmem:[%s7 + $0x3ec] sm:$0xf]
    %v1899 = vld [vmem:[%s7 + $0x3f0] sm:$0xff]
    %v1900 = vld [vmem:[%s7 + $0x3f8] sm:$0xff]
    %v1901 = vld [vmem:[%s7 + $0x400] sm:$0xff]
    %v1902 = vld [vmem:[%s7 + $0x408] sm:$0xf]
    %v1903 = vld [vmem:[%s7 + $0x40c] sm:$0xff]
    %v1904 = vld [vmem:[%s7 + $0x414] sm:$0xff]
    %v1905 = vld [vmem:[%s7 + $0x41c] sm:$0xff]
    %v1906 = vld [vmem:[%s7 + $0x424] sm:$0xf]
    %v1907 = vld [vmem:[%s7 + $0x428] sm:$0xff]
    %v1908 = vld [vmem:[%s7 + $0x430] sm:$0xff]
    %v1909 = vld [vmem:[%s7 + $0x438] sm:$0xff]
    %v1910 = vld [vmem:[%s7 + $0x440] sm:$0xf]
    %v1911 = vld [vmem:[%s7 + $0x444] sm:$0xff]
    %v1912 = vld [vmem:[%s7 + $0x44c] sm:$0xff]
    %v1913 = vld [vmem:[%s7 + $0x454] sm:$0xff]
    %v1914 = vld [vmem:[%s7 + $0x45c] sm:$0xf]
    %v1915 = vld [vmem:[%s7 + $0x460] sm:$0xff]
    %v1916 = vld [vmem:[%s7 + $0x468] sm:$0xff]
    %v1917 = vld [vmem:[%s7 + $0x470] sm:$0xff]
    %v1918 = vld [vmem:[%s7 + $0x478] sm:$0xf]
    %v1919 = vld [vmem:[%s7 + $0x47c] sm:$0xff]
    %v1920 = vld [vmem:[%s7 + $0x484] sm:$0xff]
    %v1921 = vld [vmem:[%s7 + $0x48c] sm:$0xff]
    %v1922 = vld [vmem:[%s7 + $0x494] sm:$0xf]
    %v1923 = vld [vmem:[%s7 + $0x498] sm:$0xff]
    %v1924 = vld [vmem:[%s7 + $0x4a0] sm:$0xff]
    %v1925 = vld [vmem:[%s7 + $0x4a8] sm:$0xff]
    %v1926 = vld [vmem:[%s7 + $0x4b0] sm:$0xf]
    %v1927 = vld [vmem:[%s7 + $0x4b4] sm:$0xff]
    %v1928 = vld [vmem:[%s7 + $0x4bc] sm:$0xff]
    %v1929 = vld [vmem:[%s7 + $0x4c4] sm:$0xff]
    %v1930 = vld [vmem:[%s7 + $0x4cc] sm:$0xf]
    %v1931 = vld [vmem:[%s7 + $0x4d0] sm:$0xff]
    %v1932 = vld [vmem:[%s7 + $0x4d8] sm:$0xff]
    %v1933 = vld [vmem:[%s7 + $0x4e0] sm:$0xff]
    %v1934 = vld [vmem:[%s7 + $0x4e8] sm:$0xf]
    %v1935 = vld [vmem:[%s7 + $0x4ec] sm:$0xff]
    %v1936 = vld [vmem:[%s7 + $0x4f4] sm:$0xff]
    %v1937 = vld [vmem:[%s7 + $0x4fc] sm:$0xff]
    %v1938 = vld [vmem:[%s7 + $0x504] sm:$0xf]
    %v1939 = vld [vmem:[%s7 + $0x508] sm:$0xff]
    %v1940 = vld [vmem:[%s7 + $0x510] sm:$0xff]
    %v1941 = vld [vmem:[%s7 + $0x518] sm:$0xff]
    %v1942 = vld [vmem:[%s7 + $0x520] sm:$0xf]
    %v1943 = vld [vmem:[%s7 + $0x524] sm:$0xff]
    %v1944 = vld [vmem:[%s7 + $0x52c] sm:$0xff]
    %v1945 = vld [vmem:[%s7 + $0x534] sm:$0xff]
    %v1946 = vld [vmem:[%s7 + $0x53c] sm:$0xf]
    %v1947 = vld [vmem:[%s7 + $0x540] sm:$0xff]
    %v1948 = vld [vmem:[%s7 + $0x548] sm:$0xff]
    %v1949 = vld [vmem:[%s7 + $0x550] sm:$0xff]
    %v1950 = vld [vmem:[%s7 + $0x558] sm:$0xf]
    %v1951 = vld [vmem:[%s7 + $0x55c] sm:$0xff]
    %v1952 = vld [vmem:[%s7 + $0x564] sm:$0xff]
    %v1953 = vld [vmem:[%s7 + $0x56c] sm:$0xff]
    %v1954 = vld [vmem:[%s7 + $0x574] sm:$0xf]
    %v1955 = vld [vmem:[%s7 + $0x578] sm:$0xff]
    %v1956 = vld [vmem:[%s7 + $0x580] sm:$0xff]
    %v1957 = vld [vmem:[%s7 + $0x588] sm:$0xff]
    %v1958 = vld [vmem:[%s7 + $0x590] sm:$0xf]
    %v1959 = vld [vmem:[%s7 + $0x594] sm:$0xff]
    %v1960 = vld [vmem:[%s7 + $0x59c] sm:$0xff]
    %v1961 = vld [vmem:[%s7 + $0x5a4] sm:$0xff]
    %v1962 = vld [vmem:[%s7 + $0x5ac] sm:$0xf]
    %v1963 = vld [vmem:[%s7 + $0x5b0] sm:$0xff]
    %v1964 = vld [vmem:[%s7 + $0x5b8] sm:$0xff]
    %v1965 = vld [vmem:[%s7 + $0x5c0] sm:$0xff]
    %v1966 = vld [vmem:[%s7 + $0x5c8] sm:$0xf]
    %v1967 = vld [vmem:[%s7 + $0x5cc] sm:$0xff]
    %v1968 = vld [vmem:[%s7 + $0x5d4] sm:$0xff]
    %v1969 = vld [vmem:[%s7 + $0x5dc] sm:$0xff]
    %v1970 = vld [vmem:[%s7 + $0x5e4] sm:$0xf]
    %v1971 = vld [vmem:[%s7 + $0x5e8] sm:$0xff]
    %v1972 = vld [vmem:[%s7 + $0x5f0] sm:$0xff]
    %v1973 = vld [vmem:[%s7 + $0x5f8] sm:$0xff]
    %v1974 = vld [vmem:[%s7 + $0x600] sm:$0xf]
    %v1975 = vld [vmem:[%s7 + $0x604] sm:$0xff]
    %v1976 = vld [vmem:[%s7 + $0x60c] sm:$0xff]
    %v1977 = vld [vmem:[%s7 + $0x614] sm:$0xff]
    %v1978 = vld [vmem:[%s7 + $0x61c] sm:$0xf]
    %v1979 = vld [vmem:[%s7 + $0x620] sm:$0xff]
    %v1980 = vld [vmem:[%s7 + $0x628] sm:$0xff]
    %v1981 = vld [vmem:[%s7 + $0x630] sm:$0xff]
    %v1982 = vld [vmem:[%s7 + $0x638] sm:$0xf]
    %v1983 = vld [vmem:[%s7 + $0x63c] sm:$0xff]
    %v1984 = vld [vmem:[%s7 + $0x644] sm:$0xff]
    %v1985 = vld [vmem:[%s7 + $0x64c] sm:$0xff]
    %v1986 = vld [vmem:[%s7 + $0x654] sm:$0xf]
    %v1987 = vld [vmem:[%s7 + $0x658] sm:$0xff]
    %v1988 = vld [vmem:[%s7 + $0x660] sm:$0xff]
    %v1989 = vld [vmem:[%s7 + $0x668] sm:$0xff]
    %v1990 = vld [vmem:[%s7 + $0x670] sm:$0xf]
    %v1991 = vld [vmem:[%s7 + $0x674] sm:$0xff]
    %v1992 = vld [vmem:[%s7 + $0x67c] sm:$0xff]
    %v1993 = vld [vmem:[%s7 + $0x684] sm:$0xff]
    %v1994 = vld [vmem:[%s7 + $0x68c] sm:$0xf]
    %v1995 = vld [vmem:[%s7 + $0x690] sm:$0xff]
    %v1996 = vld [vmem:[%s7 + $0x698] sm:$0xff]
    %v1997 = vld [vmem:[%s7 + $0x6a0] sm:$0xff]
    %v1998 = vld [vmem:[%s7 + $0x6a8] sm:$0xf]
    %v1999 = vld [vmem:[%s7 + $0x6ac] sm:$0xff]
    %v2000 = vld [vmem:[%s7 + $0x6b4] sm:$0xff]
    %v2001 = vld [vmem:[%s7 + $0x6bc] sm:$0xff]
    %v2002 = vld [vmem:[%s7 + $0x6c4] sm:$0xf]
    %v2003 = vld [vmem:[%s7 + $0x6c8] sm:$0xff]
    %v2004 = vld [vmem:[%s7 + $0x6d0] sm:$0xff]
    %v2005 = vld [vmem:[%s7 + $0x6d8] sm:$0xff]
    %v2006 = vld [vmem:[%s7 + $0x6e0] sm:$0xf]
    %v2007 = vld [vmem:[%s7 + $0x6e4] sm:$0xff]
    %v2008 = vld [vmem:[%s7 + $0x6ec] sm:$0xff]
    %v2009 = vld [vmem:[%s7 + $0x6f4] sm:$0xff]
    %v2010 = vld [vmem:[%s7 + $0x6fc] sm:$0xf]
    %v2011 = vld [vmem:[%s8] sm:$0x7f]
    %v2013 = vlaneseq
    %v2014 = vshrl.u32 %v2013, 7
    %v2015 = vsub.s32 0, %v2014
    %v2016 = vrot.slane %v2011, %v2015
    %v2017 = vlaneseq
    %v2018 = vshrl.u32 %v2017, 7
    %v2019 = vsub.s32 1, %v2018
    %v2020 = vrot.slane %v2011, %v2019
    %v2021 = vlaneseq
    %v2022 = vshrl.u32 %v2021, 7
    %v2023 = vsub.s32 2, %v2022
    %v2024 = vrot.slane %v2011, %v2023
    %v2025 = vlaneseq
    %v2026 = vshrl.u32 %v2025, 7
    %v2027 = vsub.s32 3, %v2026
    %v2028 = vrot.slane %v2011, %v2027
    %v2029 = vlaneseq
    %v2030 = vshrl.u32 %v2029, 7
    %v2031 = vsub.s32 4, %v2030
    %v2032 = vrot.slane %v2011, %v2031
    %v2033 = vlaneseq
    %v2034 = vshrl.u32 %v2033, 7
    %v2035 = vsub.s32 5, %v2034
    %v2036 = vrot.slane %v2011, %v2035
    %v2037 = vlaneseq
    %v2038 = vshrl.u32 %v2037, 7
    %v2039 = vsub.s32 6, %v2038
    %v2040 = vrot.slane %v2011, %v2039
    %v2304 = vunpack.c.l.b16 %v1755
    %v2305 = vunpack.c.h.b16 %v1755
    %v2306 = vunpack.c.l.b16 %v1756
    %v2307 = vunpack.c.h.b16 %v1756
    %v2308 = vunpack.c.l.b16 %v1757
    %v2309 = vunpack.c.h.b16 %v1757
    %v2310 = vunpack.c.l.b16 %v1758
    %v2311 = vunpack.c.l.b16 %v1759
    %v2312 = vunpack.c.h.b16 %v1759
    %v2313 = vunpack.c.l.b16 %v1760
    %v2314 = vunpack.c.h.b16 %v1760
    %v2315 = vunpack.c.l.b16 %v1761
    %v2316 = vunpack.c.h.b16 %v1761
    %v2317 = vunpack.c.l.b16 %v1762
    %v2318 = vunpack.c.l.b16 %v1763
    %v2319 = vunpack.c.h.b16 %v1763
    %v2320 = vunpack.c.l.b16 %v1764
    %v2321 = vunpack.c.h.b16 %v1764
    %v2322 = vunpack.c.l.b16 %v1765
    %v2323 = vunpack.c.h.b16 %v1765
    %v2324 = vunpack.c.l.b16 %v1766
    %v2325 = vunpack.c.l.b16 %v1767
    %v2326 = vunpack.c.h.b16 %v1767
    %v2327 = vunpack.c.l.b16 %v1768
    %v2328 = vunpack.c.h.b16 %v1768
    %v2329 = vunpack.c.l.b16 %v1769
    %v2330 = vunpack.c.h.b16 %v1769
    %v2331 = vunpack.c.l.b16 %v1770
    %v2332 = vunpack.c.l.b16 %v1771
    %v2333 = vunpack.c.h.b16 %v1771
    %v2334 = vunpack.c.l.b16 %v1772
    %v2335 = vunpack.c.h.b16 %v1772
    %v2336 = vunpack.c.l.b16 %v1773
    %v2337 = vunpack.c.h.b16 %v1773
    %v2338 = vunpack.c.l.b16 %v1774
    %v2339 = vunpack.c.l.b16 %v1775
    %v2340 = vunpack.c.h.b16 %v1775
    %v2341 = vunpack.c.l.b16 %v1776
    %v2342 = vunpack.c.h.b16 %v1776
    %v2343 = vunpack.c.l.b16 %v1777
    %v2344 = vunpack.c.h.b16 %v1777
    %v2345 = vunpack.c.l.b16 %v1778
    %v2346 = vunpack.c.l.b16 %v1779
    %v2347 = vunpack.c.h.b16 %v1779
    %v2348 = vunpack.c.l.b16 %v1780
    %v2349 = vunpack.c.h.b16 %v1780
    %v2350 = vunpack.c.l.b16 %v1781
    %v2351 = vunpack.c.h.b16 %v1781
    %v2352 = vunpack.c.l.b16 %v1782
    %v2353 = vunpack.c.l.b16 %v1783
    %v2354 = vunpack.c.h.b16 %v1783
    %v2355 = vunpack.c.l.b16 %v1784
    %v2356 = vunpack.c.h.b16 %v1784
    %v2357 = vunpack.c.l.b16 %v1785
    %v2358 = vunpack.c.h.b16 %v1785
    %v2359 = vunpack.c.l.b16 %v1786
    %v2360 = vunpack.c.l.b16 %v1787
    %v2361 = vunpack.c.h.b16 %v1787
    %v2362 = vunpack.c.l.b16 %v1788
    %v2363 = vunpack.c.h.b16 %v1788
    %v2364 = vunpack.c.l.b16 %v1789
    %v2365 = vunpack.c.h.b16 %v1789
    %v2366 = vunpack.c.l.b16 %v1790
    %v2367 = vunpack.c.l.b16 %v1791
    %v2368 = vunpack.c.h.b16 %v1791
    %v2369 = vunpack.c.l.b16 %v1792
    %v2370 = vunpack.c.h.b16 %v1792
    %v2371 = vunpack.c.l.b16 %v1793
    %v2372 = vunpack.c.h.b16 %v1793
    %v2373 = vunpack.c.l.b16 %v1794
    %v2374 = vunpack.c.l.b16 %v1795
    %v2375 = vunpack.c.h.b16 %v1795
    %v2376 = vunpack.c.l.b16 %v1796
    %v2377 = vunpack.c.h.b16 %v1796
    %v2378 = vunpack.c.l.b16 %v1797
    %v2379 = vunpack.c.h.b16 %v1797
    %v2380 = vunpack.c.l.b16 %v1798
    %v2381 = vunpack.c.l.b16 %v1799
    %v2382 = vunpack.c.h.b16 %v1799
    %v2383 = vunpack.c.l.b16 %v1800
    %v2384 = vunpack.c.h.b16 %v1800
    %v2385 = vunpack.c.l.b16 %v1801
    %v2386 = vunpack.c.h.b16 %v1801
    %v2387 = vunpack.c.l.b16 %v1802
    %v2388 = vunpack.c.l.b16 %v1803
    %v2389 = vunpack.c.h.b16 %v1803
    %v2390 = vunpack.c.l.b16 %v1804
    %v2391 = vunpack.c.h.b16 %v1804
    %v2392 = vunpack.c.l.b16 %v1805
    %v2393 = vunpack.c.h.b16 %v1805
    %v2394 = vunpack.c.l.b16 %v1806
    %v2395 = vunpack.c.l.b16 %v1807
    %v2396 = vunpack.c.h.b16 %v1807
    %v2397 = vunpack.c.l.b16 %v1808
    %v2398 = vunpack.c.h.b16 %v1808
    %v2399 = vunpack.c.l.b16 %v1809
    %v2400 = vunpack.c.h.b16 %v1809
    %v2401 = vunpack.c.l.b16 %v1810
    %v2402 = vunpack.c.l.b16 %v1811
    %v2403 = vunpack.c.h.b16 %v1811
    %v2404 = vunpack.c.l.b16 %v1812
    %v2405 = vunpack.c.h.b16 %v1812
    %v2406 = vunpack.c.l.b16 %v1813
    %v2407 = vunpack.c.h.b16 %v1813
    %v2408 = vunpack.c.l.b16 %v1814
    %v2409 = vunpack.c.l.b16 %v1815
    %v2410 = vunpack.c.h.b16 %v1815
    %v2411 = vunpack.c.l.b16 %v1816
    %v2412 = vunpack.c.h.b16 %v1816
    %v2413 = vunpack.c.l.b16 %v1817
    %v2414 = vunpack.c.h.b16 %v1817
    %v2415 = vunpack.c.l.b16 %v1818
    %v2416 = vunpack.c.l.b16 %v1819
    %v2417 = vunpack.c.h.b16 %v1819
    %v2418 = vunpack.c.l.b16 %v1820
    %v2419 = vunpack.c.h.b16 %v1820
    %v2420 = vunpack.c.l.b16 %v1821
    %v2421 = vunpack.c.h.b16 %v1821
    %v2422 = vunpack.c.l.b16 %v1822
    %v2423 = vunpack.c.l.b16 %v1823
    %v2424 = vunpack.c.h.b16 %v1823
    %v2425 = vunpack.c.l.b16 %v1824
    %v2426 = vunpack.c.h.b16 %v1824
    %v2427 = vunpack.c.l.b16 %v1825
    %v2428 = vunpack.c.h.b16 %v1825
    %v2429 = vunpack.c.l.b16 %v1826
    %v2430 = vunpack.c.l.b16 %v1827
    %v2431 = vunpack.c.h.b16 %v1827
    %v2432 = vunpack.c.l.b16 %v1828
    %v2433 = vunpack.c.h.b16 %v1828
    %v2434 = vunpack.c.l.b16 %v1829
    %v2435 = vunpack.c.h.b16 %v1829
    %v2436 = vunpack.c.l.b16 %v1830
    %v2437 = vunpack.c.l.b16 %v1831
    %v2438 = vunpack.c.h.b16 %v1831
    %v2439 = vunpack.c.l.b16 %v1832
    %v2440 = vunpack.c.h.b16 %v1832
    %v2441 = vunpack.c.l.b16 %v1833
    %v2442 = vunpack.c.h.b16 %v1833
    %v2443 = vunpack.c.l.b16 %v1834
    %v2444 = vunpack.c.l.b16 %v1835
    %v2445 = vunpack.c.h.b16 %v1835
    %v2446 = vunpack.c.l.b16 %v1836
    %v2447 = vunpack.c.h.b16 %v1836
    %v2448 = vunpack.c.l.b16 %v1837
    %v2449 = vunpack.c.h.b16 %v1837
    %v2450 = vunpack.c.l.b16 %v1838
    %v2451 = vunpack.c.l.b16 %v1839
    %v2452 = vunpack.c.h.b16 %v1839
    %v2453 = vunpack.c.l.b16 %v1840
    %v2454 = vunpack.c.h.b16 %v1840
    %v2455 = vunpack.c.l.b16 %v1841
    %v2456 = vunpack.c.h.b16 %v1841
    %v2457 = vunpack.c.l.b16 %v1842
    %v2458 = vunpack.c.l.b16 %v1843
    %v2459 = vunpack.c.h.b16 %v1843
    %v2460 = vunpack.c.l.b16 %v1844
    %v2461 = vunpack.c.h.b16 %v1844
    %v2462 = vunpack.c.l.b16 %v1845
    %v2463 = vunpack.c.h.b16 %v1845
    %v2464 = vunpack.c.l.b16 %v1846
    %v2465 = vunpack.c.l.b16 %v1847
    %v2466 = vunpack.c.h.b16 %v1847
    %v2467 = vunpack.c.l.b16 %v1848
    %v2468 = vunpack.c.h.b16 %v1848
    %v2469 = vunpack.c.l.b16 %v1849
    %v2470 = vunpack.c.h.b16 %v1849
    %v2471 = vunpack.c.l.b16 %v1850
    %v2472 = vunpack.c.l.b16 %v1851
    %v2473 = vunpack.c.h.b16 %v1851
    %v2474 = vunpack.c.l.b16 %v1852
    %v2475 = vunpack.c.h.b16 %v1852
    %v2476 = vunpack.c.l.b16 %v1853
    %v2477 = vunpack.c.h.b16 %v1853
    %v2478 = vunpack.c.l.b16 %v1854
    %v2479 = vunpack.c.l.b16 %v1855
    %v2480 = vunpack.c.h.b16 %v1855
    %v2481 = vunpack.c.l.b16 %v1856
    %v2482 = vunpack.c.h.b16 %v1856
    %v2483 = vunpack.c.l.b16 %v1857
    %v2484 = vunpack.c.h.b16 %v1857
    %v2485 = vunpack.c.l.b16 %v1858
    %v2486 = vunpack.c.l.b16 %v1859
    %v2487 = vunpack.c.h.b16 %v1859
    %v2488 = vunpack.c.l.b16 %v1860
    %v2489 = vunpack.c.h.b16 %v1860
    %v2490 = vunpack.c.l.b16 %v1861
    %v2491 = vunpack.c.h.b16 %v1861
    %v2492 = vunpack.c.l.b16 %v1862
    %v2493 = vunpack.c.l.b16 %v1863
    %v2494 = vunpack.c.h.b16 %v1863
    %v2495 = vunpack.c.l.b16 %v1864
    %v2496 = vunpack.c.h.b16 %v1864
    %v2497 = vunpack.c.l.b16 %v1865
    %v2498 = vunpack.c.h.b16 %v1865
    %v2499 = vunpack.c.l.b16 %v1866
    %v2500 = vunpack.c.l.b16 %v1867
    %v2501 = vunpack.c.h.b16 %v1867
    %v2502 = vunpack.c.l.b16 %v1868
    %v2503 = vunpack.c.h.b16 %v1868
    %v2504 = vunpack.c.l.b16 %v1869
    %v2505 = vunpack.c.h.b16 %v1869
    %v2506 = vunpack.c.l.b16 %v1870
    %v2507 = vunpack.c.l.b16 %v1871
    %v2508 = vunpack.c.h.b16 %v1871
    %v2509 = vunpack.c.l.b16 %v1872
    %v2510 = vunpack.c.h.b16 %v1872
    %v2511 = vunpack.c.l.b16 %v1873
    %v2512 = vunpack.c.h.b16 %v1873
    %v2513 = vunpack.c.l.b16 %v1874
    %v2514 = vunpack.c.l.b16 %v1875
    %v2515 = vunpack.c.h.b16 %v1875
    %v2516 = vunpack.c.l.b16 %v1876
    %v2517 = vunpack.c.h.b16 %v1876
    %v2518 = vunpack.c.l.b16 %v1877
    %v2519 = vunpack.c.h.b16 %v1877
    %v2520 = vunpack.c.l.b16 %v1878
    %v2521 = vunpack.c.l.b16 %v1879
    %v2522 = vunpack.c.h.b16 %v1879
    %v2523 = vunpack.c.l.b16 %v1880
    %v2524 = vunpack.c.h.b16 %v1880
    %v2525 = vunpack.c.l.b16 %v1881
    %v2526 = vunpack.c.h.b16 %v1881
    %v2527 = vunpack.c.l.b16 %v1882
    %v2528 = vunpack.c.l.b16 %v1883
    %v2529 = vunpack.c.h.b16 %v1883
    %v2530 = vunpack.c.l.b16 %v1884
    %v2531 = vunpack.c.h.b16 %v1884
    %v2532 = vunpack.c.l.b16 %v1885
    %v2533 = vunpack.c.h.b16 %v1885
    %v2534 = vunpack.c.l.b16 %v1886
    %v2535 = vunpack.c.l.b16 %v1887
    %v2536 = vunpack.c.h.b16 %v1887
    %v2537 = vunpack.c.l.b16 %v1888
    %v2538 = vunpack.c.h.b16 %v1888
    %v2539 = vunpack.c.l.b16 %v1889
    %v2540 = vunpack.c.h.b16 %v1889
    %v2541 = vunpack.c.l.b16 %v1890
    %v2542 = vunpack.c.l.b16 %v1891
    %v2543 = vunpack.c.h.b16 %v1891
    %v2544 = vunpack.c.l.b16 %v1892
    %v2545 = vunpack.c.h.b16 %v1892
    %v2546 = vunpack.c.l.b16 %v1893
    %v2547 = vunpack.c.h.b16 %v1893
    %v2548 = vunpack.c.l.b16 %v1894
    %v2549 = vunpack.c.l.b16 %v1895
    %v2550 = vunpack.c.h.b16 %v1895
    %v2551 = vunpack.c.l.b16 %v1896
    %v2552 = vunpack.c.h.b16 %v1896
    %v2553 = vunpack.c.l.b16 %v1897
    %v2554 = vunpack.c.h.b16 %v1897
    %v2555 = vunpack.c.l.b16 %v1898
    %v2556 = vunpack.c.l.b16 %v1899
    %v2557 = vunpack.c.h.b16 %v1899
    %v2558 = vunpack.c.l.b16 %v1900
    %v2559 = vunpack.c.h.b16 %v1900
    %v2560 = vunpack.c.l.b16 %v1901
    %v2561 = vunpack.c.h.b16 %v1901
    %v2562 = vunpack.c.l.b16 %v1902
    %v2563 = vunpack.c.l.b16 %v1903
    %v2564 = vunpack.c.h.b16 %v1903
    %v2565 = vunpack.c.l.b16 %v1904
    %v2566 = vunpack.c.h.b16 %v1904
    %v2567 = vunpack.c.l.b16 %v1905
    %v2568 = vunpack.c.h.b16 %v1905
    %v2569 = vunpack.c.l.b16 %v1906
    %v2570 = vunpack.c.l.b16 %v1907
    %v2571 = vunpack.c.h.b16 %v1907
    %v2572 = vunpack.c.l.b16 %v1908
    %v2573 = vunpack.c.h.b16 %v1908
    %v2574 = vunpack.c.l.b16 %v1909
    %v2575 = vunpack.c.h.b16 %v1909
    %v2576 = vunpack.c.l.b16 %v1910
    %v2577 = vunpack.c.l.b16 %v1911
    %v2578 = vunpack.c.h.b16 %v1911
    %v2579 = vunpack.c.l.b16 %v1912
    %v2580 = vunpack.c.h.b16 %v1912
    %v2581 = vunpack.c.l.b16 %v1913
    %v2582 = vunpack.c.h.b16 %v1913
    %v2583 = vunpack.c.l.b16 %v1914
    %v2584 = vunpack.c.l.b16 %v1915
    %v2585 = vunpack.c.h.b16 %v1915
    %v2586 = vunpack.c.l.b16 %v1916
    %v2587 = vunpack.c.h.b16 %v1916
    %v2588 = vunpack.c.l.b16 %v1917
    %v2589 = vunpack.c.h.b16 %v1917
    %v2590 = vunpack.c.l.b16 %v1918
    %v2591 = vunpack.c.l.b16 %v1919
    %v2592 = vunpack.c.h.b16 %v1919
    %v2593 = vunpack.c.l.b16 %v1920
    %v2594 = vunpack.c.h.b16 %v1920
    %v2595 = vunpack.c.l.b16 %v1921
    %v2596 = vunpack.c.h.b16 %v1921
    %v2597 = vunpack.c.l.b16 %v1922
    %v2598 = vunpack.c.l.b16 %v1923
    %v2599 = vunpack.c.h.b16 %v1923
    %v2600 = vunpack.c.l.b16 %v1924
    %v2601 = vunpack.c.h.b16 %v1924
    %v2602 = vunpack.c.l.b16 %v1925
    %v2603 = vunpack.c.h.b16 %v1925
    %v2604 = vunpack.c.l.b16 %v1926
    %v2605 = vunpack.c.l.b16 %v1927
    %v2606 = vunpack.c.h.b16 %v1927
    %v2607 = vunpack.c.l.b16 %v1928
    %v2608 = vunpack.c.h.b16 %v1928
    %v2609 = vunpack.c.l.b16 %v1929
    %v2610 = vunpack.c.h.b16 %v1929
    %v2611 = vunpack.c.l.b16 %v1930
    %v2612 = vunpack.c.l.b16 %v1931
    %v2613 = vunpack.c.h.b16 %v1931
    %v2614 = vunpack.c.l.b16 %v1932
    %v2615 = vunpack.c.h.b16 %v1932
    %v2616 = vunpack.c.l.b16 %v1933
    %v2617 = vunpack.c.h.b16 %v1933
    %v2618 = vunpack.c.l.b16 %v1934
    %v2619 = vunpack.c.l.b16 %v1935
    %v2620 = vunpack.c.h.b16 %v1935
    %v2621 = vunpack.c.l.b16 %v1936
    %v2622 = vunpack.c.h.b16 %v1936
    %v2623 = vunpack.c.l.b16 %v1937
    %v2624 = vunpack.c.h.b16 %v1937
    %v2625 = vunpack.c.l.b16 %v1938
    %v2626 = vunpack.c.l.b16 %v1939
    %v2627 = vunpack.c.h.b16 %v1939
    %v2628 = vunpack.c.l.b16 %v1940
    %v2629 = vunpack.c.h.b16 %v1940
    %v2630 = vunpack.c.l.b16 %v1941
    %v2631 = vunpack.c.h.b16 %v1941
    %v2632 = vunpack.c.l.b16 %v1942
    %v2633 = vunpack.c.l.b16 %v1943
    %v2634 = vunpack.c.h.b16 %v1943
    %v2635 = vunpack.c.l.b16 %v1944
    %v2636 = vunpack.c.h.b16 %v1944
    %v2637 = vunpack.c.l.b16 %v1945
    %v2638 = vunpack.c.h.b16 %v1945
    %v2639 = vunpack.c.l.b16 %v1946
    %v2640 = vunpack.c.l.b16 %v1947
    %v2641 = vunpack.c.h.b16 %v1947
    %v2642 = vunpack.c.l.b16 %v1948
    %v2643 = vunpack.c.h.b16 %v1948
    %v2644 = vunpack.c.l.b16 %v1949
    %v2645 = vunpack.c.h.b16 %v1949
    %v2646 = vunpack.c.l.b16 %v1950
    %v2647 = vunpack.c.l.b16 %v1951
    %v2648 = vunpack.c.h.b16 %v1951
    %v2649 = vunpack.c.l.b16 %v1952
    %v2650 = vunpack.c.h.b16 %v1952
    %v2651 = vunpack.c.l.b16 %v1953
    %v2652 = vunpack.c.h.b16 %v1953
    %v2653 = vunpack.c.l.b16 %v1954
    %v2654 = vunpack.c.l.b16 %v1955
    %v2655 = vunpack.c.h.b16 %v1955
    %v2656 = vunpack.c.l.b16 %v1956
    %v2657 = vunpack.c.h.b16 %v1956
    %v2658 = vunpack.c.l.b16 %v1957
    %v2659 = vunpack.c.h.b16 %v1957
    %v2660 = vunpack.c.l.b16 %v1958
    %v2661 = vunpack.c.l.b16 %v1959
    %v2662 = vunpack.c.h.b16 %v1959
    %v2663 = vunpack.c.l.b16 %v1960
    %v2664 = vunpack.c.h.b16 %v1960
    %v2665 = vunpack.c.l.b16 %v1961
    %v2666 = vunpack.c.h.b16 %v1961
    %v2667 = vunpack.c.l.b16 %v1962
    %v2668 = vunpack.c.l.b16 %v1963
    %v2669 = vunpack.c.h.b16 %v1963
    %v2670 = vunpack.c.l.b16 %v1964
    %v2671 = vunpack.c.h.b16 %v1964
    %v2672 = vunpack.c.l.b16 %v1965
    %v2673 = vunpack.c.h.b16 %v1965
    %v2674 = vunpack.c.l.b16 %v1966
    %v2675 = vunpack.c.l.b16 %v1967
    %v2676 = vunpack.c.h.b16 %v1967
    %v2677 = vunpack.c.l.b16 %v1968
    %v2678 = vunpack.c.h.b16 %v1968
    %v2679 = vunpack.c.l.b16 %v1969
    %v2680 = vunpack.c.h.b16 %v1969
    %v2681 = vunpack.c.l.b16 %v1970
    %v2682 = vunpack.c.l.b16 %v1971
    %v2683 = vunpack.c.h.b16 %v1971
    %v2684 = vunpack.c.l.b16 %v1972
    %v2685 = vunpack.c.h.b16 %v1972
    %v2686 = vunpack.c.l.b16 %v1973
    %v2687 = vunpack.c.h.b16 %v1973
    %v2688 = vunpack.c.l.b16 %v1974
    %v2689 = vunpack.c.l.b16 %v1975
    %v2690 = vunpack.c.h.b16 %v1975
    %v2691 = vunpack.c.l.b16 %v1976
    %v2692 = vunpack.c.h.b16 %v1976
    %v2693 = vunpack.c.l.b16 %v1977
    %v2694 = vunpack.c.h.b16 %v1977
    %v2695 = vunpack.c.l.b16 %v1978
    %v2696 = vunpack.c.l.b16 %v1979
    %v2697 = vunpack.c.h.b16 %v1979
    %v2698 = vunpack.c.l.b16 %v1980
    %v2699 = vunpack.c.h.b16 %v1980
    %v2700 = vunpack.c.l.b16 %v1981
    %v2701 = vunpack.c.h.b16 %v1981
    %v2702 = vunpack.c.l.b16 %v1982
    %v2703 = vunpack.c.l.b16 %v1983
    %v2704 = vunpack.c.h.b16 %v1983
    %v2705 = vunpack.c.l.b16 %v1984
    %v2706 = vunpack.c.h.b16 %v1984
    %v2707 = vunpack.c.l.b16 %v1985
    %v2708 = vunpack.c.h.b16 %v1985
    %v2709 = vunpack.c.l.b16 %v1986
    %v2710 = vunpack.c.l.b16 %v1987
    %v2711 = vunpack.c.h.b16 %v1987
    %v2712 = vunpack.c.l.b16 %v1988
    %v2713 = vunpack.c.h.b16 %v1988
    %v2714 = vunpack.c.l.b16 %v1989
    %v2715 = vunpack.c.h.b16 %v1989
    %v2716 = vunpack.c.l.b16 %v1990
    %v2717 = vunpack.c.l.b16 %v1991
    %v2718 = vunpack.c.h.b16 %v1991
    %v2719 = vunpack.c.l.b16 %v1992
    %v2720 = vunpack.c.h.b16 %v1992
    %v2721 = vunpack.c.l.b16 %v1993
    %v2722 = vunpack.c.h.b16 %v1993
    %v2723 = vunpack.c.l.b16 %v1994
    %v2724 = vunpack.c.l.b16 %v1995
    %v2725 = vunpack.c.h.b16 %v1995
    %v2726 = vunpack.c.l.b16 %v1996
    %v2727 = vunpack.c.h.b16 %v1996
    %v2728 = vunpack.c.l.b16 %v1997
    %v2729 = vunpack.c.h.b16 %v1997
    %v2730 = vunpack.c.l.b16 %v1998
    %v2731 = vunpack.c.l.b16 %v1999
    %v2732 = vunpack.c.h.b16 %v1999
    %v2733 = vunpack.c.l.b16 %v2000
    %v2734 = vunpack.c.h.b16 %v2000
    %v2735 = vunpack.c.l.b16 %v2001
    %v2736 = vunpack.c.h.b16 %v2001
    %v2737 = vunpack.c.l.b16 %v2002
    %v2738 = vunpack.c.l.b16 %v2003
    %v2739 = vunpack.c.h.b16 %v2003
    %v2740 = vunpack.c.l.b16 %v2004
    %v2741 = vunpack.c.h.b16 %v2004
    %v2742 = vunpack.c.l.b16 %v2005
    %v2743 = vunpack.c.h.b16 %v2005
    %v2744 = vunpack.c.l.b16 %v2006
    %v2745 = vunpack.c.l.b16 %v2007
    %v2746 = vunpack.c.h.b16 %v2007
    %v2747 = vunpack.c.l.b16 %v2008
    %v2748 = vunpack.c.h.b16 %v2008
    %v2749 = vunpack.c.l.b16 %v2009
    %v2750 = vunpack.c.h.b16 %v2009
    %v2751 = vunpack.c.l.b16 %v2010
    %v2752 = vpack.c.b16 %v2311, %v2304
    %v2753 = vpack.c.b16 %v2312, %v2305
    %v2754 = vpack.c.b16 %v2313, %v2306
    %v2755 = vpack.c.b16 %v2314, %v2307
    %v2756 = vpack.c.b16 %v2315, %v2308
    %v2757 = vpack.c.b16 %v2316, %v2309
    %v2758 = vpack.c.b16 %v2317, %v2310
    %v2759 = vpack.c.b16 %v2325, %v2318
    %v2760 = vpack.c.b16 %v2326, %v2319
    %v2761 = vpack.c.b16 %v2327, %v2320
    %v2762 = vpack.c.b16 %v2328, %v2321
    %v2763 = vpack.c.b16 %v2329, %v2322
    %v2764 = vpack.c.b16 %v2330, %v2323
    %v2765 = vpack.c.b16 %v2331, %v2324
    %v2766 = vpack.c.b16 %v2339, %v2332
    %v2767 = vpack.c.b16 %v2340, %v2333
    %v2768 = vpack.c.b16 %v2341, %v2334
    %v2769 = vpack.c.b16 %v2342, %v2335
    %v2770 = vpack.c.b16 %v2343, %v2336
    %v2771 = vpack.c.b16 %v2344, %v2337
    %v2772 = vpack.c.b16 %v2345, %v2338
    %v2773 = vpack.c.b16 %v2353, %v2346
    %v2774 = vpack.c.b16 %v2354, %v2347
    %v2775 = vpack.c.b16 %v2355, %v2348
    %v2776 = vpack.c.b16 %v2356, %v2349
    %v2777 = vpack.c.b16 %v2357, %v2350
    %v2778 = vpack.c.b16 %v2358, %v2351
    %v2779 = vpack.c.b16 %v2359, %v2352
    %v2780 = vpack.c.b16 %v2367, %v2360
    %v2781 = vpack.c.b16 %v2368, %v2361
    %v2782 = vpack.c.b16 %v2369, %v2362
    %v2783 = vpack.c.b16 %v2370, %v2363
    %v2784 = vpack.c.b16 %v2371, %v2364
    %v2785 = vpack.c.b16 %v2372, %v2365
    %v2786 = vpack.c.b16 %v2373, %v2366
    %v2787 = vpack.c.b16 %v2381, %v2374
    %v2788 = vpack.c.b16 %v2382, %v2375
    %v2789 = vpack.c.b16 %v2383, %v2376
    %v2790 = vpack.c.b16 %v2384, %v2377
    %v2791 = vpack.c.b16 %v2385, %v2378
    %v2792 = vpack.c.b16 %v2386, %v2379
    %v2793 = vpack.c.b16 %v2387, %v2380
    %v2794 = vpack.c.b16 %v2395, %v2388
    %v2795 = vpack.c.b16 %v2396, %v2389
    %v2796 = vpack.c.b16 %v2397, %v2390
    %v2797 = vpack.c.b16 %v2398, %v2391
    %v2798 = vpack.c.b16 %v2399, %v2392
    %v2799 = vpack.c.b16 %v2400, %v2393
    %v2800 = vpack.c.b16 %v2401, %v2394
    %v2801 = vpack.c.b16 %v2409, %v2402
    %v2802 = vpack.c.b16 %v2410, %v2403
    %v2803 = vpack.c.b16 %v2411, %v2404
    %v2804 = vpack.c.b16 %v2412, %v2405
    %v2805 = vpack.c.b16 %v2413, %v2406
    %v2806 = vpack.c.b16 %v2414, %v2407
    %v2807 = vpack.c.b16 %v2415, %v2408
    %v2808 = vpack.c.b16 %v2423, %v2416
    %v2809 = vpack.c.b16 %v2424, %v2417
    %v2810 = vpack.c.b16 %v2425, %v2418
    %v2811 = vpack.c.b16 %v2426, %v2419
    %v2812 = vpack.c.b16 %v2427, %v2420
    %v2813 = vpack.c.b16 %v2428, %v2421
    %v2814 = vpack.c.b16 %v2429, %v2422
    %v2815 = vpack.c.b16 %v2437, %v2430
    %v2816 = vpack.c.b16 %v2438, %v2431
    %v2817 = vpack.c.b16 %v2439, %v2432
    %v2818 = vpack.c.b16 %v2440, %v2433
    %v2819 = vpack.c.b16 %v2441, %v2434
    %v2820 = vpack.c.b16 %v2442, %v2435
    %v2821 = vpack.c.b16 %v2443, %v2436
    %v2822 = vpack.c.b16 %v2451, %v2444
    %v2823 = vpack.c.b16 %v2452, %v2445
    %v2824 = vpack.c.b16 %v2453, %v2446
    %v2825 = vpack.c.b16 %v2454, %v2447
    %v2826 = vpack.c.b16 %v2455, %v2448
    %v2827 = vpack.c.b16 %v2456, %v2449
    %v2828 = vpack.c.b16 %v2457, %v2450
    %v2829 = vpack.c.b16 %v2465, %v2458
    %v2830 = vpack.c.b16 %v2466, %v2459
    %v2831 = vpack.c.b16 %v2467, %v2460
    %v2832 = vpack.c.b16 %v2468, %v2461
    %v2833 = vpack.c.b16 %v2469, %v2462
    %v2834 = vpack.c.b16 %v2470, %v2463
    %v2835 = vpack.c.b16 %v2471, %v2464
    %v2836 = vpack.c.b16 %v2479, %v2472
    %v2837 = vpack.c.b16 %v2480, %v2473
    %v2838 = vpack.c.b16 %v2481, %v2474
    %v2839 = vpack.c.b16 %v2482, %v2475
    %v2840 = vpack.c.b16 %v2483, %v2476
    %v2841 = vpack.c.b16 %v2484, %v2477
    %v2842 = vpack.c.b16 %v2485, %v2478
    %v2843 = vpack.c.b16 %v2493, %v2486
    %v2844 = vpack.c.b16 %v2494, %v2487
    %v2845 = vpack.c.b16 %v2495, %v2488
    %v2846 = vpack.c.b16 %v2496, %v2489
    %v2847 = vpack.c.b16 %v2497, %v2490
    %v2848 = vpack.c.b16 %v2498, %v2491
    %v2849 = vpack.c.b16 %v2499, %v2492
    %v2850 = vpack.c.b16 %v2507, %v2500
    %v2851 = vpack.c.b16 %v2508, %v2501
    %v2852 = vpack.c.b16 %v2509, %v2502
    %v2853 = vpack.c.b16 %v2510, %v2503
    %v2854 = vpack.c.b16 %v2511, %v2504
    %v2855 = vpack.c.b16 %v2512, %v2505
    %v2856 = vpack.c.b16 %v2513, %v2506
    %v2857 = vpack.c.b16 %v2521, %v2514
    %v2858 = vpack.c.b16 %v2522, %v2515
    %v2859 = vpack.c.b16 %v2523, %v2516
    %v2860 = vpack.c.b16 %v2524, %v2517
    %v2861 = vpack.c.b16 %v2525, %v2518
    %v2862 = vpack.c.b16 %v2526, %v2519
    %v2863 = vpack.c.b16 %v2527, %v2520
    %v2864 = vpack.c.b16 %v2535, %v2528
    %v2865 = vpack.c.b16 %v2536, %v2529
    %v2866 = vpack.c.b16 %v2537, %v2530
    %v2867 = vpack.c.b16 %v2538, %v2531
    %v2868 = vpack.c.b16 %v2539, %v2532
    %v2869 = vpack.c.b16 %v2540, %v2533
    %v2870 = vpack.c.b16 %v2541, %v2534
    %v2871 = vpack.c.b16 %v2549, %v2542
    %v2872 = vpack.c.b16 %v2550, %v2543
    %v2873 = vpack.c.b16 %v2551, %v2544
    %v2874 = vpack.c.b16 %v2552, %v2545
    %v2875 = vpack.c.b16 %v2553, %v2546
    %v2876 = vpack.c.b16 %v2554, %v2547
    %v2877 = vpack.c.b16 %v2555, %v2548
    %v2878 = vpack.c.b16 %v2563, %v2556
    %v2879 = vpack.c.b16 %v2564, %v2557
    %v2880 = vpack.c.b16 %v2565, %v2558
    %v2881 = vpack.c.b16 %v2566, %v2559
    %v2882 = vpack.c.b16 %v2567, %v2560
    %v2883 = vpack.c.b16 %v2568, %v2561
    %v2884 = vpack.c.b16 %v2569, %v2562
    %v2885 = vpack.c.b16 %v2577, %v2570
    %v2886 = vpack.c.b16 %v2578, %v2571
    %v2887 = vpack.c.b16 %v2579, %v2572
    %v2888 = vpack.c.b16 %v2580, %v2573
    %v2889 = vpack.c.b16 %v2581, %v2574
    %v2890 = vpack.c.b16 %v2582, %v2575
    %v2891 = vpack.c.b16 %v2583, %v2576
    %v2892 = vpack.c.b16 %v2591, %v2584
    %v2893 = vpack.c.b16 %v2592, %v2585
    %v2894 = vpack.c.b16 %v2593, %v2586
    %v2895 = vpack.c.b16 %v2594, %v2587
    %v2896 = vpack.c.b16 %v2595, %v2588
    %v2897 = vpack.c.b16 %v2596, %v2589
    %v2898 = vpack.c.b16 %v2597, %v2590
    %v2899 = vpack.c.b16 %v2605, %v2598
    %v2900 = vpack.c.b16 %v2606, %v2599
    %v2901 = vpack.c.b16 %v2607, %v2600
    %v2902 = vpack.c.b16 %v2608, %v2601
    %v2903 = vpack.c.b16 %v2609, %v2602
    %v2904 = vpack.c.b16 %v2610, %v2603
    %v2905 = vpack.c.b16 %v2611, %v2604
    %v2906 = vpack.c.b16 %v2619, %v2612
    %v2907 = vpack.c.b16 %v2620, %v2613
    %v2908 = vpack.c.b16 %v2621, %v2614
    %v2909 = vpack.c.b16 %v2622, %v2615
    %v2910 = vpack.c.b16 %v2623, %v2616
    %v2911 = vpack.c.b16 %v2624, %v2617
    %v2912 = vpack.c.b16 %v2625, %v2618
    %v2913 = vpack.c.b16 %v2633, %v2626
    %v2914 = vpack.c.b16 %v2634, %v2627
    %v2915 = vpack.c.b16 %v2635, %v2628
    %v2916 = vpack.c.b16 %v2636, %v2629
    %v2917 = vpack.c.b16 %v2637, %v2630
    %v2918 = vpack.c.b16 %v2638, %v2631
    %v2919 = vpack.c.b16 %v2639, %v2632
    %v2920 = vpack.c.b16 %v2647, %v2640
    %v2921 = vpack.c.b16 %v2648, %v2641
    %v2922 = vpack.c.b16 %v2649, %v2642
    %v2923 = vpack.c.b16 %v2650, %v2643
    %v2924 = vpack.c.b16 %v2651, %v2644
    %v2925 = vpack.c.b16 %v2652, %v2645
    %v2926 = vpack.c.b16 %v2653, %v2646
    %v2927 = vpack.c.b16 %v2661, %v2654
    %v2928 = vpack.c.b16 %v2662, %v2655
    %v2929 = vpack.c.b16 %v2663, %v2656
    %v2930 = vpack.c.b16 %v2664, %v2657
    %v2931 = vpack.c.b16 %v2665, %v2658
    %v2932 = vpack.c.b16 %v2666, %v2659
    %v2933 = vpack.c.b16 %v2667, %v2660
    %v2934 = vpack.c.b16 %v2675, %v2668
    %v2935 = vpack.c.b16 %v2676, %v2669
    %v2936 = vpack.c.b16 %v2677, %v2670
    %v2937 = vpack.c.b16 %v2678, %v2671
    %v2938 = vpack.c.b16 %v2679, %v2672
    %v2939 = vpack.c.b16 %v2680, %v2673
    %v2940 = vpack.c.b16 %v2681, %v2674
    %v2941 = vpack.c.b16 %v2689, %v2682
    %v2942 = vpack.c.b16 %v2690, %v2683
    %v2943 = vpack.c.b16 %v2691, %v2684
    %v2944 = vpack.c.b16 %v2692, %v2685
    %v2945 = vpack.c.b16 %v2693, %v2686
    %v2946 = vpack.c.b16 %v2694, %v2687
    %v2947 = vpack.c.b16 %v2695, %v2688
    %v2948 = vpack.c.b16 %v2703, %v2696
    %v2949 = vpack.c.b16 %v2704, %v2697
    %v2950 = vpack.c.b16 %v2705, %v2698
    %v2951 = vpack.c.b16 %v2706, %v2699
    %v2952 = vpack.c.b16 %v2707, %v2700
    %v2953 = vpack.c.b16 %v2708, %v2701
    %v2954 = vpack.c.b16 %v2709, %v2702
    %v2955 = vpack.c.b16 %v2717, %v2710
    %v2956 = vpack.c.b16 %v2718, %v2711
    %v2957 = vpack.c.b16 %v2719, %v2712
    %v2958 = vpack.c.b16 %v2720, %v2713
    %v2959 = vpack.c.b16 %v2721, %v2714
    %v2960 = vpack.c.b16 %v2722, %v2715
    %v2961 = vpack.c.b16 %v2723, %v2716
    %v2962 = vpack.c.b16 %v2731, %v2724
    %v2963 = vpack.c.b16 %v2732, %v2725
    %v2964 = vpack.c.b16 %v2733, %v2726
    %v2965 = vpack.c.b16 %v2734, %v2727
    %v2966 = vpack.c.b16 %v2735, %v2728
    %v2967 = vpack.c.b16 %v2736, %v2729
    %v2968 = vpack.c.b16 %v2737, %v2730
    %v2969 = vpack.c.b16 %v2745, %v2738
    %v2970 = vpack.c.b16 %v2746, %v2739
    %v2971 = vpack.c.b16 %v2747, %v2740
    %v2972 = vpack.c.b16 %v2748, %v2741
    %v2973 = vpack.c.b16 %v2749, %v2742
    %v2974 = vpack.c.b16 %v2750, %v2743
    %v2975 = vpack.c.b16 %v2751, %v2744
    %3200 = vmatprep.subr.bf16.mxu0 %v2753
    %3201 = vmatpush1.bf16.msra.mxu0 %v2752
    %3202 = vmatprep.subr.bf16.mxu0 %v2760
    %3203 = vmatpush1.bf16.msra.mxu0 %v2759
    %3204 = vmatprep.subr.bf16.mxu0 %v2767
    %3205 = vmatpush1.bf16.msra.mxu0 %v2766
    %3206 = vmatprep.subr.bf16.mxu0 %v2774
    %3207 = vmatpush1.bf16.msra.mxu0 %v2773
    %3208 = vmatprep.subr.bf16.mxu0 %v2781
    %3209 = vmatpush1.bf16.msra.mxu0 %v2780
    %3210 = vmatprep.subr.bf16.mxu0 %v2788
    %3211 = vmatpush1.bf16.msra.mxu0 %v2787
    %3212 = vmatprep.subr.bf16.mxu0 %v2795
    %3213 = vmatpush1.bf16.msra.mxu0 %v2794
    %3214 = vmatprep.subr.bf16.mxu0 %v2802
    %3215 = vmatpush1.bf16.msra.mxu0 %v2801
    %3216 = vmatprep.subr.bf16.mxu0 %v2809
    %3217 = vmatpush1.bf16.msra.mxu0 %v2808
    %3218 = vmatprep.subr.bf16.mxu0 %v2816
    %3219 = vmatpush1.bf16.msra.mxu0 %v2815
    %3220 = vmatprep.subr.bf16.mxu0 %v2823
    %3221 = vmatpush1.bf16.msra.mxu0 %v2822
    %3222 = vmatprep.subr.bf16.mxu0 %v2830
    %3223 = vmatpush1.bf16.msra.mxu0 %v2829
    %3224 = vmatprep.subr.bf16.mxu0 %v2837
    %3225 = vmatpush1.bf16.msra.mxu0 %v2836
    %3226 = vmatprep.subr.bf16.mxu0 %v2844
    %3227 = vmatpush1.bf16.msra.mxu0 %v2843
    %3228 = vmatprep.subr.bf16.mxu0 %v2851
    %3229 = vmatpush1.bf16.msra.mxu0 %v2850
    %3230 = vmatprep.subr.bf16.mxu0 %v2858
    %3231 = vmatpush1.bf16.msra.mxu0 %v2857
    %3232 = vmatprep.mubr.bf16.mxu0 %v1752
    %3233 = vmatmul.mubr.bf16.gmra.mrb[0].mxu0 %v1751
    %v3234 = vpop.f32.mrb[0].mxu0
    %v3235 = vadd.f32 %v2016, %v3234
    %v3236 = vpop.f32.mrb[0].mxu0
    %v3237 = vadd.f32 %v2020, %v3236
    %v3238 = vpop.f32.mrb[0].mxu0
    %v3239 = vpop.f32.mrb[0].mxu0
    %3240 = vdwg.mxu0
    %3241 = vmatprep.subr.bf16.mxu0 %v2865
    %3242 = vmatpush1.bf16.msra.mxu0 %v2864
    %3243 = vmatprep.subr.bf16.mxu0 %v2872
    %3244 = vmatpush1.bf16.msra.mxu0 %v2871
    %3245 = vmatprep.subr.bf16.mxu0 %v2879
    %3246 = vmatpush1.bf16.msra.mxu0 %v2878
    %3247 = vmatprep.subr.bf16.mxu0 %v2886
    %3248 = vmatpush1.bf16.msra.mxu0 %v2885
    %3249 = vmatprep.subr.bf16.mxu0 %v2893
    %3250 = vmatpush1.bf16.msra.mxu0 %v2892
    %3251 = vmatprep.subr.bf16.mxu0 %v2900
    %3252 = vmatpush1.bf16.msra.mxu0 %v2899
    %3253 = vmatprep.subr.bf16.mxu0 %v2907
    %3254 = vmatpush1.bf16.msra.mxu0 %v2906
    %3255 = vmatprep.subr.bf16.mxu0 %v2914
    %3256 = vmatpush1.bf16.msra.mxu0 %v2913
    %3257 = vmatprep.subr.bf16.mxu0 %v2921
    %3258 = vmatpush1.bf16.msra.mxu0 %v2920
    %3259 = vmatprep.subr.bf16.mxu0 %v2928
    %3260 = vmatpush1.bf16.msra.mxu0 %v2927
    %3261 = vmatprep.subr.bf16.mxu0 %v2935
    %3262 = vmatpush1.bf16.msra.mxu0 %v2934
    %3263 = vmatprep.subr.bf16.mxu0 %v2942
    %3264 = vmatpush1.bf16.msra.mxu0 %v2941
    %3265 = vmatprep.subr.bf16.mxu0 %v2949
    %3266 = vmatpush1.bf16.msra.mxu0 %v2948
    %3267 = vmatprep.subr.bf16.mxu0 %v2956
    %3268 = vmatpush1.bf16.msra.mxu0 %v2955
    %3269 = vmatprep.subr.bf16.mxu0 %v2963
    %3270 = vmatpush1.bf16.msra.mxu0 %v2962
    %3271 = vmatprep.subr.bf16.mxu0 %v2970
    %3272 = vmatpush1.bf16.msra.mxu0 %v2969
    %3273 = vmatprep.mubr.bf16.mxu0 %v1754
    %3274 = vmatmul.mubr.bf16.gmra.mrb[0].mxu0 %v1753
    %v3275 = vpop.f32.mrb[0].mxu0
    %v3276 = vadd.f32 %v3235, %v3275
    %v3277 = vpop.f32.mrb[0].mxu0
    %v3278 = vadd.f32 %v3237, %v3277
    %v3279 = vpop.f32.mrb[0].mxu0
    %v3280 = vpop.f32.mrb[0].mxu0
    %3281 = vdwg.mxu0
    %3282 = vmatprep.subr.bf16.mxu0 %v2755
    %3283 = vmatpush1.bf16.msra.mxu0 %v2754
    %3284 = vmatprep.subr.bf16.mxu0 %v2762
    %3285 = vmatpush1.bf16.msra.mxu0 %v2761
    %3286 = vmatprep.subr.bf16.mxu0 %v2769
    %3287 = vmatpush1.bf16.msra.mxu0 %v2768
    %3288 = vmatprep.subr.bf16.mxu0 %v2776
    %3289 = vmatpush1.bf16.msra.mxu0 %v2775
    %3290 = vmatprep.subr.bf16.mxu0 %v2783
    %3291 = vmatpush1.bf16.msra.mxu0 %v2782
    %3292 = vmatprep.subr.bf16.mxu0 %v2790
    %3293 = vmatpush1.bf16.msra.mxu0 %v2789
    %3294 = vmatprep.subr.bf16.mxu0 %v2797
    %3295 = vmatpush1.bf16.msra.mxu0 %v2796
    %3296 = vmatprep.subr.bf16.mxu0 %v2804
    %3297 = vmatpush1.bf16.msra.mxu0 %v2803
    %3298 = vmatprep.subr.bf16.mxu0 %v2811
    %3299 = vmatpush1.bf16.msra.mxu0 %v2810
    %3300 = vmatprep.subr.bf16.mxu0 %v2818
    %3301 = vmatpush1.bf16.msra.mxu0 %v2817
    %3302 = vmatprep.subr.bf16.mxu0 %v2825
    %3303 = vmatpush1.bf16.msra.mxu0 %v2824
    %3304 = vmatprep.subr.bf16.mxu0 %v2832
    %3305 = vmatpush1.bf16.msra.mxu0 %v2831
    %3306 = vmatprep.subr.bf16.mxu0 %v2839
    %3307 = vmatpush1.bf16.msra.mxu0 %v2838
    %3308 = vmatprep.subr.bf16.mxu0 %v2846
    %3309 = vmatpush1.bf16.msra.mxu0 %v2845
    %3310 = vmatprep.subr.bf16.mxu0 %v2853
    %3311 = vmatpush1.bf16.msra.mxu0 %v2852
    %3312 = vmatprep.subr.bf16.mxu0 %v2860
    %3313 = vmatpush1.bf16.msra.mxu0 %v2859
    %3314 = vmatprep.mubr.bf16.mxu0 %v1752
    %3315 = vmatmul.mubr.bf16.gmra.mrb[0].mxu0 %v1751
    %v3316 = vpop.f32.mrb[0].mxu0
    %v3317 = vadd.f32 %v2024, %v3316
    %v3318 = vpop.f32.mrb[0].mxu0
    %v3319 = vadd.f32 %v2028, %v3318
    %v3320 = vpop.f32.mrb[0].mxu0
    %v3321 = vpop.f32.mrb[0].mxu0
    %3322 = vdwg.mxu0
    %3323 = vmatprep.subr.bf16.mxu0 %v2867
    %3324 = vmatpush1.bf16.msra.mxu0 %v2866
    %3325 = vmatprep.subr.bf16.mxu0 %v2874
    %3326 = vmatpush1.bf16.msra.mxu0 %v2873
    %3327 = vmatprep.subr.bf16.mxu0 %v2881
    %3328 = vmatpush1.bf16.msra.mxu0 %v2880
    %3329 = vmatprep.subr.bf16.mxu0 %v2888
    %3330 = vmatpush1.bf16.msra.mxu0 %v2887
    %3331 = vmatprep.subr.bf16.mxu0 %v2895
    %3332 = vmatpush1.bf16.msra.mxu0 %v2894
    %3333 = vmatprep.subr.bf16.mxu0 %v2902
    %3334 = vmatpush1.bf16.msra.mxu0 %v2901
    %3335 = vmatprep.subr.bf16.mxu0 %v2909
    %3336 = vmatpush1.bf16.msra.mxu0 %v2908
    %3337 = vmatprep.subr.bf16.mxu0 %v2916
    %3338 = vmatpush1.bf16.msra.mxu0 %v2915
    %3339 = vmatprep.subr.bf16.mxu0 %v2923
    %3340 = vmatpush1.bf16.msra.mxu0 %v2922
    %3341 = vmatprep.subr.bf16.mxu0 %v2930
    %3342 = vmatpush1.bf16.msra.mxu0 %v2929
    %3343 = vmatprep.subr.bf16.mxu0 %v2937
    %3344 = vmatpush1.bf16.msra.mxu0 %v2936
    %3345 = vmatprep.subr.bf16.mxu0 %v2944
    %3346 = vmatpush1.bf16.msra.mxu0 %v2943
    %3347 = vmatprep.subr.bf16.mxu0 %v2951
    %3348 = vmatpush1.bf16.msra.mxu0 %v2950
    %3349 = vmatprep.subr.bf16.mxu0 %v2958
    %3350 = vmatpush1.bf16.msra.mxu0 %v2957
    %3351 = vmatprep.subr.bf16.mxu0 %v2965
    %3352 = vmatpush1.bf16.msra.mxu0 %v2964
    %3353 = vmatprep.subr.bf16.mxu0 %v2972
    %3354 = vmatpush1.bf16.msra.mxu0 %v2971
    %3355 = vmatprep.mubr.bf16.mxu0 %v1754
    %3356 = vmatmul.mubr.bf16.gmra.mrb[0].mxu0 %v1753
    %v3357 = vpop.f32.mrb[0].mxu0
    %v3358 = vadd.f32 %v3317, %v3357
    %v3359 = vpop.f32.mrb[0].mxu0
    %v3360 = vadd.f32 %v3319, %v3359
    %v3361 = vpop.f32.mrb[0].mxu0
    %v3362 = vpop.f32.mrb[0].mxu0
    %3363 = vdwg.mxu0
    %3364 = vmatprep.subr.bf16.mxu0 %v2757
    %3365 = vmatpush1.bf16.msra.mxu0 %v2756
    %3366 = vmatprep.subr.bf16.mxu0 %v2764
    %3367 = vmatpush1.bf16.msra.mxu0 %v2763
    %3368 = vmatprep.subr.bf16.mxu0 %v2771
    %3369 = vmatpush1.bf16.msra.mxu0 %v2770
    %3370 = vmatprep.subr.bf16.mxu0 %v2778
    %3371 = vmatpush1.bf16.msra.mxu0 %v2777
    %3372 = vmatprep.subr.bf16.mxu0 %v2785
    %3373 = vmatpush1.bf16.msra.mxu0 %v2784
    %3374 = vmatprep.subr.bf16.mxu0 %v2792
    %3375 = vmatpush1.bf16.msra.mxu0 %v2791
    %3376 = vmatprep.subr.bf16.mxu0 %v2799
    %3377 = vmatpush1.bf16.msra.mxu0 %v2798
    %3378 = vmatprep.subr.bf16.mxu0 %v2806
    %3379 = vmatpush1.bf16.msra.mxu0 %v2805
    %3380 = vmatprep.subr.bf16.mxu0 %v2813
    %3381 = vmatpush1.bf16.msra.mxu0 %v2812
    %3382 = vmatprep.subr.bf16.mxu0 %v2820
    %3383 = vmatpush1.bf16.msra.mxu0 %v2819
    %3384 = vmatprep.subr.bf16.mxu0 %v2827
    %3385 = vmatpush1.bf16.msra.mxu0 %v2826
    %3386 = vmatprep.subr.bf16.mxu0 %v2834
    %3387 = vmatpush1.bf16.msra.mxu0 %v2833
    %3388 = vmatprep.subr.bf16.mxu0 %v2841
    %3389 = vmatpush1.bf16.msra.mxu0 %v2840
    %3390 = vmatprep.subr.bf16.mxu0 %v2848
    %3391 = vmatpush1.bf16.msra.mxu0 %v2847
    %3392 = vmatprep.subr.bf16.mxu0 %v2855
    %3393 = vmatpush1.bf16.msra.mxu0 %v2854
    %3394 = vmatprep.subr.bf16.mxu0 %v2862
    %3395 = vmatpush1.bf16.msra.mxu0 %v2861
    %3396 = vmatprep.mubr.bf16.mxu0 %v1752
    %3397 = vmatmul.mubr.bf16.gmra.mrb[0].mxu0 %v1751
    %v3398 = vpop.f32.mrb[0].mxu0
    %v3399 = vadd.f32 %v2032, %v3398
    %v3400 = vpop.f32.mrb[0].mxu0
    %v3401 = vadd.f32 %v2036, %v3400
    %v3402 = vpop.f32.mrb[0].mxu0
    %v3403 = vpop.f32.mrb[0].mxu0
    %3404 = vdwg.mxu0
    %3405 = vmatprep.subr.bf16.mxu0 %v2869
    %3406 = vmatpush1.bf16.msra.mxu0 %v2868
    %3407 = vmatprep.subr.bf16.mxu0 %v2876
    %3408 = vmatpush1.bf16.msra.mxu0 %v2875
    %3409 = vmatprep.subr.bf16.mxu0 %v2883
    %3410 = vmatpush1.bf16.msra.mxu0 %v2882
    %3411 = vmatprep.subr.bf16.mxu0 %v2890
    %3412 = vmatpush1.bf16.msra.mxu0 %v2889
    %3413 = vmatprep.subr.bf16.mxu0 %v2897
    %3414 = vmatpush1.bf16.msra.mxu0 %v2896
    %3415 = vmatprep.subr.bf16.mxu0 %v2904
    %3416 = vmatpush1.bf16.msra.mxu0 %v2903
    %3417 = vmatprep.subr.bf16.mxu0 %v2911
    %3418 = vmatpush1.bf16.msra.mxu0 %v2910
    %3419 = vmatprep.subr.bf16.mxu0 %v2918
    %3420 = vmatpush1.bf16.msra.mxu0 %v2917
    %3421 = vmatprep.subr.bf16.mxu0 %v2925
    %3422 = vmatpush1.bf16.msra.mxu0 %v2924
    %3423 = vmatprep.subr.bf16.mxu0 %v2932
    %3424 = vmatpush1.bf16.msra.mxu0 %v2931
    %3425 = vmatprep.subr.bf16.mxu0 %v2939
    %3426 = vmatpush1.bf16.msra.mxu0 %v2938
    %3427 = vmatprep.subr.bf16.mxu0 %v2946
    %3428 = vmatpush1.bf16.msra.mxu0 %v2945
    %3429 = vmatprep.subr.bf16.mxu0 %v2953
    %3430 = vmatpush1.bf16.msra.mxu0 %v2952
    %3431 = vmatprep.subr.bf16.mxu0 %v2960
    %3432 = vmatpush1.bf16.msra.mxu0 %v2959
    %3433 = vmatprep.subr.bf16.mxu0 %v2967
    %3434 = vmatpush1.bf16.msra.mxu0 %v2966
    %3435 = vmatprep.subr.bf16.mxu0 %v2974
    %3436 = vmatpush1.bf16.msra.mxu0 %v2973
    %3437 = vmatprep.mubr.bf16.mxu0 %v1754
    %3438 = vmatmul.mubr.bf16.gmra.mrb[0].mxu0 %v1753
    %v3439 = vpop.f32.mrb[0].mxu0
    %v3440 = vadd.f32 %v3399, %v3439
    %v3441 = vpop.f32.mrb[0].mxu0
    %v3442 = vadd.f32 %v3401, %v3441
    %v3443 = vpop.f32.mrb[0].mxu0
    %v3444 = vpop.f32.mrb[0].mxu0
    %3445 = vdwg.mxu0
    %3446 = vmatprep.subr.bf16.mxu0 0
    %3447 = vmatpush1.bf16.msra.mxu0 %v2758
    %3448 = vmatprep.subr.bf16.mxu0 0
    %3449 = vmatpush1.bf16.msra.mxu0 %v2765
    %3450 = vmatprep.subr.bf16.mxu0 0
    %3451 = vmatpush1.bf16.msra.mxu0 %v2772
    %3452 = vmatprep.subr.bf16.mxu0 0
    %3453 = vmatpush1.bf16.msra.mxu0 %v2779
    %3454 = vmatprep.subr.bf16.mxu0 0
    %3455 = vmatpush1.bf16.msra.mxu0 %v2786
    %3456 = vmatprep.subr.bf16.mxu0 0
    %3457 = vmatpush1.bf16.msra.mxu0 %v2793
    %3458 = vmatprep.subr.bf16.mxu0 0
    %3459 = vmatpush1.bf16.msra.mxu0 %v2800
    %3460 = vmatprep.subr.bf16.mxu0 0
    %3461 = vmatpush1.bf16.msra.mxu0 %v2807
    %3462 = vmatprep.subr.bf16.mxu0 0
    %3463 = vmatpush1.bf16.msra.mxu0 %v2814
    %3464 = vmatprep.subr.bf16.mxu0 0
    %3465 = vmatpush1.bf16.msra.mxu0 %v2821
    %3466 = vmatprep.subr.bf16.mxu0 0
    %3467 = vmatpush1.bf16.msra.mxu0 %v2828
    %3468 = vmatprep.subr.bf16.mxu0 0
    %3469 = vmatpush1.bf16.msra.mxu0 %v2835
    %3470 = vmatprep.subr.bf16.mxu0 0
    %3471 = vmatpush1.bf16.msra.mxu0 %v2842
    %3472 = vmatprep.subr.bf16.mxu0 0
    %3473 = vmatpush1.bf16.msra.mxu0 %v2849
    %3474 = vmatprep.subr.bf16.mxu0 0
    %3475 = vmatpush1.bf16.msra.mxu0 %v2856
    %3476 = vmatprep.subr.bf16.mxu0 0
    %3477 = vmatpush1.bf16.msra.mxu0 %v2863
    %3478 = vmatprep.mubr.bf16.mxu0 %v1752
    %3479 = vmatmul.mubr.bf16.gmra.mrb[0].mxu0 %v1751
    %v3480 = vpop.f32.mrb[0].mxu0
    %v3481 = vadd.f32 %v2040, %v3480
    %v3482 = vpop.f32.mrb[0].mxu0
    %v3483 = vpop.f32.mrb[0].mxu0
    %v3484 = vpop.f32.mrb[0].mxu0
    %3485 = vdwg.mxu0
    %3486 = vmatprep.subr.bf16.mxu0 0
    %3487 = vmatpush1.bf16.msra.mxu0 %v2870
    %3488 = vmatprep.subr.bf16.mxu0 0
    %3489 = vmatpush1.bf16.msra.mxu0 %v2877
    %3490 = vmatprep.subr.bf16.mxu0 0
    %3491 = vmatpush1.bf16.msra.mxu0 %v2884
    %3492 = vmatprep.subr.bf16.mxu0 0
    %3493 = vmatpush1.bf16.msra.mxu0 %v2891
    %3494 = vmatprep.subr.bf16.mxu0 0
    %3495 = vmatpush1.bf16.msra.mxu0 %v2898
    %3496 = vmatprep.subr.bf16.mxu0 0
    %3497 = vmatpush1.bf16.msra.mxu0 %v2905
    %3498 = vmatprep.subr.bf16.mxu0 0
    %3499 = vmatpush1.bf16.msra.mxu0 %v2912
    %3500 = vmatprep.subr.bf16.mxu0 0
    %3501 = vmatpush1.bf16.msra.mxu0 %v2919
    %3502 = vmatprep.subr.bf16.mxu0 0
    %3503 = vmatpush1.bf16.msra.mxu0 %v2926
    %3504 = vmatprep.subr.bf16.mxu0 0
    %3505 = vmatpush1.bf16.msra.mxu0 %v2933
    %3506 = vmatprep.subr.bf16.mxu0 0
    %3507 = vmatpush1.bf16.msra.mxu0 %v2940
    %3508 = vmatprep.subr.bf16.mxu0 0
    %3509 = vmatpush1.bf16.msra.mxu0 %v2947
    %3510 = vmatprep.subr.bf16.mxu0 0
    %3511 = vmatpush1.bf16.msra.mxu0 %v2954
    %3512 = vmatprep.subr.bf16.mxu0 0
    %3513 = vmatpush1.bf16.msra.mxu0 %v2961
    %3514 = vmatprep.subr.bf16.mxu0 0
    %3515 = vmatpush1.bf16.msra.mxu0 %v2968
    %3516 = vmatprep.subr.bf16.mxu0 0
    %3517 = vmatpush1.bf16.msra.mxu0 %v2975
    %3518 = vmatprep.mubr.bf16.mxu0 %v1754
    %3519 = vmatmul.mubr.bf16.gmra.mrb[0].mxu0 %v1753
    %v3520 = vpop.f32.mrb[0].mxu0
    %v3521 = vadd.f32 %v3481, %v3520
    %v3522 = vpop.f32.mrb[0].mxu0
    %v3523 = vpop.f32.mrb[0].mxu0
    %v3524 = vpop.f32.mrb[0].mxu0
    %3525 = vdwg.mxu0
    %v3526 = vmul.f32 %v3276, 0.5
    %v3527 = vmul.f32 %v3278, 0.5
    %v3528 = vmul.f32 %v3358, 0.5
    %v3529 = vmul.f32 %v3360, 0.5
    %v3530 = vmul.f32 %v3440, 0.5
    %v3531 = vmul.f32 %v3442, 0.5
    %v3532 = vmul.f32 %v3521, 0.5
    %v3533 = vtanh.pop %v3526
    %v3534 = vtanh.pop %v3527
    %v3535 = vtanh.pop %v3528
    %v3536 = vtanh.pop %v3529
    %v3537 = vtanh.pop %v3530
    %v3538 = vtanh.pop %v3531
    %v3539 = vtanh.pop %v3532
    %v3540 = vadd.f32 %v3533, 1.0
    %v3541 = vadd.f32 %v3534, 1.0
    %v3542 = vadd.f32 %v3535, 1.0
    %v3543 = vadd.f32 %v3536, 1.0
    %v3544 = vadd.f32 %v3537, 1.0
    %v3545 = vadd.f32 %v3538, 1.0
    %v3546 = vadd.f32 %v3539, 1.0
    %v3547 = vmul.f32 %v3540, 0.5
    %v3548 = vmul.f32 %v3541, 0.5
    %v3549 = vmul.f32 %v3542, 0.5
    %v3550 = vmul.f32 %v3543, 0.5
    %v3551 = vmul.f32 %v3544, 0.5
    %v3552 = vmul.f32 %v3545, 0.5
    %v3553 = vmul.f32 %v3546, 0.5
    %3554 = vst [vmem:[#allocation2] sm:$0xff] %v3547
    %3555 = vst [vmem:[#allocation2 + $0x8] sm:$0xff] %v3548
    %3556 = vst [vmem:[#allocation2 + $0x10] sm:$0xff] %v3549
    %3557 = vst [vmem:[#allocation2 + $0x18] sm:$0xff] %v3550
    %3558 = vst [vmem:[#allocation2 + $0x20] sm:$0xff] %v3551
    %3559 = vst [vmem:[#allocation2 + $0x28] sm:$0xff] %v3552
    %3560 = vst.msk [vmem:[#allocation2 + $0x30] sm:$0xff] %vm1246, %v3553
    // Predicated region
    $region38: #{tpu_custom_call.1} parent=1 // pred_check
      _
    $region39: #{tpu_custom_call.1} parent=1 // pred_check_branch
      %3562 = sbr.rel (0) target = $region41
    $region40: #{tpu_custom_call.1} parent=1 // pred_region
      %s3564 = ssub.s32 896, 896
      %3565 = vsyncadd [#allocation3], %s3564
      %s3567 = sshll.u32 [#allocation2], 4
      %s3568 = int_to_ptr.vmem [resolvable:$true] %s3567
      %3570 = dma.vmem_to_hbm [thread:$0]  %s3568, 896, %s9, [#allocation3]
    $region41: #{tpu_custom_call.1} parent=1 // pred_fallthru
      _
    // Predicated region
    $region42: #{tpu_custom_call.1} parent=1 // pred_check
      _
    $region43: #{tpu_custom_call.1} parent=1 // pred_check_branch
      %3572 = sbr.rel (0) target = $region45
    $region44: #{tpu_custom_call.1} parent=1 // pred_region
      %3573 = dma.done [#allocation3], 896
    $region45: #{tpu_custom_call.1} parent=1 // pred_fallthru
      _
    %3574 = vsyncpa [#allocation3], 1

</llo_original>
